<compile_context>
chip_gen: v5e
topology: v5e:2x2
jax: 0.10.0
libtpu: 0.0.40
codegen_flags: <defaults>
</compile_context>

<pallas_src>
import functools
import math

import jax
import jax.numpy as jnp
from jax import lax
from jax.experimental import pallas as pl
from jax.experimental.pallas import tpu as pltpu


# --------------------------------------------------------------------------- #
# Kernel A: per-node prep (tiled over node rows)
#   y  = |p . x| / ||p||           (projection score: top-k key + gate input)
#   ft = (sigmoid(y) * x) @ W_fc   (gated + projected features, emitted bf16)
#   el = ft . attn_l, er = ft . attn_r
# y/el/er are packed into one lane-dense (TM,128) output (lanes 0,1,2).
# --------------------------------------------------------------------------- #
def _node_prep_kernel(feat_ref, p_ref, wfc_ref, al_ref, ar_ref,
                      ft_ref, sc_ref):
    f32 = jnp.float32
    feat = feat_ref[...]                                    # (TM, Din_p)
    p = p_ref[...]                                          # (1, Din_p)
    inv_pnorm = lax.rsqrt(jnp.sum(p * p))
    # row reductions (VPU/XLU) instead of width-1 MXU dot_generals
    y = jnp.abs(jnp.sum(feat * p, axis=-1, keepdims=True)) * inv_pnorm  # (TM,1)
    gate = jax.nn.sigmoid(y)
    ft = jnp.dot(feat * gate, wfc_ref[...], preferred_element_type=f32)   # (TM,Dh_p)
    el = jnp.sum(ft * al_ref[...], axis=-1, keepdims=True)                # (TM,1)
    er = jnp.sum(ft * ar_ref[...], axis=-1, keepdims=True)                # (TM,1)
    ft_ref[...] = ft.astype(jnp.bfloat16)
    lane = lax.broadcasted_iota(jnp.int32, sc_ref.shape, 1)
    sc_ref[...] = jnp.where(lane == 0, y,
                            jnp.where(lane == 1, el,
                                      jnp.where(lane == 2, er, f32(0.0))))


# --------------------------------------------------------------------------- #
# Kernel B: rank-comparison matrix C[s', s] (int8 0/1), tiled over rows of C.
#   C[s', s] = 1 iff node s' ranks strictly before node s
#              (y[s'] > y[s], ties broken by smaller index first).
# --------------------------------------------------------------------------- #
def _rank_cmp_kernel(yc_ref, yr_ref, c_ref):
    tm = yc_ref.shape[0]
    n = yr_ref.shape[1]
    yc = yc_ref[...]                                        # (TM,1)  y[s']
    yr = yr_ref[...]                                        # (1,N)   y[s]
    row0 = pl.program_id(0) * tm
    ridx = row0 + lax.broadcasted_iota(jnp.int32, (tm, n), 0)
    cidx = lax.broadcasted_iota(jnp.int32, (tm, n), 1)
    before = jnp.logical_or(yc > yr, jnp.logical_and(yc == yr, ridx < cidx))
    c_ref[...] = before.astype(jnp.int8)


# --------------------------------------------------------------------------- #
# Kernel C: per-dst-tile hard top-k + masked edge softmax + aggregation,
#           fused with the GraphConv weight and the src-side D_out^{-1/2} norm.
#   hws[node] = rsqrt(deg_out[node]) * ((attn @ ft) @ W_gcn)[node]
# --------------------------------------------------------------------------- #
def _attn_aggregate_kernel(adj_ref, cmp_ref, ft_ref, el_ref, er_ref, wg_ref,
                           rdo_ref, hws_ref, *, k, negative_slope, int8_mxu):
    f32 = jnp.float32
    adj_i8 = adj_ref[...]                                   # (TM,N) int8 0/1
    adj_f = adj_i8.astype(f32)

    # hard top-k over incoming edges by y[src]: one MXU rank matmul
    if int8_mxu:
        # v5e/v6e int8 MXU path: exact int32 counts at ~2x the bf16 rate
        rank = jnp.dot(adj_i8, cmp_ref[...],
                       preferred_element_type=jnp.int32).astype(f32)
    else:
        # v7x / other: no int MXU path; upcast the narrow operands in-kernel
        rank = jnp.dot(adj_f.astype(jnp.bfloat16),
                       cmp_ref[...].astype(jnp.bfloat16),
                       preferred_element_type=f32)
    keep = jnp.where(jnp.logical_and(adj_f > 0.0, rank < k),
                     f32(1.0), f32(0.0))                    # (TM,N) 0/1

    # attention logits + leaky relu + masked softmax (no -inf selects)
    e = el_ref[...] + er_ref[...]                           # (1,N)+(TM,1) -> (TM,N)
    e = jnp.where(e > 0, e, negative_slope * e)
    big = f32(1e30)
    m = jnp.max(e * keep + (keep - 1.0) * big, axis=-1, keepdims=True)
    m = jnp.where(m < -0.5 * big, 0.0, m)                   # rows with no kept edge
    # the minimum() guard prevents exp(+large) on masked-out logits (inf*0=NaN)
    pexp = jnp.exp(jnp.minimum(e - m, 0.0)) * keep
    denom = jnp.sum(pexp, axis=-1, keepdims=True)
    attn = pexp * pl.reciprocal(jnp.maximum(denom, f32(1e-30)), approx=True)

    # aggregate (bf16 MXU operands, f32 accumulate) + GraphConv weight + norm
    h = jnp.dot(attn.astype(jnp.bfloat16), ft_ref[...],
                preferred_element_type=f32)                 # (TM, Dh_p)
    hw = jnp.dot(h, wg_ref[...], preferred_element_type=f32)   # (TM, Do_p)
    hws_ref[...] = (hw * rdo_ref[...]).astype(jnp.bfloat16)


# --------------------------------------------------------------------------- #
# Kernel D: GraphConv aggregation on the ORIGINAL graph + residual Linear.
#   out[dst] = rsqrt(deg_in[dst]) * (adj[dst,:] @ hws) + feat[dst] @ W_res + b
# adj is streamed int8 (half the HBM traffic) and upcast to bf16 under the DMA.
# --------------------------------------------------------------------------- #
def _gcn_residual_kernel(adj_ref, hws_ref, feat_ref, wr_ref, br_ref, out_ref):
    f32 = jnp.float32
    adj_i8 = adj_ref[...]                                   # (TM,N) int8
    deg_in = jnp.sum(adj_i8.astype(f32), axis=-1, keepdims=True)
    rdi = lax.rsqrt(jnp.maximum(deg_in, 1.0))
    gcn = jnp.dot(adj_i8.astype(jnp.bfloat16), hws_ref[...],
                  preferred_element_type=f32) * rdi
    res = jnp.dot(feat_ref[...], wr_ref[...], preferred_element_type=f32) + br_ref[...]
    out_ref[...] = gcn + res


# --------------------------------------------------------------------------- #
# Wrapper
# --------------------------------------------------------------------------- #
def hardgam_forward(feat, p, adj, w_fc, attn_l, attn_r, w_gcn, w_res, b_res,
                    *, k, negative_slope=0.2, tile_m=None):
    f32, bf16, i8 = jnp.float32, jnp.bfloat16, jnp.int8
    N, in_dim = feat.shape
    out_dim = w_gcn.shape[1]
    lane = 128

    def rup(x, m):
        return ((x + m - 1) // m) * m

    if tile_m is None:
        # 256 fills the 256-wide v6e/v7x MXU and halves grid-step overhead, but
        # keep >= 2 grid steps so the "parallel" axis can still shard across
        # v7x's two TensorCores.
        tile_m = 256 if rup(N, 256) // 256 >= 2 else 128

    n_p = rup(N, tile_m)
    din_p = rup(in_dim, lane)
    dh_p = rup(w_fc.shape[1], lane)
    do_p = rup(out_dim, lane)
    grid = (n_p // tile_m,)

    # ---- generation-aware choices -----------------------------------------
    dev_kind = jax.devices()[0].device_kind.lower()
    int8_mxu = ("v5" in dev_kind) or ("v6" in dev_kind)   # v7x has no int MXU path
    try:
        vmem_cap = pltpu.get_tpu_info().vmem_capacity_bytes
    except Exception:  # pragma: no cover - conservative fallback
        vmem_cap = 64 * 1024 * 1024
    vmem_limit = int(vmem_cap * 3 // 4)

    # resident-C VMEM ceiling check (kernel C): resident blocks are single-
    # buffered (Buffered(1)), streamed blocks double-buffered.
    resident_c = n_p * n_p * 1 + n_p * dh_p * 2 + dh_p * do_p * 4 + 8 * n_p
    streamed_c = 2 * (tile_m * n_p * 1 + tile_m * do_p * 2 + 3 * 4 * tile_m)
    assert resident_c + streamed_c < vmem_limit, (
        "HardGAM resident-C design exceeds VMEM for this N; "
        "a contraction-tiled variant is required")
    # TODO(synk): contraction-tiled (src-axis) fallback above this ceiling.

    def pad2(a, rows, cols):
        a = a.astype(f32)
        return jnp.pad(a, ((0, rows - a.shape[0]), (0, cols - a.shape[1])))

    feat_p = pad2(feat, n_p, din_p)
    p_p = pad2(p, 1, din_p)
    w_fc_p = pad2(w_fc, din_p, dh_p)
    attn_l_p = pad2(attn_l, 1, dh_p)
    attn_r_p = pad2(attn_r, 1, dh_p)
    w_gcn_p = pad2(w_gcn, dh_p, do_p)
    w_res_p = pad2(w_res, din_p, do_p)
    b_res_p = pad2(b_res, 1, do_p)

    # Adjacency: cast to int8 BEFORE padding (no N^2 f32 pad / cast copies).
    # (If adj is static across calls, hoist this conversion out of the jit.)
    adj_i8 = jnp.pad(adj.astype(i8), ((0, n_p - N), (0, n_p - N)))
    # Out-degree (column sum) is a cross-tile reduction: compute it once here
    # from the ORIGINAL unpadded adj, then pad the tiny (N,1) result.
    rdo = lax.rsqrt(jnp.maximum(jnp.sum(adj.astype(f32), axis=0), 1.0))
    rdo = jnp.pad(rdo.reshape(N, 1), ((0, n_p - N), (0, 0)))

    par = pltpu.CompilerParams(dimension_semantics=("parallel",),
                               vmem_limit_bytes=vmem_limit)

    def resident(shape):
        nd = len(shape)
        # constant-index blocks: single buffer (no pointless double-buffering)
        return pl.BlockSpec(shape, lambda *_: (0,) * nd,
                            pipeline_mode=pl.Buffered(1))

    # ---- kernel A: per-node prep ------------------------------------------
    ft_bf, scal = pl.pallas_call(
        _node_prep_kernel,
        grid=grid,
        in_specs=[
            pl.BlockSpec((tile_m, din_p), lambda i: (i, 0)),
            resident((1, din_p)),
            resident((din_p, dh_p)),
            resident((1, dh_p)),
            resident((1, dh_p)),
        ],
        out_specs=(
            pl.BlockSpec((tile_m, dh_p), lambda i: (i, 0)),
            pl.BlockSpec((tile_m, lane), lambda i: (i, 0)),
        ),
        out_shape=(
            jax.ShapeDtypeStruct((n_p, dh_p), bf16),
            jax.ShapeDtypeStruct((n_p, lane), f32),
        ),
        compiler_params=par,
    )(feat_p, p_p, w_fc_p, attn_l_p, attn_r_p)

    # tiny (N,1) relayouts in the wrapper (N elements, negligible)
    y_col = scal[:, 0:1]
    er_col = scal[:, 2:3]
    y_row = scal[:, 0:1].reshape(1, n_p)
    el_row = scal[:, 1:2].reshape(1, n_p)

    # ---- kernel B: rank-comparison matrix C (int8 0/1) ---------------------
    cmp_i8 = pl.pallas_call(
        _rank_cmp_kernel,
        grid=grid,
        in_specs=[
            pl.BlockSpec((tile_m, 1), lambda i: (i, 0)),
            resident((1, n_p)),
        ],
        out_specs=pl.BlockSpec((tile_m, n_p), lambda i: (i, 0)),
        out_shape=jax.ShapeDtypeStruct((n_p, n_p), i8),
        compiler_params=par,
    )(y_col, y_row)

    # ---- kernel C: top-k attention aggregation + GraphConv weight ---------
    flops_c = int(2 * n_p * n_p * n_p + 2 * n_p * n_p * dh_p
                  + 2 * n_p * dh_p * do_p + 12 * n_p * n_p)
    bytes_c = int(2 * n_p * n_p + 2 * n_p * dh_p + 2 * n_p * do_p + 16 * n_p)
    hws_bf = pl.pallas_call(
        functools.partial(_attn_aggregate_kernel, k=k,
                          negative_slope=negative_slope, int8_mxu=int8_mxu),
        grid=grid,
        in_specs=[
            pl.BlockSpec((tile_m, n_p), lambda i: (i, 0)),   # adj slab (streamed i8)
            resident((n_p, n_p)),                            # C (resident i8)
            resident((n_p, dh_p)),                           # ft (resident bf16)
            resident((1, n_p)),                              # el row (resident)
            pl.BlockSpec((tile_m, 1), lambda i: (i, 0)),     # er for this dst tile
            resident((dh_p, do_p)),                          # W_gcn (resident)
            pl.BlockSpec((tile_m, 1), lambda i: (i, 0)),     # rsqrt(out-degree)
        ],
        out_specs=pl.BlockSpec((tile_m, do_p), lambda i: (i, 0)),
        out_shape=jax.ShapeDtypeStruct((n_p, do_p), bf16),
        compiler_params=par,
        cost_estimate=pl.CostEstimate(flops=flops_c, transcendentals=int(n_p * n_p),
                                      bytes_accessed=bytes_c),
    )(adj_i8, cmp_i8, ft_bf, el_row, er_col, w_gcn_p, rdo)

    # ---- kernel D: GraphConv aggregation + residual ------------------------
    flops_d = int(2 * n_p * n_p * do_p + 2 * n_p * din_p * do_p)
    bytes_d = int(n_p * n_p + 2 * n_p * do_p + 4 * n_p * din_p + 4 * n_p * do_p)
    out_p = pl.pallas_call(
        _gcn_residual_kernel,
        grid=grid,
        in_specs=[
            pl.BlockSpec((tile_m, n_p), lambda i: (i, 0)),   # adj slab (streamed i8)
            resident((n_p, do_p)),                           # hws (resident bf16)
            pl.BlockSpec((tile_m, din_p), lambda i: (i, 0)), # input feats (residual)
            resident((din_p, do_p)),
            resident((1, do_p)),
        ],
        out_specs=pl.BlockSpec((tile_m, do_p), lambda i: (i, 0)),
        out_shape=jax.ShapeDtypeStruct((n_p, do_p), f32),
        compiler_params=par,
        cost_estimate=pl.CostEstimate(flops=flops_d, transcendentals=0,
                                      bytes_accessed=bytes_d),
    )(adj_i8, hws_bf, feat_p, w_res_p, b_res_p)

    return out_p[:N, :out_dim]


# --------------------------------------------------------------------------- #
# Pure-JAX f32 reference (independent iterative top-k) for the sanity check.
# --------------------------------------------------------------------------- #
def reference_forward(feat, p, adj, w_fc, attn_l, attn_r, w_gcn, w_res, b_res,
                      *, k, negative_slope=0.2):
    N = feat.shape[0]
    y = jnp.abs(feat @ p.T) / jnp.sqrt(jnp.sum(p * p))            # (N,1)
    y_row = jnp.reshape(y, (1, N))
    avail = adj > 0
    keep = jnp.zeros_like(avail)
    col_idx = jnp.broadcast_to(jnp.arange(N, dtype=jnp.int32)[None, :], (N, N))
    y_b = jnp.broadcast_to(y_row, (N, N))
    for _ in range(k):
        cur = jnp.where(avail, y_b, -jnp.inf)
        row_max = jnp.max(cur, axis=-1, keepdims=True)
        is_max = (cur == row_max) & avail
        first = jnp.min(jnp.where(is_max, col_idx, N), axis=-1, keepdims=True)
        sel = (col_idx == first) & is_max
        keep = keep | sel
        avail = avail & ~sel
    gate = jax.nn.sigmoid(y)
    ft = (feat * gate) @ w_fc
    el = jnp.sum(ft * attn_l, -1, keepdims=True)
    er = jnp.sum(ft * attn_r, -1, keepdims=True)
    e = jnp.reshape(el, (1, N)) + er
    e = jnp.where(e > 0, e, negative_slope * e)
    logits = jnp.where(keep, e, -jnp.inf)
    m = jnp.max(logits, -1, keepdims=True)
    m_safe = jnp.where(jnp.isfinite(m), m, 0.0)
    pexp = jnp.where(keep, jnp.exp(logits - m_safe), 0.0)
    a = pexp / jnp.maximum(jnp.sum(pexp, -1, keepdims=True), 1e-38)
    h = a @ ft
    deg_out = jnp.maximum(adj.sum(0), 1.0)
    deg_in = jnp.maximum(adj.sum(1), 1.0)
    gcn = (adj * (deg_out ** -0.5)[None, :]) @ (h @ w_gcn) * (deg_in ** -0.5)[:, None]
    return gcn + feat @ w_res + b_res


if __name__ == "__main__":
    # HardGAM(in_dim=32, hid_dim=32, out_dim=16, head=1, k=4) — head must be 1
    # (and in_dim == hid_dim) for the module's reshape / GraphConv / residual
    # shapes to be mutually consistent.  Dropouts are identity at p=0.
    N, in_dim, hid_dim, out_dim, head, k = 256, 32, 32, 16, 1, 4
    negative_slope = 0.2

    key = jax.random.PRNGKey(0)
    ks = jax.random.split(key, 8)
    gain = math.sqrt(2.0)  # nn.init.calculate_gain('relu')

    def xavier_normal(kk, shape, fan_in, fan_out):
        std = gain * math.sqrt(2.0 / (fan_in + fan_out))
        return std * jax.random.normal(kk, shape, dtype=jnp.float32)

    feat = jax.random.normal(ks[0], (N, in_dim), dtype=jnp.float32)
    p = xavier_normal(ks[1], (1, in_dim), in_dim, 1)
    w_fc = xavier_normal(ks[2], (in_dim, hid_dim * head), in_dim, hid_dim * head)
    attn_l = xavier_normal(ks[3], (1, hid_dim), head * hid_dim, hid_dim)
    attn_r = xavier_normal(ks[4], (1, hid_dim), head * hid_dim, hid_dim)
    w_gcn = xavier_normal(ks[5], (hid_dim, out_dim), hid_dim, out_dim)
    w_res = xavier_normal(ks[6], (in_dim, out_dim), in_dim, out_dim)
    b_res = 0.01 * jax.random.normal(ks[7], (1, out_dim), dtype=jnp.float32)

    # Deterministic directed graph: edge src->dst iff (src - dst) mod N in [1, 6]
    # (every node has 6 in-edges >= k, so no zero-in-degree issues).
    idx = jnp.arange(N)
    diff = (idx[None, :] - idx[:, None]) % N          # diff[dst, src]
    adj = ((diff >= 1) & (diff <= 6)).astype(jnp.float32)

    fwd = jax.jit(functools.partial(hardgam_forward, k=k,
                                    negative_slope=negative_slope))
    out = jax.block_until_ready(fwd(feat, p, adj, w_fc, attn_l, attn_r,
                                    w_gcn, w_res, b_res))

    ref = reference_forward(feat, p, adj, w_fc, attn_l, attn_r, w_gcn, w_res, b_res,
                            k=k, negative_slope=negative_slope)
    assert out.shape == (N, out_dim)
    max_err = float(jnp.max(jnp.abs(out - ref)))
    # bf16 MXU operands (adj/C/rank exact; attn/ft/hws rounded) + the EUP approx
    # reciprocal give ~1e-3..1e-2 absolute deviation vs the pure-f32 reference.
    assert jnp.allclose(out, ref, atol=5e-2, rtol=5e-2), \
        f"Pallas kernel mismatch vs reference (max abs err {max_err})"
    print("KERNEL_OK")
</pallas_src>

<mosaic_0001>
module attributes {stable_mosaic.version = 11 : i64} {
  func.func @_rank_cmp_kernel(%arg0: i32, %arg1: memref<128x1xf32, #tpu.memory_space<vmem>>, %arg2: memref<1x256xf32, #tpu.memory_space<vmem>>, %arg3: memref<128x256xi8, #tpu.memory_space<vmem>>) attributes {dimension_semantics = [#tpu.dimension_semantics<parallel>], iteration_bounds = array<i64: 2>, scalar_prefetch = 0 : i64, scratch_operands = 0 : i64, tpu.core_type = #tpu.core_type<tc>, window_params = [{transform_indices = @transform_0, window_bounds = array<i64: 128, 1>}, {pipeline_mode = #tpu.pipeline_mode<synchronous>, transform_indices = @transform_1, window_bounds = array<i64: 1, 256>}, {transform_indices = @transform_2, window_bounds = array<i64: 128, 256>}]} {
    %c0 = arith.constant 0 : index
    %c0_0 = arith.constant 0 : index
    %0 = vector.load %arg1[%c0, %c0_0] : memref<128x1xf32, #tpu.memory_space<vmem>>, vector<128x1xf32>
    %c0_1 = arith.constant 0 : index
    %c0_2 = arith.constant 0 : index
    %1 = vector.load %arg2[%c0_1, %c0_2] : memref<1x256xf32, #tpu.memory_space<vmem>>, vector<1x256xf32>
    %c128_i32 = arith.constant 128 : i32
    %2 = arith.muli %arg0, %c128_i32 : i32
    %3 = tpu.iota {dimensions = array<i32: 0>} : vector<128x256xi32>
    %4 = vector.broadcast %2 : i32 to vector<128x256xi32>
    %5 = arith.addi %4, %3 : vector<128x256xi32>
    %6 = tpu.iota {dimensions = array<i32: 1>} : vector<128x256xi32>
    %7 = vector.broadcast %0 : vector<128x1xf32> to vector<128x256xf32>
    %8 = vector.broadcast %1 : vector<1x256xf32> to vector<128x256xf32>
    %9 = arith.cmpf ogt, %7, %8 : vector<128x256xf32>
    %10 = vector.broadcast %0 : vector<128x1xf32> to vector<128x256xf32>
    %11 = vector.broadcast %1 : vector<1x256xf32> to vector<128x256xf32>
    %12 = arith.cmpf oeq, %10, %11 : vector<128x256xf32>
    %13 = arith.cmpi slt, %5, %6 : vector<128x256xi32>
    %14 = arith.andi %12, %13 : vector<128x256xi1>
    %15 = arith.ori %9, %14 : vector<128x256xi1>
    %16 = arith.extui %15 : vector<128x256xi1> to vector<128x256xi8>
    %c0_3 = arith.constant 0 : index
    %c0_4 = arith.constant 0 : index
    %17 = vector.load %arg3[%c0_3, %c0_4] : memref<128x256xi8, #tpu.memory_space<vmem>>, vector<128x256xi8>
    tpu.vector_store %arg3[%c0_3, %c0_4], %16 {strides = array<i32>} : memref<128x256xi8, #tpu.memory_space<vmem>>, vector<128x256xi8>,
    return
  }
  func.func @transform_0(%arg0: i32) -> (i32, i32) {
    %c0_i32 = arith.constant 0 : i32
    %c0_i32_0 = arith.constant 0 : i32
    return %arg0, %c0_i32 : i32, i32
  }
  func.func @transform_1(%arg0: i32) -> (i32, i32) {
    %c0_i32 = arith.constant 0 : i32
    %c0_i32_0 = arith.constant 0 : i32
    %c0_i32_1 = arith.constant 0 : i32
    return %c0_i32, %c0_i32_0 : i32, i32
  }
  func.func @transform_2(%arg0: i32) -> (i32, i32) {
    %c0_i32 = arith.constant 0 : i32
    %c0_i32_0 = arith.constant 0 : i32
    return %arg0, %c0_i32 : i32, i32
  }
}

module attributes {stable_mosaic.version = 11 : i64} {
  func.func @_node_prep_kernel(%arg0: i32, %arg1: memref<128x128xf32, #tpu.memory_space<vmem>>, %arg2: memref<1x128xf32, #tpu.memory_space<vmem>>, %arg3: memref<128x128xf32, #tpu.memory_space<vmem>>, %arg4: memref<1x128xf32, #tpu.memory_space<vmem>>, %arg5: memref<1x128xf32, #tpu.memory_space<vmem>>, %arg6: memref<128x128xbf16, #tpu.memory_space<vmem>>, %arg7: memref<128x128xf32, #tpu.memory_space<vmem>>) attributes {dimension_semantics = [#tpu.dimension_semantics<parallel>], iteration_bounds = array<i64: 2>, scalar_prefetch = 0 : i64, scratch_operands = 0 : i64, tpu.core_type = #tpu.core_type<tc>, window_params = [{transform_indices = @transform_0, window_bounds = array<i64: 128, 128>}, {pipeline_mode = #tpu.pipeline_mode<synchronous>, transform_indices = @transform_1, window_bounds = array<i64: 1, 128>}, {pipeline_mode = #tpu.pipeline_mode<synchronous>, transform_indices = @transform_2, window_bounds = array<i64: 128, 128>}, {pipeline_mode = #tpu.pipeline_mode<synchronous>, transform_indices = @transform_3, window_bounds = array<i64: 1, 128>}, {pipeline_mode = #tpu.pipeline_mode<synchronous>, transform_indices = @transform_4, window_bounds = array<i64: 1, 128>}, {transform_indices = @transform_5, window_bounds = array<i64: 128, 128>}, {transform_indices = @transform_6, window_bounds = array<i64: 128, 128>}]} {
    %c0 = arith.constant 0 : index
    %c0_0 = arith.constant 0 : index
    %0 = vector.load %arg1[%c0, %c0_0] : memref<128x128xf32, #tpu.memory_space<vmem>>, vector<128x128xf32>
    %c0_1 = arith.constant 0 : index
    %c0_2 = arith.constant 0 : index
    %1 = vector.load %arg2[%c0_1, %c0_2] : memref<1x128xf32, #tpu.memory_space<vmem>>, vector<1x128xf32>
    %2 = arith.mulf %1, %1 : vector<1x128xf32>
    %3 = vector.shape_cast %2 : vector<1x128xf32> to vector<1x1x128xf32>
    %cst = arith.constant dense<0.000000e+00> : vector<1xf32>
    %4 = vector.multi_reduction <add>, %3, %cst [1, 2] : vector<1x1x128xf32> to vector<1xf32>
    %5 = vector.shape_cast %4 : vector<1xf32> to vector<1x1x1xf32>
    %6 = vector.extract %5[0, 0, 0] : f32 from vector<1x1x1xf32>
    %7 = math.rsqrt %6 : f32
    %8 = vector.broadcast %1 : vector<1x128xf32> to vector<128x128xf32>
    %9 = arith.mulf %0, %8 : vector<128x128xf32>
    %cst_3 = arith.constant dense<0.000000e+00> : vector<128xf32>
    %10 = vector.multi_reduction <add>, %9, %cst_3 [1] : vector<128x128xf32> to vector<128xf32>
    %11 = vector.shape_cast %10 : vector<128xf32> to vector<128x1xf32>
    %12 = math.absf %11 : vector<128x1xf32>
    %13 = vector.broadcast %7 : f32 to vector<128x1xf32>
    %14 = arith.mulf %12, %13 : vector<128x1xf32>
    %15 = arith.negf %14 : vector<128x1xf32>
    %16 = math.exp %15 : vector<128x1xf32>
    %cst_4 = arith.constant 1.000000e+00 : f32
    %17 = vector.broadcast %cst_4 : f32 to vector<128x1xf32>
    %18 = arith.addf %17, %16 : vector<128x1xf32>
    %19 = arith.divf %17, %18 : vector<128x1xf32>
    %20 = vector.broadcast %19 : vector<128x1xf32> to vector<128x128xf32>
    %21 = arith.mulf %0, %20 : vector<128x128xf32>
    %c0_5 = arith.constant 0 : index
    %c0_6 = arith.constant 0 : index
    %22 = vector.load %arg3[%c0_5, %c0_6] : memref<128x128xf32, #tpu.memory_space<vmem>>, vector<128x128xf32>
    %cst_7 = arith.constant dense<0.000000e+00> : vector<128x128xf32>
    %23 = tpu.matmul %21, %22, %cst_7 {dimension_numbers = #tpu.dot_dimension_numbers<[1], [0], [0], [1], [0, 0, 1, 1], [], []>} : vector<128x128xf32>, vector<128x128xf32>, vector<128x128xf32> -> vector<128x128xf32>
    %c0_8 = arith.constant 0 : index
    %c0_9 = arith.constant 0 : index
    %24 = vector.load %arg4[%c0_8, %c0_9] : memref<1x128xf32, #tpu.memory_space<vmem>>, vector<1x128xf32>
    %25 = vector.broadcast %24 : vector<1x128xf32> to vector<128x128xf32>
    %26 = arith.mulf %23, %25 : vector<128x128xf32>
    %cst_10 = arith.constant dense<0.000000e+00> : vector<128xf32>
    %27 = vector.multi_reduction <add>, %26, %cst_10 [1] : vector<128x128xf32> to vector<128xf32>
    %28 = vector.shape_cast %27 : vector<128xf32> to vector<128x1xf32>
    %c0_11 = arith.constant 0 : index
    %c0_12 = arith.constant 0 : index
    %29 = vector.load %arg5[%c0_11, %c0_12] : memref<1x128xf32, #tpu.memory_space<vmem>>, vector<1x128xf32>
    %30 = vector.broadcast %29 : vector<1x128xf32> to vector<128x128xf32>
    %31 = arith.mulf %23, %30 : vector<128x128xf32>
    %cst_13 = arith.constant dense<0.000000e+00> : vector<128xf32>
    %32 = vector.multi_reduction <add>, %31, %cst_13 [1] : vector<128x128xf32> to vector<128xf32>
    %33 = vector.shape_cast %32 : vector<128xf32> to vector<128x1xf32>
    %34 = arith.truncf %23 : vector<128x128xf32> to vector<128x128xbf16>
    %c0_14 = arith.constant 0 : index
    %c0_15 = arith.constant 0 : index
    %35 = vector.load %arg6[%c0_14, %c0_15] : memref<128x128xbf16, #tpu.memory_space<vmem>>, vector<128x128xbf16>
    tpu.vector_store %arg6[%c0_14, %c0_15], %34 {strides = array<i32>} : memref<128x128xbf16, #tpu.memory_space<vmem>>, vector<128x128xbf16>,
    %36 = tpu.iota {dimensions = array<i32: 1>} : vector<128x128xi32>
    %c0_i32 = arith.constant 0 : i32
    %37 = vector.broadcast %c0_i32 : i32 to vector<128x128xi32>
    %38 = arith.cmpi eq, %36, %37 : vector<128x128xi32>
    %c1_i32 = arith.constant 1 : i32
    %39 = vector.broadcast %c1_i32 : i32 to vector<128x128xi32>
    %40 = arith.cmpi eq, %36, %39 : vector<128x128xi32>
    %c2_i32 = arith.constant 2 : i32
    %41 = vector.broadcast %c2_i32 : i32 to vector<128x128xi32>
    %42 = arith.cmpi eq, %36, %41 : vector<128x128xi32>
    %cst_16 = arith.constant 0.000000e+00 : f32
    %43 = vector.shape_cast %33 : vector<128x1xf32> to vector<128x1xf32>
    %44 = vector.broadcast %43 : vector<128x1xf32> to vector<128x128xf32>
    %45 = vector.broadcast %cst_16 : f32 to vector<128x128xf32>
    %46 = arith.select %42, %44, %45 : vector<128x128xi1>, vector<128x128xf32>
    %47 = vector.shape_cast %28 : vector<128x1xf32> to vector<128x1xf32>
    %48 = vector.broadcast %47 : vector<128x1xf32> to vector<128x128xf32>
    %49 = arith.select %40, %48, %46 : vector<128x128xi1>, vector<128x128xf32>
    %50 = vector.shape_cast %14 : vector<128x1xf32> to vector<128x1xf32>
    %51 = vector.broadcast %50 : vector<128x1xf32> to vector<128x128xf32>
    %52 = arith.select %38, %51, %49 : vector<128x128xi1>, vector<128x128xf32>
    %c0_17 = arith.constant 0 : index
    %c0_18 = arith.constant 0 : index
    %53 = vector.load %arg7[%c0_17, %c0_18] : memref<128x128xf32, #tpu.memory_space<vmem>>, vector<128x128xf32>
    tpu.vector_store %arg7[%c0_17, %c0_18], %52 {strides = array<i32>} : memref<128x128xf32, #tpu.memory_space<vmem>>, vector<128x128xf32>,
    return
  }
  func.func @transform_0(%arg0: i32) -> (i32, i32) {
    %c0_i32 = arith.constant 0 : i32
    %c0_i32_0 = arith.constant 0 : i32
    return %arg0, %c0_i32 : i32, i32
  }
  func.func @transform_1(%arg0: i32) -> (i32, i32) {
    %c0_i32 = arith.constant 0 : i32
    %c0_i32_0 = arith.constant 0 : i32
    %c0_i32_1 = arith.constant 0 : i32
    return %c0_i32, %c0_i32_0 : i32, i32
  }
  func.func @transform_2(%arg0: i32) -> (i32, i32) {
    %c0_i32 = arith.constant 0 : i32
    %c0_i32_0 = arith.constant 0 : i32
    %c0_i32_1 = arith.constant 0 : i32
    return %c0_i32, %c0_i32_0 : i32, i32
  }
  func.func @transform_3(%arg0: i32) -> (i32, i32) {
    %c0_i32 = arith.constant 0 : i32
    %c0_i32_0 = arith.constant 0 : i32
    %c0_i32_1 = arith.constant 0 : i32
    return %c0_i32, %c0_i32_0 : i32, i32
  }
  func.func @transform_4(%arg0: i32) -> (i32, i32) {
    %c0_i32 = arith.constant 0 : i32
    %c0_i32_0 = arith.constant 0 : i32
    %c0_i32_1 = arith.constant 0 : i32
    return %c0_i32, %c0_i32_0 : i32, i32
  }
  func.func @transform_5(%arg0: i32) -> (i32, i32) {
    %c0_i32 = arith.constant 0 : i32
    %c0_i32_0 = arith.constant 0 : i32
    return %arg0, %c0_i32 : i32, i32
  }
  func.func @transform_6(%arg0: i32) -> (i32, i32) {
    %c0_i32 = arith.constant 0 : i32
    %c0_i32_0 = arith.constant 0 : i32
    return %arg0, %c0_i32 : i32, i32
  }
}

module attributes {stable_mosaic.version = 11 : i64} {
  func.func @_attn_aggregate_kernel(%arg0: i32, %arg1: memref<128x256xi8, #tpu.memory_space<vmem>>, %arg2: memref<256x256xi8, #tpu.memory_space<vmem>>, %arg3: memref<256x128xbf16, #tpu.memory_space<vmem>>, %arg4: memref<1x256xf32, #tpu.memory_space<vmem>>, %arg5: memref<128x1xf32, #tpu.memory_space<vmem>>, %arg6: memref<128x128xf32, #tpu.memory_space<vmem>>, %arg7: memref<128x1xf32, #tpu.memory_space<vmem>>, %arg8: memref<128x128xbf16, #tpu.memory_space<vmem>>) attributes {dimension_semantics = [#tpu.dimension_semantics<parallel>], iteration_bounds = array<i64: 2>, scalar_prefetch = 0 : i64, scratch_operands = 0 : i64, tpu.core_type = #tpu.core_type<tc>, window_params = [{transform_indices = @transform_0, window_bounds = array<i64: 128, 256>}, {pipeline_mode = #tpu.pipeline_mode<synchronous>, transform_indices = @transform_1, window_bounds = array<i64: 256, 256>}, {pipeline_mode = #tpu.pipeline_mode<synchronous>, transform_indices = @transform_2, window_bounds = array<i64: 256, 128>}, {pipeline_mode = #tpu.pipeline_mode<synchronous>, transform_indices = @transform_3, window_bounds = array<i64: 1, 256>}, {transform_indices = @transform_4, window_bounds = array<i64: 128, 1>}, {pipeline_mode = #tpu.pipeline_mode<synchronous>, transform_indices = @transform_5, window_bounds = array<i64: 128, 128>}, {transform_indices = @transform_6, window_bounds = array<i64: 128, 1>}, {transform_indices = @transform_7, window_bounds = array<i64: 128, 128>}]} {
    %c0 = arith.constant 0 : index
    %c0_0 = arith.constant 0 : index
    %0 = vector.load %arg1[%c0, %c0_0] : memref<128x256xi8, #tpu.memory_space<vmem>>, vector<128x256xi8>
    %1 = arith.sitofp %0 : vector<128x256xi8> to vector<128x256xf32>
    %2 = arith.truncf %1 : vector<128x256xf32> to vector<128x256xbf16>
    %c0_1 = arith.constant 0 : index
    %c0_2 = arith.constant 0 : index
    %3 = vector.load %arg2[%c0_1, %c0_2] : memref<256x256xi8, #tpu.memory_space<vmem>>, vector<256x256xi8>
    %4 = arith.sitofp %3 : vector<256x256xi8> to vector<256x256xbf16>
    %cst = arith.constant dense<0.000000e+00> : vector<128x256xf32>
    %5 = tpu.matmul %2, %4, %cst {dimension_numbers = #tpu.dot_dimension_numbers<[1], [0], [0], [1], [0, 0, 1, 1], [], []>} : vector<128x256xbf16>, vector<256x256xbf16>, vector<128x256xf32> -> vector<128x256xf32>
    %cst_3 = arith.constant 0.000000e+00 : f32
    %6 = vector.broadcast %cst_3 : f32 to vector<128x256xf32>
    %7 = arith.cmpf ogt, %1, %6 : vector<128x256xf32>
    %cst_4 = arith.constant 4.000000e+00 : f32
    %8 = vector.broadcast %cst_4 : f32 to vector<128x256xf32>
    %9 = arith.cmpf olt, %5, %8 : vector<128x256xf32>
    %10 = arith.andi %7, %9 : vector<128x256xi1>
    %cst_5 = arith.constant 1.000000e+00 : f32
    %cst_6 = arith.constant 0.000000e+00 : f32
    %11 = vector.broadcast %cst_5 : f32 to vector<128x256xf32>
    %12 = vector.broadcast %cst_6 : f32 to vector<128x256xf32>
    %13 = arith.select %10, %11, %12 : vector<128x256xi1>, vector<128x256xf32>
    %c0_7 = arith.constant 0 : index
    %c0_8 = arith.constant 0 : index
    %14 = vector.load %arg4[%c0_7, %c0_8] : memref<1x256xf32, #tpu.memory_space<vmem>>, vector<1x256xf32>
    %c0_9 = arith.constant 0 : index
    %c0_10 = arith.constant 0 : index
    %15 = vector.load %arg5[%c0_9, %c0_10] : memref<128x1xf32, #tpu.memory_space<vmem>>, vector<128x1xf32>
    %16 = vector.broadcast %14 : vector<1x256xf32> to vector<128x256xf32>
    %17 = vector.broadcast %15 : vector<128x1xf32> to vector<128x256xf32>
    %18 = arith.addf %16, %17 : vector<128x256xf32>
    %cst_11 = arith.constant 0.000000e+00 : f32
    %19 = vector.broadcast %cst_11 : f32 to vector<128x256xf32>
    %20 = arith.cmpf ogt, %18, %19 : vector<128x256xf32>
    %cst_12 = arith.constant 2.000000e-01 : f32
    %21 = vector.broadcast %cst_12 : f32 to vector<128x256xf32>
    %22 = arith.mulf %21, %18 : vector<128x256xf32>
    %23 = arith.select %20, %18, %22 : vector<128x256xi1>, vector<128x256xf32>
    %24 = arith.mulf %23, %13 : vector<128x256xf32>
    %cst_13 = arith.constant 1.000000e+00 : f32
    %25 = vector.broadcast %cst_13 : f32 to vector<128x256xf32>
    %26 = arith.subf %13, %25 : vector<128x256xf32>
    %cst_14 = arith.constant 1.000000e+30 : f32
    %27 = vector.broadcast %cst_14 : f32 to vector<128x256xf32>
    %28 = arith.mulf %26, %27 : vector<128x256xf32>
    %29 = arith.addf %24, %28 : vector<128x256xf32>
    %cst_15 = arith.constant dense<0xFF800000> : vector<128xf32>
    %30 = vector.multi_reduction <maximumf>, %29, %cst_15 [1] : vector<128x256xf32> to vector<128xf32>
    %31 = vector.shape_cast %30 : vector<128xf32> to vector<128x1xf32>
    %cst_16 = arith.constant -5.000000e-01 : f32
    %cst_17 = arith.constant 1.000000e+30 : f32
    %32 = arith.mulf %cst_16, %cst_17 : f32
    %33 = vector.broadcast %32 : f32 to vector<128x1xf32>
    %34 = arith.cmpf olt, %31, %33 : vector<128x1xf32>
    %cst_18 = arith.constant 0.000000e+00 : f32
    %35 = vector.broadcast %cst_18 : f32 to vector<128x1xf32>
    %36 = arith.select %34, %35, %31 : vector<128x1xi1>, vector<128x1xf32>
    %37 = vector.broadcast %36 : vector<128x1xf32> to vector<128x256xf32>
    %38 = arith.subf %23, %37 : vector<128x256xf32>
    %cst_19 = arith.constant 0.000000e+00 : f32
    %39 = vector.broadcast %cst_19 : f32 to vector<128x256xf32>
    %40 = arith.minimumf %38, %39 : vector<128x256xf32>
    %41 = math.exp %40 : vector<128x256xf32>
    %42 = arith.mulf %41, %13 : vector<128x256xf32>
    %cst_20 = arith.constant dense<0.000000e+00> : vector<128xf32>
    %43 = vector.multi_reduction <add>, %42, %cst_20 [1] : vector<128x256xf32> to vector<128xf32>
    %44 = vector.shape_cast %43 : vector<128xf32> to vector<128x1xf32>
    %cst_21 = arith.constant 1.000000e-30 : f32
    %45 = vector.broadcast %cst_21 : f32 to vector<128x1xf32>
    %46 = arith.maximumf %44, %45 : vector<128x1xf32>
    %47 = tpu.reciprocal %46 {approx = true} : vector<128x1xf32> -> vector<128x1xf32>
    %48 = vector.broadcast %47 : vector<128x1xf32> to vector<128x256xf32>
    %49 = arith.mulf %42, %48 : vector<128x256xf32>
    %50 = arith.truncf %49 : vector<128x256xf32> to vector<128x256xbf16>
    %c0_22 = arith.constant 0 : index
    %c0_23 = arith.constant 0 : index
    %51 = vector.load %arg3[%c0_22, %c0_23] : memref<256x128xbf16, #tpu.memory_space<vmem>>, vector<256x128xbf16>
    %cst_24 = arith.constant dense<0.000000e+00> : vector<128x128xf32>
    %52 = tpu.matmul %50, %51, %cst_24 {dimension_numbers = #tpu.dot_dimension_numbers<[1], [0], [0], [1], [0, 0, 1, 1], [], []>} : vector<128x256xbf16>, vector<256x128xbf16>, vector<128x128xf32> -> vector<128x128xf32>
    %c0_25 = arith.constant 0 : index
    %c0_26 = arith.constant 0 : index
    %53 = vector.load %arg6[%c0_25, %c0_26] : memref<128x128xf32, #tpu.memory_space<vmem>>, vector<128x128xf32>
    %cst_27 = arith.constant dense<0.000000e+00> : vector<128x128xf32>
    %54 = tpu.matmul %52, %53, %cst_27 {dimension_numbers = #tpu.dot_dimension_numbers<[1], [0], [0], [1], [0, 0, 1, 1], [], []>} : vector<128x128xf32>, vector<128x128xf32>, vector<128x128xf32> -> vector<128x128xf32>
    %c0_28 = arith.constant 0 : index
    %c0_29 = arith.constant 0 : index
    %55 = vector.load %arg7[%c0_28, %c0_29] : memref<128x1xf32, #tpu.memory_space<vmem>>, vector<128x1xf32>
    %56 = vector.broadcast %55 : vector<128x1xf32> to vector<128x128xf32>
    %57 = arith.mulf %54, %56 : vector<128x128xf32>
    %58 = arith.truncf %57 : vector<128x128xf32> to vector<128x128xbf16>
    %c0_30 = arith.constant 0 : index
    %c0_31 = arith.constant 0 : index
    %59 = vector.load %arg8[%c0_30, %c0_31] : memref<128x128xbf16, #tpu.memory_space<vmem>>, vector<128x128xbf16>
    tpu.vector_store %arg8[%c0_30, %c0_31], %58 {strides = array<i32>} : memref<128x128xbf16, #tpu.memory_space<vmem>>, vector<128x128xbf16>,
    return
  }
  func.func @transform_0(%arg0: i32) -> (i32, i32) {
    %c0_i32 = arith.constant 0 : i32
    %c0_i32_0 = arith.constant 0 : i32
    return %arg0, %c0_i32 : i32, i32
  }
  func.func @transform_1(%arg0: i32) -> (i32, i32) {
    %c0_i32 = arith.constant 0 : i32
    %c0_i32_0 = arith.constant 0 : i32
    %c0_i32_1 = arith.constant 0 : i32
    return %c0_i32, %c0_i32_0 : i32, i32
  }
  func.func @transform_2(%arg0: i32) -> (i32, i32) {
    %c0_i32 = arith.constant 0 : i32
    %c0_i32_0 = arith.constant 0 : i32
    %c0_i32_1 = arith.constant 0 : i32
    return %c0_i32, %c0_i32_0 : i32, i32
  }
  func.func @transform_3(%arg0: i32) -> (i32, i32) {
    %c0_i32 = arith.constant 0 : i32
    %c0_i32_0 = arith.constant 0 : i32
    %c0_i32_1 = arith.constant 0 : i32
    return %c0_i32, %c0_i32_0 : i32, i32
  }
  func.func @transform_4(%arg0: i32) -> (i32, i32) {
    %c0_i32 = arith.constant 0 : i32
    %c0_i32_0 = arith.constant 0 : i32
    return %arg0, %c0_i32 : i32, i32
  }
  func.func @transform_5(%arg0: i32) -> (i32, i32) {
    %c0_i32 = arith.constant 0 : i32
    %c0_i32_0 = arith.constant 0 : i32
    %c0_i32_1 = arith.constant 0 : i32
    return %c0_i32, %c0_i32_0 : i32, i32
  }
  func.func @transform_6(%arg0: i32) -> (i32, i32) {
    %c0_i32 = arith.constant 0 : i32
    %c0_i32_0 = arith.constant 0 : i32
    return %arg0, %c0_i32 : i32, i32
  }
  func.func @transform_7(%arg0: i32) -> (i32, i32) {
    %c0_i32 = arith.constant 0 : i32
    %c0_i32_0 = arith.constant 0 : i32
    return %arg0, %c0_i32 : i32, i32
  }
}

module attributes {stable_mosaic.version = 11 : i64} {
  func.func @_gcn_residual_kernel(%arg0: i32, %arg1: memref<128x256xi8, #tpu.memory_space<vmem>>, %arg2: memref<256x128xbf16, #tpu.memory_space<vmem>>, %arg3: memref<128x128xf32, #tpu.memory_space<vmem>>, %arg4: memref<128x128xf32, #tpu.memory_space<vmem>>, %arg5: memref<1x128xf32, #tpu.memory_space<vmem>>, %arg6: memref<128x128xf32, #tpu.memory_space<vmem>>) attributes {dimension_semantics = [#tpu.dimension_semantics<parallel>], iteration_bounds = array<i64: 2>, scalar_prefetch = 0 : i64, scratch_operands = 0 : i64, tpu.core_type = #tpu.core_type<tc>, window_params = [{transform_indices = @transform_0, window_bounds = array<i64: 128, 256>}, {pipeline_mode = #tpu.pipeline_mode<synchronous>, transform_indices = @transform_1, window_bounds = array<i64: 256, 128>}, {transform_indices = @transform_2, window_bounds = array<i64: 128, 128>}, {pipeline_mode = #tpu.pipeline_mode<synchronous>, transform_indices = @transform_3, window_bounds = array<i64: 128, 128>}, {pipeline_mode = #tpu.pipeline_mode<synchronous>, transform_indices = @transform_4, window_bounds = array<i64: 1, 128>}, {transform_indices = @transform_5, window_bounds = array<i64: 128, 128>}]} {
    %c0 = arith.constant 0 : index
    %c0_0 = arith.constant 0 : index
    %0 = vector.load %arg1[%c0, %c0_0] : memref<128x256xi8, #tpu.memory_space<vmem>>, vector<128x256xi8>
    %1 = arith.sitofp %0 : vector<128x256xi8> to vector<128x256xf32>
    %cst = arith.constant dense<0.000000e+00> : vector<128xf32>
    %2 = vector.multi_reduction <add>, %1, %cst [1] : vector<128x256xf32> to vector<128xf32>
    %3 = vector.shape_cast %2 : vector<128xf32> to vector<128x1xf32>
    %cst_1 = arith.constant 1.000000e+00 : f32
    %4 = vector.broadcast %cst_1 : f32 to vector<128x1xf32>
    %5 = arith.maximumf %3, %4 : vector<128x1xf32>
    %6 = math.rsqrt %5 : vector<128x1xf32>
    %7 = arith.sitofp %0 : vector<128x256xi8> to vector<128x256xbf16>
    %c0_2 = arith.constant 0 : index
    %c0_3 = arith.constant 0 : index
    %8 = vector.load %arg2[%c0_2, %c0_3] : memref<256x128xbf16, #tpu.memory_space<vmem>>, vector<256x128xbf16>
    %cst_4 = arith.constant dense<0.000000e+00> : vector<128x128xf32>
    %9 = tpu.matmul %7, %8, %cst_4 {dimension_numbers = #tpu.dot_dimension_numbers<[1], [0], [0], [1], [0, 0, 1, 1], [], []>} : vector<128x256xbf16>, vector<256x128xbf16>, vector<128x128xf32> -> vector<128x128xf32>
    %10 = vector.broadcast %6 : vector<128x1xf32> to vector<128x128xf32>
    %11 = arith.mulf %9, %10 : vector<128x128xf32>
    %c0_5 = arith.constant 0 : index
    %c0_6 = arith.constant 0 : index
    %12 = vector.load %arg3[%c0_5, %c0_6] : memref<128x128xf32, #tpu.memory_space<vmem>>, vector<128x128xf32>
    %c0_7 = arith.constant 0 : index
    %c0_8 = arith.constant 0 : index
    %13 = vector.load %arg4[%c0_7, %c0_8] : memref<128x128xf32, #tpu.memory_space<vmem>>, vector<128x128xf32>
    %cst_9 = arith.constant dense<0.000000e+00> : vector<128x128xf32>
    %14 = tpu.matmul %12, %13, %cst_9 {dimension_numbers = #tpu.dot_dimension_numbers<[1], [0], [0], [1], [0, 0, 1, 1], [], []>} : vector<128x128xf32>, vector<128x128xf32>, vector<128x128xf32> -> vector<128x128xf32>
    %c0_10 = arith.constant 0 : index
    %c0_11 = arith.constant 0 : index
    %15 = vector.load %arg5[%c0_10, %c0_11] : memref<1x128xf32, #tpu.memory_space<vmem>>, vector<1x128xf32>
    %16 = vector.broadcast %15 : vector<1x128xf32> to vector<128x128xf32>
    %17 = arith.addf %14, %16 : vector<128x128xf32>
    %18 = arith.addf %11, %17 : vector<128x128xf32>
    %c0_12 = arith.constant 0 : index
    %c0_13 = arith.constant 0 : index
    %19 = vector.load %arg6[%c0_12, %c0_13] : memref<128x128xf32, #tpu.memory_space<vmem>>, vector<128x128xf32>
    tpu.vector_store %arg6[%c0_12, %c0_13], %18 {strides = array<i32>} : memref<128x128xf32, #tpu.memory_space<vmem>>, vector<128x128xf32>,
    return
  }
  func.func @transform_0(%arg0: i32) -> (i32, i32) {
    %c0_i32 = arith.constant 0 : i32
    %c0_i32_0 = arith.constant 0 : i32
    return %arg0, %c0_i32 : i32, i32
  }
  func.func @transform_1(%arg0: i32) -> (i32, i32) {
    %c0_i32 = arith.constant 0 : i32
    %c0_i32_0 = arith.constant 0 : i32
    %c0_i32_1 = arith.constant 0 : i32
    return %c0_i32, %c0_i32_0 : i32, i32
  }
  func.func @transform_2(%arg0: i32) -> (i32, i32) {
    %c0_i32 = arith.constant 0 : i32
    %c0_i32_0 = arith.constant 0 : i32
    return %arg0, %c0_i32 : i32, i32
  }
  func.func @transform_3(%arg0: i32) -> (i32, i32) {
    %c0_i32 = arith.constant 0 : i32
    %c0_i32_0 = arith.constant 0 : i32
    %c0_i32_1 = arith.constant 0 : i32
    return %c0_i32, %c0_i32_0 : i32, i32
  }
  func.func @transform_4(%arg0: i32) -> (i32, i32) {
    %c0_i32 = arith.constant 0 : i32
    %c0_i32_0 = arith.constant 0 : i32
    %c0_i32_1 = arith.constant 0 : i32
    return %c0_i32, %c0_i32_0 : i32, i32
  }
  func.func @transform_5(%arg0: i32) -> (i32, i32) {
    %c0_i32 = arith.constant 0 : i32
    %c0_i32_0 = arith.constant 0 : i32
    return %arg0, %c0_i32 : i32, i32
  }
}

</mosaic_0001>

<llo_original>
// kernel: hardgam_forward.5
$region0: #{hardgam_forward.5}
  #allocation0 [shape = 'u32[]', space=smem, size = 0x4, offset = 0x4, fixed_abs, tag = 'smem constant byte address 0x4 - core index']
  #allocation1 [shape = 'u32[72,128]{1,0:T(1,128)}', space=vmem, size = 0x9000, scoped, tag = 'internal scratch']
  %s0 = inlined_call_operand.vmem [shape: f32[256,1], index: 0, kind: input, shape index: {}]
  %s1 = inlined_call_operand.vmem [shape: f32[1,256], index: 1, kind: input, shape index: {}]
  %s2 = inlined_call_operand.vmem [shape: s8[256,256], index: 2, kind: output, shape index: {}]
  %s3 = sld [smem:[#allocation0]]
  $region41: #{hardgam_forward.5} parent=0
    _
  %s5 = ssub.s32 1, %s3
  %s6 = scalar_select 0, %s5, %s3
  loop: start=0, step=1, limit=4
  $region2: #{hardgam_forward.5} parent=0 // loop_pre_header
    _
  $region3: #{hardgam_forward.5} parent=0 // loop_header
    %s8 = sphi 0, %s12
    %p9 = scmp.ge.s32.totalorder %s8, 4
    %s18 = sphi 0, %s20
    %s21 = sphi 0, %s18
    %s22 = sphi 0, %s21
    %s38 = sphi 0, %s22
    %s42 = sphi 0, %s42
    %s44 = sphi 0, %s42
    %s45 = sphi 0, %s44
    %s59 = sphi 0, %s45
    %s65 = sphi 0, %s67
    %s68 = sphi 0, %s65
    %s69 = sphi 0, %s68
    %s85 = sphi 0, %s69
  $region4: #{hardgam_forward.5} parent=0 // loop_header_branch
    %11 = sbr.rel (%p9) target = $region8
  $region5: #{hardgam_forward.5} parent=0 // loop_body
    %s13 = ssub.s32 %s8, 1
    %s14 = ssub.s32 %s8, 2
    %s15 = sadd.s32 %s8, 1
    %s16 = ssub.s32 %s8, %s15
    %p17 = scmp.eq.s32.totalorder %s16, 0
    %s19 = sadd.s32 %s18, 1
    %s20 = scalar_select %p17, %s18, %s19
    %p23 = pneg %p17
    %p24 = scmp.eq.s32.totalorder %s8, 1
    %p25 = por %p23, %p24
    %p26 = scmp.ne.s32.totalorder %s18, %s21
    %p27 = scmp.eq.s32.totalorder %s8, 0
    %p28 = por %p26, %p27
    %p29 = scmp.ne.s32.totalorder %s18, %s21
    %p30 = scmp.eq.s32.totalorder %s13, 1
    %p31 = por %p29, %p30
    %p32 = scmp.ne.s32.totalorder %s21, %s22
    %p33 = scmp.eq.s32.totalorder %s13, 0
    %p34 = por %p32, %p33
    %p35 = scmp.ne.s32.totalorder %s21, %s22
    %p36 = scmp.eq.s32.totalorder %s14, 1
    %p37 = por %p35, %p36
    %p39 = scmp.ne.s32.totalorder %s22, %s38
    %p40 = scmp.eq.s32.totalorder %s14, 0
    %p41 = por %p39, %p40
    %s43 = sadd.s32 %s42, 1
    %p46 = scmp.eq.s32.totalorder %s8, 1
    %p47 = scmp.ne.s32.totalorder %s42, %s44
    %p48 = scmp.eq.s32.totalorder %s8, 0
    %p49 = por %p47, %p48
    %p50 = scmp.ne.s32.totalorder %s42, %s44
    %p51 = scmp.eq.s32.totalorder %s13, 1
    %p52 = por %p50, %p51
    %p53 = scmp.ne.s32.totalorder %s44, %s45
    %p54 = scmp.eq.s32.totalorder %s13, 0
    %p55 = por %p53, %p54
    %p56 = scmp.ne.s32.totalorder %s44, %s45
    %p57 = scmp.eq.s32.totalorder %s14, 1
    %p58 = por %p56, %p57
    %p60 = scmp.ne.s32.totalorder %s45, %s59
    %p61 = scmp.eq.s32.totalorder %s14, 0
    %p62 = por %p60, %p61
    %s63 = ssub.s32 %s8, %s15
    %p64 = scmp.eq.s32.totalorder %s63, 0
    %s66 = sadd.s32 %s65, 1
    %s67 = scalar_select %p64, %s65, %s66
    %p70 = pneg %p64
    %p71 = scmp.eq.s32.totalorder %s8, 1
    %p72 = por %p70, %p71
    %p73 = scmp.ne.s32.totalorder %s65, %s68
    %p74 = scmp.eq.s32.totalorder %s8, 0
    %p75 = por %p73, %p74
    %p76 = scmp.ne.s32.totalorder %s65, %s68
    %p77 = scmp.eq.s32.totalorder %s13, 1
    %p78 = por %p76, %p77
    %p79 = scmp.ne.s32.totalorder %s68, %s69
    %p80 = scmp.eq.s32.totalorder %s13, 0
    %p81 = por %p79, %p80
    %p82 = scmp.ne.s32.totalorder %s68, %s69
    %p83 = scmp.eq.s32.totalorder %s14, 1
    %p84 = por %p82, %p83
    %p86 = scmp.ne.s32.totalorder %s69, %s85
    %p87 = scmp.eq.s32.totalorder %s14, 0
    %p88 = por %p86, %p87
    %p89 = scmp.le.s32.totalorder 1, %s8
    %p90 = scmp.lt.s32.totalorder %s8, 3
    %p91 = pnand %p89, %p90
    %p92 = pneg %p91
    // Predicated region
    $region9: #{hardgam_forward.5} parent=5 // pred_check
      _
    $region10: #{hardgam_forward.5} parent=5 // pred_check_branch
      %94 = sbr.rel (%p91) target = $region12
    $region11: #{hardgam_forward.5} parent=5 // pred_region
      %s95 = ssub.s32 %s8, 1
      // Predicated region
      $region13: #{hardgam_forward.5} parent=11 // pred_check
        %p96 = pneg %p55
      $region14: #{hardgam_forward.5} parent=11 // pred_check_branch
        %98 = sbr.rel (%p96) target = $region16
      $region15: #{hardgam_forward.5} parent=11 // pred_region
        _
      $region16: #{hardgam_forward.5} parent=11 // pred_fallthru
        _
    $region12: #{hardgam_forward.5} parent=5 // pred_fallthru
      _
    %p99 = scmp.lt.s32.totalorder %s8, 2
    // Predicated region
    $region17: #{hardgam_forward.5} parent=5 // pred_check
      %p100 = pneg %p99
    $region18: #{hardgam_forward.5} parent=5 // pred_check_branch
      %102 = sbr.rel (%p100) target = $region20
    $region19: #{hardgam_forward.5} parent=5 // pred_region
      // Predicated region
      $region21: #{hardgam_forward.5} parent=19 // pred_check
        %p103 = pneg %p28
      $region22: #{hardgam_forward.5} parent=19 // pred_check_branch
        %105 = sbr.rel (%p103) target = $region24
      $region23: #{hardgam_forward.5} parent=19 // pred_region
        %s106 = smul.u32 16, %s8
        %p107 = scmp.lt.s32.totalorder %s106, 31
        %s108 = scalar_select %p107, %s106, 31
        %s109 = smul.addr %s108, 8
        %s110 = scalar_lea.vmem %s0, %s109
        %s111 = smul.u32 16, %s8
      $region24: #{hardgam_forward.5} parent=19 // pred_fallthru
        _
    $region20: #{hardgam_forward.5} parent=5 // pred_fallthru
      _
    %p112 = scmp.le.s32.totalorder 1, %s8
    %p113 = scmp.lt.s32.totalorder %s8, 3
    %p114 = pnand %p112, %p113
    %p115 = pneg %p114
    // Predicated region
    $region25: #{hardgam_forward.5} parent=5 // pred_check
      _
    $region26: #{hardgam_forward.5} parent=5 // pred_check_branch
      %117 = sbr.rel (%p114) target = $region28
    $region27: #{hardgam_forward.5} parent=5 // pred_region
      %s118 = ssub.s32 %s8, 1
      %s119 = smul.u32 16, %s13
      %p120 = scmp.lt.s32.totalorder %s119, 31
      %s121 = scalar_select %p120, %s119, 31
      %s122 = smul.addr %s121, 8
      %s123 = scalar_lea.vmem %s0, %s122
      %p124 = pneg %p34
      %p125 = pneg %p31
      %p126 = pneg %p55
      %p127 = pneg %p52
      %p128 = pneg %p81
      %p129 = pneg %p78
      %s130 = smul.u32 4, %s13
      %p131 = scmp.lt.s32.totalorder %s130, 7
      %s132 = scalar_select %p131, %s130, 7
      %s133 = smul.addr %s132, 2
      %s134 = smul.addr %s133, 8
      %s135 = scalar_lea.vmem %s2, %s134
      %s136 = smul.u32 16, %s13
      %p137 = scmp.lt.s32.totalorder %s136, 31
      %s138 = scalar_select %p137, %s136, 31
      %s139 = smul.addr %s138, 8
      %s140 = scalar_lea.vmem %s0, %s139
      %s141 = smul.u32 16, %s13
      %s142 = smul.u32 4, %s13
      %p143 = scmp.lt.s32.totalorder %s142, 7
      %s144 = scalar_select %p143, %s142, 7
      %s145 = smul.addr %s144, 2
      %s146 = smul.addr %s145, 8
      %s147 = scalar_lea.vmem %s2, %s146
      %s148 = smul.u32 4, %s13
      %v151 = vld [vmem:[%s140] sm:$0xff]
      %v152 = vld [vmem:[%s140 + $0x8] sm:$0xff]
      %v153 = vld [vmem:[%s140 + $0x10] sm:$0xff]
      %v154 = vld [vmem:[%s140 + $0x18] sm:$0xff]
      %v155 = vld [vmem:[%s140 + $0x20] sm:$0xff]
      %v156 = vld [vmem:[%s140 + $0x28] sm:$0xff]
      %v157 = vld [vmem:[%s140 + $0x30] sm:$0xff]
      %v158 = vld [vmem:[%s140 + $0x38] sm:$0xff]
      %v159 = vld [vmem:[%s140 + $0x40] sm:$0xff]
      %v160 = vld [vmem:[%s140 + $0x48] sm:$0xff]
      %v161 = vld [vmem:[%s140 + $0x50] sm:$0xff]
      %v162 = vld [vmem:[%s140 + $0x58] sm:$0xff]
      %v163 = vld [vmem:[%s140 + $0x60] sm:$0xff]
      %v164 = vld [vmem:[%s140 + $0x68] sm:$0xff]
      %v165 = vld [vmem:[%s140 + $0x70] sm:$0xff]
      %v166 = vld [vmem:[%s140 + $0x78] sm:$0xff]
      %v167 = vld [vmem:[%s1] sm:$0x3]
      %s168 = smul.u32 %s13, 128
      %v169 = vlaneseq
      %v170 = vshrl.u32 %v169, 7
      %v171 = vadd.s32 %v170, 8
      %v172 = vadd.s32 %v170, 16
      %v173 = vadd.s32 %v170, 24
      %v174 = vadd.s32 %v170, 32
      %v175 = vadd.s32 %v170, 40
      %v176 = vadd.s32 %v170, 48
      %v177 = vadd.s32 %v170, 56
      %v178 = vadd.s32 %v170, 64
      %v179 = vadd.s32 %v170, 72
      %v180 = vadd.s32 %v170, 80
      %v181 = vadd.s32 %v170, 88
      %v182 = vadd.s32 %v170, 96
      %v183 = vadd.s32 %v170, 104
      %v184 = vadd.s32 %v170, 112
      %v185 = vadd.s32 %v170, 120
      %v186 = vstv %s168
      %v187 = vadd.s32 %v186, %v170
      %v188 = vadd.s32 %v186, %v171
      %v189 = vadd.s32 %v186, %v172
      %v190 = vadd.s32 %v186, %v173
      %v191 = vadd.s32 %v186, %v174
      %v192 = vadd.s32 %v186, %v175
      %v193 = vadd.s32 %v186, %v176
      %v194 = vadd.s32 %v186, %v177
      %v195 = vadd.s32 %v186, %v178
      %v196 = vadd.s32 %v186, %v179
      %v197 = vadd.s32 %v186, %v180
      %v198 = vadd.s32 %v186, %v181
      %v199 = vadd.s32 %v186, %v182
      %v200 = vadd.s32 %v186, %v183
      %v201 = vadd.s32 %v186, %v184
      %v202 = vadd.s32 %v186, %v185
      %v203 = vlaneseq
      %v204 = vand.u32 %v203, 127
      %v205 = vadd.s32 %v204, 128
      %207 = vset.pattern.permute.xlu0 0
      %208 = vperm.xlu0 %207, %v151
      %v209 = vpop.permute.xlu0 %208
      %212 = vset.pattern.permute.xlu0 0
      %213 = vperm.xlu0 %212, %v152
      %v214 = vpop.permute.xlu0 %213
      %217 = vset.pattern.permute.xlu0 0
      %218 = vperm.xlu0 %217, %v153
      %v219 = vpop.permute.xlu0 %218
      %222 = vset.pattern.permute.xlu0 0
      %223 = vperm.xlu0 %222, %v154
      %v224 = vpop.permute.xlu0 %223
      %227 = vset.pattern.permute.xlu0 0
      %228 = vperm.xlu0 %227, %v155
      %v229 = vpop.permute.xlu0 %228
      %232 = vset.pattern.permute.xlu0 0
      %233 = vperm.xlu0 %232, %v156
      %v234 = vpop.permute.xlu0 %233
      %237 = vset.pattern.permute.xlu0 0
      %238 = vperm.xlu0 %237, %v157
      %v239 = vpop.permute.xlu0 %238
      %242 = vset.pattern.permute.xlu0 0
      %243 = vperm.xlu0 %242, %v158
      %v244 = vpop.permute.xlu0 %243
      %247 = vset.pattern.permute.xlu0 0
      %248 = vperm.xlu0 %247, %v159
      %v249 = vpop.permute.xlu0 %248
      %252 = vset.pattern.permute.xlu0 0
      %253 = vperm.xlu0 %252, %v160
      %v254 = vpop.permute.xlu0 %253
      %257 = vset.pattern.permute.xlu0 0
      %258 = vperm.xlu0 %257, %v161
      %v259 = vpop.permute.xlu0 %258
      %262 = vset.pattern.permute.xlu0 0
      %263 = vperm.xlu0 %262, %v162
      %v264 = vpop.permute.xlu0 %263
      %267 = vset.pattern.permute.xlu0 0
      %268 = vperm.xlu0 %267, %v163
      %v269 = vpop.permute.xlu0 %268
      %272 = vset.pattern.permute.xlu0 0
      %273 = vperm.xlu0 %272, %v164
      %v274 = vpop.permute.xlu0 %273
      %277 = vset.pattern.permute.xlu0 0
      %278 = vperm.xlu0 %277, %v165
      %v279 = vpop.permute.xlu0 %278
      %282 = vset.pattern.permute.xlu0 0
      %283 = vperm.xlu0 %282, %v166
      %v284 = vpop.permute.xlu0 %283
      %v287 = vperm.slane %v167, 0
      %v288 = vperm.slane %v167, 1
      %vm291 = vcmp.gt.f32.partialorder %v209, %v287
      %vm292 = vcmp.gt.f32.partialorder %v209, %v288
      %vm293 = vcmp.gt.f32.partialorder %v214, %v287
      %vm294 = vcmp.gt.f32.partialorder %v214, %v288
      %vm295 = vcmp.gt.f32.partialorder %v219, %v287
      %vm296 = vcmp.gt.f32.partialorder %v219, %v288
      %vm297 = vcmp.gt.f32.partialorder %v224, %v287
      %vm298 = vcmp.gt.f32.partialorder %v224, %v288
      %vm299 = vcmp.gt.f32.partialorder %v229, %v287
      %vm300 = vcmp.gt.f32.partialorder %v229, %v288
      %vm301 = vcmp.gt.f32.partialorder %v234, %v287
      %vm302 = vcmp.gt.f32.partialorder %v234, %v288
      %vm303 = vcmp.gt.f32.partialorder %v239, %v287
      %vm304 = vcmp.gt.f32.partialorder %v239, %v288
      %vm305 = vcmp.gt.f32.partialorder %v244, %v287
      %vm306 = vcmp.gt.f32.partialorder %v244, %v288
      %vm307 = vcmp.gt.f32.partialorder %v249, %v287
      %vm308 = vcmp.gt.f32.partialorder %v249, %v288
      %vm309 = vcmp.gt.f32.partialorder %v254, %v287
      %vm310 = vcmp.gt.f32.partialorder %v254, %v288
      %vm311 = vcmp.gt.f32.partialorder %v259, %v287
      %vm312 = vcmp.gt.f32.partialorder %v259, %v288
      %vm313 = vcmp.gt.f32.partialorder %v264, %v287
      %vm314 = vcmp.gt.f32.partialorder %v264, %v288
      %vm315 = vcmp.gt.f32.partialorder %v269, %v287
      %vm316 = vcmp.gt.f32.partialorder %v269, %v288
      %vm317 = vcmp.gt.f32.partialorder %v274, %v287
      %vm318 = vcmp.gt.f32.partialorder %v274, %v288
      %vm319 = vcmp.gt.f32.partialorder %v279, %v287
      %vm320 = vcmp.gt.f32.partialorder %v279, %v288
      %vm321 = vcmp.gt.f32.partialorder %v284, %v287
      %vm322 = vcmp.gt.f32.partialorder %v284, %v288
      %vm323 = vcmp.eq.f32.partialorder %v209, %v287
      %vm324 = vcmp.eq.f32.partialorder %v209, %v288
      %vm325 = vcmp.eq.f32.partialorder %v214, %v287
      %vm326 = vcmp.eq.f32.partialorder %v214, %v288
      %vm327 = vcmp.eq.f32.partialorder %v219, %v287
      %vm328 = vcmp.eq.f32.partialorder %v219, %v288
      %vm329 = vcmp.eq.f32.partialorder %v224, %v287
      %vm330 = vcmp.eq.f32.partialorder %v224, %v288
      %vm331 = vcmp.eq.f32.partialorder %v229, %v287
      %vm332 = vcmp.eq.f32.partialorder %v229, %v288
      %vm333 = vcmp.eq.f32.partialorder %v234, %v287
      %vm334 = vcmp.eq.f32.partialorder %v234, %v288
      %vm335 = vcmp.eq.f32.partialorder %v239, %v287
      %vm336 = vcmp.eq.f32.partialorder %v239, %v288
      %vm337 = vcmp.eq.f32.partialorder %v244, %v287
      %vm338 = vcmp.eq.f32.partialorder %v244, %v288
      %vm339 = vcmp.eq.f32.partialorder %v249, %v287
      %vm340 = vcmp.eq.f32.partialorder %v249, %v288
      %vm341 = vcmp.eq.f32.partialorder %v254, %v287
      %vm342 = vcmp.eq.f32.partialorder %v254, %v288
      %vm343 = vcmp.eq.f32.partialorder %v259, %v287
      %vm344 = vcmp.eq.f32.partialorder %v259, %v288
      %vm345 = vcmp.eq.f32.partialorder %v264, %v287
      %vm346 = vcmp.eq.f32.partialorder %v264, %v288
      %vm347 = vcmp.eq.f32.partialorder %v269, %v287
      %vm348 = vcmp.eq.f32.partialorder %v269, %v288
      %vm349 = vcmp.eq.f32.partialorder %v274, %v287
      %vm350 = vcmp.eq.f32.partialorder %v274, %v288
      %vm351 = vcmp.eq.f32.partialorder %v279, %v287
      %vm352 = vcmp.eq.f32.partialorder %v279, %v288
      %vm353 = vcmp.eq.f32.partialorder %v284, %v287
      %vm354 = vcmp.eq.f32.partialorder %v284, %v288
      %vm355 = vcmp.lt.s32.totalorder %v187, %v204
      %vm356 = vcmp.lt.s32.totalorder %v187, %v205
      %vm357 = vcmp.lt.s32.totalorder %v188, %v204
      %vm358 = vcmp.lt.s32.totalorder %v188, %v205
      %vm359 = vcmp.lt.s32.totalorder %v189, %v204
      %vm360 = vcmp.lt.s32.totalorder %v189, %v205
      %vm361 = vcmp.lt.s32.totalorder %v190, %v204
      %vm362 = vcmp.lt.s32.totalorder %v190, %v205
      %vm363 = vcmp.lt.s32.totalorder %v191, %v204
      %vm364 = vcmp.lt.s32.totalorder %v191, %v205
      %vm365 = vcmp.lt.s32.totalorder %v192, %v204
      %vm366 = vcmp.lt.s32.totalorder %v192, %v205
      %vm367 = vcmp.lt.s32.totalorder %v193, %v204
      %vm368 = vcmp.lt.s32.totalorder %v193, %v205
      %vm369 = vcmp.lt.s32.totalorder %v194, %v204
      %vm370 = vcmp.lt.s32.totalorder %v194, %v205
      %vm371 = vcmp.lt.s32.totalorder %v195, %v204
      %vm372 = vcmp.lt.s32.totalorder %v195, %v205
      %vm373 = vcmp.lt.s32.totalorder %v196, %v204
      %vm374 = vcmp.lt.s32.totalorder %v196, %v205
      %vm375 = vcmp.lt.s32.totalorder %v197, %v204
      %vm376 = vcmp.lt.s32.totalorder %v197, %v205
      %vm377 = vcmp.lt.s32.totalorder %v198, %v204
      %vm378 = vcmp.lt.s32.totalorder %v198, %v205
      %vm379 = vcmp.lt.s32.totalorder %v199, %v204
      %vm380 = vcmp.lt.s32.totalorder %v199, %v205
      %vm381 = vcmp.lt.s32.totalorder %v200, %v204
      %vm382 = vcmp.lt.s32.totalorder %v200, %v205
      %vm383 = vcmp.lt.s32.totalorder %v201, %v204
      %vm384 = vcmp.lt.s32.totalorder %v201, %v205
      %vm385 = vcmp.lt.s32.totalorder %v202, %v204
      %vm386 = vcmp.lt.s32.totalorder %v202, %v205
      %vm387 = vmand %vm323, %vm355
      %vm388 = vmand %vm324, %vm356
      %vm389 = vmand %vm325, %vm357
      %vm390 = vmand %vm326, %vm358
      %vm391 = vmand %vm327, %vm359
      %vm392 = vmand %vm328, %vm360
      %vm393 = vmand %vm329, %vm361
      %vm394 = vmand %vm330, %vm362
      %vm395 = vmand %vm331, %vm363
      %vm396 = vmand %vm332, %vm364
      %vm397 = vmand %vm333, %vm365
      %vm398 = vmand %vm334, %vm366
      %vm399 = vmand %vm335, %vm367
      %vm400 = vmand %vm336, %vm368
      %vm401 = vmand %vm337, %vm369
      %vm402 = vmand %vm338, %vm370
      %vm403 = vmand %vm339, %vm371
      %vm404 = vmand %vm340, %vm372
      %vm405 = vmand %vm341, %vm373
      %vm406 = vmand %vm342, %vm374
      %vm407 = vmand %vm343, %vm375
      %vm408 = vmand %vm344, %vm376
      %vm409 = vmand %vm345, %vm377
      %vm410 = vmand %vm346, %vm378
      %vm411 = vmand %vm347, %vm379
      %vm412 = vmand %vm348, %vm380
      %vm413 = vmand %vm349, %vm381
      %vm414 = vmand %vm350, %vm382
      %vm415 = vmand %vm351, %vm383
      %vm416 = vmand %vm352, %vm384
      %vm417 = vmand %vm353, %vm385
      %vm418 = vmand %vm354, %vm386
      %vm419 = vmor %vm291, %vm387
      %vm420 = vmor %vm292, %vm388
      %vm421 = vmor %vm293, %vm389
      %vm422 = vmor %vm294, %vm390
      %vm423 = vmor %vm295, %vm391
      %vm424 = vmor %vm296, %vm392
      %vm425 = vmor %vm297, %vm393
      %vm426 = vmor %vm298, %vm394
      %vm427 = vmor %vm299, %vm395
      %vm428 = vmor %vm300, %vm396
      %vm429 = vmor %vm301, %vm397
      %vm430 = vmor %vm302, %vm398
      %vm431 = vmor %vm303, %vm399
      %vm432 = vmor %vm304, %vm400
      %vm433 = vmor %vm305, %vm401
      %vm434 = vmor %vm306, %vm402
      %vm435 = vmor %vm307, %vm403
      %vm436 = vmor %vm308, %vm404
      %vm437 = vmor %vm309, %vm405
      %vm438 = vmor %vm310, %vm406
      %vm439 = vmor %vm311, %vm407
      %vm440 = vmor %vm312, %vm408
      %vm441 = vmor %vm313, %vm409
      %vm442 = vmor %vm314, %vm410
      %vm443 = vmor %vm315, %vm411
      %vm444 = vmor %vm316, %vm412
      %vm445 = vmor %vm317, %vm413
      %vm446 = vmor %vm318, %vm414
      %vm447 = vmor %vm319, %vm415
      %vm448 = vmor %vm320, %vm416
      %vm449 = vmor %vm321, %vm417
      %vm450 = vmor %vm322, %vm418
      %vm451 = vmpackc.low %vm421, %vm419
      %vm452 = vmpackc.low %vm425, %vm423
      %v453 = vsel %vm451, 16711935, 0
      %v454 = vsel %vm452, 16711935, 0
      %v455 = vpack.c.b8 %v454, %v453
      %vm456 = vnez %v455
      %vm457 = vmpackc.low %vm422, %vm420
      %vm458 = vmpackc.low %vm426, %vm424
      %v459 = vsel %vm457, 16711935, 0
      %v460 = vsel %vm458, 16711935, 0
      %v461 = vpack.c.b8 %v460, %v459
      %vm462 = vnez %v461
      %vm463 = vmpackc.low %vm429, %vm427
      %vm464 = vmpackc.low %vm433, %vm431
      %v465 = vsel %vm463, 16711935, 0
      %v466 = vsel %vm464, 16711935, 0
      %v467 = vpack.c.b8 %v466, %v465
      %vm468 = vnez %v467
      %vm469 = vmpackc.low %vm430, %vm428
      %vm470 = vmpackc.low %vm434, %vm432
      %v471 = vsel %vm469, 16711935, 0
      %v472 = vsel %vm470, 16711935, 0
      %v473 = vpack.c.b8 %v472, %v471
      %vm474 = vnez %v473
      %vm475 = vmpackc.low %vm437, %vm435
      %vm476 = vmpackc.low %vm441, %vm439
      %v477 = vsel %vm475, 16711935, 0
      %v478 = vsel %vm476, 16711935, 0
      %v479 = vpack.c.b8 %v478, %v477
      %vm480 = vnez %v479
      %vm481 = vmpackc.low %vm438, %vm436
      %vm482 = vmpackc.low %vm442, %vm440
      %v483 = vsel %vm481, 16711935, 0
      %v484 = vsel %vm482, 16711935, 0
      %v485 = vpack.c.b8 %v484, %v483
      %vm486 = vnez %v485
      %vm487 = vmpackc.low %vm445, %vm443
      %vm488 = vmpackc.low %vm449, %vm447
      %v489 = vsel %vm487, 16711935, 0
      %v490 = vsel %vm488, 16711935, 0
      %v491 = vpack.c.b8 %v490, %v489
      %vm492 = vnez %v491
      %vm493 = vmpackc.low %vm446, %vm444
      %vm494 = vmpackc.low %vm450, %vm448
      %v495 = vsel %vm493, 16711935, 0
      %v496 = vsel %vm494, 16711935, 0
      %v497 = vpack.c.b8 %v496, %v495
      %vm498 = vnez %v497
      %v499 = vsel %vm456, 16843009, 0
      %v500 = vsel %vm462, 16843009, 0
      %v501 = vsel %vm468, 16843009, 0
      %v502 = vsel %vm474, 16843009, 0
      %v503 = vsel %vm480, 16843009, 0
      %v504 = vsel %vm486, 16843009, 0
      %v505 = vsel %vm492, 16843009, 0
      %v506 = vsel %vm498, 16843009, 0
      %507 = vst [vmem:[%s147] sm:$0xff] %v499
      %508 = vst [vmem:[%s147 + $0x8] sm:$0xff] %v500
      %509 = vst [vmem:[%s147 + $0x10] sm:$0xff] %v501
      %510 = vst [vmem:[%s147 + $0x18] sm:$0xff] %v502
      %511 = vst [vmem:[%s147 + $0x20] sm:$0xff] %v503
      %512 = vst [vmem:[%s147 + $0x28] sm:$0xff] %v504
      %513 = vst [vmem:[%s147 + $0x30] sm:$0xff] %v505
      %514 = vst [vmem:[%s147 + $0x38] sm:$0xff] %v506
      %s515 = smul.u32 4, %s13
      %p516 = scmp.lt.s32.totalorder %s515, 7
      %s517 = scalar_select %p516, %s515, 7
      %s518 = smul.addr %s517, 2
      %s519 = smul.addr %s518, 8
      %s520 = scalar_lea.vmem %s2, %s519
      // Predicated region
      $region29: #{hardgam_forward.5} parent=27 // pred_check
        %p521 = pneg %p78
      $region30: #{hardgam_forward.5} parent=27 // pred_check_branch
        %523 = sbr.rel (%p521) target = $region32
      $region31: #{hardgam_forward.5} parent=27 // pred_region
        %s524 = smul.u32 4, %s13
      $region32: #{hardgam_forward.5} parent=27 // pred_fallthru
        _
    $region28: #{hardgam_forward.5} parent=5 // pred_fallthru
      _
    %p525 = scmp.le.s32.totalorder 2, %s8
    // Predicated region
    $region33: #{hardgam_forward.5} parent=5 // pred_check
      %p526 = pneg %p525
    $region34: #{hardgam_forward.5} parent=5 // pred_check_branch
      %528 = sbr.rel (%p526) target = $region36
    $region35: #{hardgam_forward.5} parent=5 // pred_region
      %s529 = ssub.s32 %s8, 2
      // Predicated region
      $region37: #{hardgam_forward.5} parent=35 // pred_check
        %p530 = pneg %p84
      $region38: #{hardgam_forward.5} parent=35 // pred_check_branch
        %532 = sbr.rel (%p530) target = $region40
      $region39: #{hardgam_forward.5} parent=35 // pred_region
        %s533 = smul.u32 4, %s14
        %p534 = scmp.lt.s32.totalorder %s533, 7
        %s535 = scalar_select %p534, %s533, 7
        %s536 = smul.addr %s535, 2
        %s537 = smul.addr %s536, 8
        %s538 = scalar_lea.vmem %s2, %s537
      $region40: #{hardgam_forward.5} parent=35 // pred_fallthru
        _
    $region36: #{hardgam_forward.5} parent=5 // pred_fallthru
      _
  $region6: #{hardgam_forward.5} parent=0 // loop_footer
    %s12 = sadd.s32 1, %s8
  $region7: #{hardgam_forward.5} parent=0 // loop_footer_branch
    %7 = sbr.rel target = $region3
  $region8: #{hardgam_forward.5} parent=0 // loop_exit
    _

// kernel: hardgam_forward.4
$region0: #{hardgam_forward.4}
  #allocation0 [shape = 'u32[]', space=smem, size = 0x4, offset = 0x4, fixed_abs, tag = 'smem constant byte address 0x4 - core index']
  #allocation1 [shape = 'u32[72,128]{1,0:T(1,128)}', space=vmem, size = 0x9000, scoped, tag = 'internal scratch']
  %s0 = inlined_call_operand.vmem [shape: f32[256,128], index: 0, kind: input, shape index: {}]
  %s1 = inlined_call_operand.vmem [shape: f32[1,128], index: 1, kind: input, shape index: {}]
  %s2 = inlined_call_operand.vmem [shape: f32[128,128], index: 2, kind: input, shape index: {}]
  %s3 = inlined_call_operand.vmem [shape: f32[1,128], index: 3, kind: input, shape index: {}]
  %s4 = inlined_call_operand.vmem [shape: f32[1,128], index: 4, kind: input, shape index: {}]
  %s5 = inlined_call_operand.vmem [shape: bf16[256,128], index: 5, kind: output, shape index: {0}]
  %s6 = inlined_call_operand.vmem [shape: f32[256,128], index: 6, kind: output, shape index: {1}]
  %7 = xla_tuple %s5, %s6
  %s8 = sld [smem:[#allocation0]]
  $region61: #{hardgam_forward.4} parent=0
    _
  %s10 = ssub.s32 1, %s8
  %s11 = scalar_select 0, %s10, %s8
  loop: start=0, step=1, limit=4
  $region2: #{hardgam_forward.4} parent=0 // loop_pre_header
    _
  $region3: #{hardgam_forward.4} parent=0 // loop_header
    %s13 = sphi 0, %s17
    %p14 = scmp.ge.s32.totalorder %s13, 4
    %s23 = sphi 0, %s25
    %s26 = sphi 0, %s23
    %s27 = sphi 0, %s26
    %s43 = sphi 0, %s27
    %s47 = sphi 0, %s47
    %s49 = sphi 0, %s47
    %s50 = sphi 0, %s49
    %s64 = sphi 0, %s50
    %s68 = sphi 0, %s68
    %s70 = sphi 0, %s68
    %s71 = sphi 0, %s70
    %s85 = sphi 0, %s71
    %s89 = sphi 0, %s89
    %s91 = sphi 0, %s89
    %s92 = sphi 0, %s91
    %s106 = sphi 0, %s92
    %s110 = sphi 0, %s110
    %s112 = sphi 0, %s110
    %s113 = sphi 0, %s112
    %s127 = sphi 0, %s113
    %s133 = sphi 0, %s135
    %s136 = sphi 0, %s133
    %s137 = sphi 0, %s136
    %s153 = sphi 0, %s137
    %s159 = sphi 0, %s161
    %s162 = sphi 0, %s159
    %s163 = sphi 0, %s162
    %s179 = sphi 0, %s163
  $region4: #{hardgam_forward.4} parent=0 // loop_header_branch
    %16 = sbr.rel (%p14) target = $region8
  $region5: #{hardgam_forward.4} parent=0 // loop_body
    %s18 = ssub.s32 %s13, 1
    %s19 = ssub.s32 %s13, 2
    %s20 = sadd.s32 %s13, 1
    %s21 = ssub.s32 %s13, %s20
    %p22 = scmp.eq.s32.totalorder %s21, 0
    %s24 = sadd.s32 %s23, 1
    %s25 = scalar_select %p22, %s23, %s24
    %p28 = pneg %p22
    %p29 = scmp.eq.s32.totalorder %s13, 1
    %p30 = por %p28, %p29
    %p31 = scmp.ne.s32.totalorder %s23, %s26
    %p32 = scmp.eq.s32.totalorder %s13, 0
    %p33 = por %p31, %p32
    %p34 = scmp.ne.s32.totalorder %s23, %s26
    %p35 = scmp.eq.s32.totalorder %s18, 1
    %p36 = por %p34, %p35
    %p37 = scmp.ne.s32.totalorder %s26, %s27
    %p38 = scmp.eq.s32.totalorder %s18, 0
    %p39 = por %p37, %p38
    %p40 = scmp.ne.s32.totalorder %s26, %s27
    %p41 = scmp.eq.s32.totalorder %s19, 1
    %p42 = por %p40, %p41
    %p44 = scmp.ne.s32.totalorder %s27, %s43
    %p45 = scmp.eq.s32.totalorder %s19, 0
    %p46 = por %p44, %p45
    %s48 = sadd.s32 %s47, 1
    %p51 = scmp.eq.s32.totalorder %s13, 1
    %p52 = scmp.ne.s32.totalorder %s47, %s49
    %p53 = scmp.eq.s32.totalorder %s13, 0
    %p54 = por %p52, %p53
    %p55 = scmp.ne.s32.totalorder %s47, %s49
    %p56 = scmp.eq.s32.totalorder %s18, 1
    %p57 = por %p55, %p56
    %p58 = scmp.ne.s32.totalorder %s49, %s50
    %p59 = scmp.eq.s32.totalorder %s18, 0
    %p60 = por %p58, %p59
    %p61 = scmp.ne.s32.totalorder %s49, %s50
    %p62 = scmp.eq.s32.totalorder %s19, 1
    %p63 = por %p61, %p62
    %p65 = scmp.ne.s32.totalorder %s50, %s64
    %p66 = scmp.eq.s32.totalorder %s19, 0
    %p67 = por %p65, %p66
    %s69 = sadd.s32 %s68, 1
    %p72 = scmp.eq.s32.totalorder %s13, 1
    %p73 = scmp.ne.s32.totalorder %s68, %s70
    %p74 = scmp.eq.s32.totalorder %s13, 0
    %p75 = por %p73, %p74
    %p76 = scmp.ne.s32.totalorder %s68, %s70
    %p77 = scmp.eq.s32.totalorder %s18, 1
    %p78 = por %p76, %p77
    %p79 = scmp.ne.s32.totalorder %s70, %s71
    %p80 = scmp.eq.s32.totalorder %s18, 0
    %p81 = por %p79, %p80
    %p82 = scmp.ne.s32.totalorder %s70, %s71
    %p83 = scmp.eq.s32.totalorder %s19, 1
    %p84 = por %p82, %p83
    %p86 = scmp.ne.s32.totalorder %s71, %s85
    %p87 = scmp.eq.s32.totalorder %s19, 0
    %p88 = por %p86, %p87
    %s90 = sadd.s32 %s89, 1
    %p93 = scmp.eq.s32.totalorder %s13, 1
    %p94 = scmp.ne.s32.totalorder %s89, %s91
    %p95 = scmp.eq.s32.totalorder %s13, 0
    %p96 = por %p94, %p95
    %p97 = scmp.ne.s32.totalorder %s89, %s91
    %p98 = scmp.eq.s32.totalorder %s18, 1
    %p99 = por %p97, %p98
    %p100 = scmp.ne.s32.totalorder %s91, %s92
    %p101 = scmp.eq.s32.totalorder %s18, 0
    %p102 = por %p100, %p101
    %p103 = scmp.ne.s32.totalorder %s91, %s92
    %p104 = scmp.eq.s32.totalorder %s19, 1
    %p105 = por %p103, %p104
    %p107 = scmp.ne.s32.totalorder %s92, %s106
    %p108 = scmp.eq.s32.totalorder %s19, 0
    %p109 = por %p107, %p108
    %s111 = sadd.s32 %s110, 1
    %p114 = scmp.eq.s32.totalorder %s13, 1
    %p115 = scmp.ne.s32.totalorder %s110, %s112
    %p116 = scmp.eq.s32.totalorder %s13, 0
    %p117 = por %p115, %p116
    %p118 = scmp.ne.s32.totalorder %s110, %s112
    %p119 = scmp.eq.s32.totalorder %s18, 1
    %p120 = por %p118, %p119
    %p121 = scmp.ne.s32.totalorder %s112, %s113
    %p122 = scmp.eq.s32.totalorder %s18, 0
    %p123 = por %p121, %p122
    %p124 = scmp.ne.s32.totalorder %s112, %s113
    %p125 = scmp.eq.s32.totalorder %s19, 1
    %p126 = por %p124, %p125
    %p128 = scmp.ne.s32.totalorder %s113, %s127
    %p129 = scmp.eq.s32.totalorder %s19, 0
    %p130 = por %p128, %p129
    %s131 = ssub.s32 %s13, %s20
    %p132 = scmp.eq.s32.totalorder %s131, 0
    %s134 = sadd.s32 %s133, 1
    %s135 = scalar_select %p132, %s133, %s134
    %p138 = pneg %p132
    %p139 = scmp.eq.s32.totalorder %s13, 1
    %p140 = por %p138, %p139
    %p141 = scmp.ne.s32.totalorder %s133, %s136
    %p142 = scmp.eq.s32.totalorder %s13, 0
    %p143 = por %p141, %p142
    %p144 = scmp.ne.s32.totalorder %s133, %s136
    %p145 = scmp.eq.s32.totalorder %s18, 1
    %p146 = por %p144, %p145
    %p147 = scmp.ne.s32.totalorder %s136, %s137
    %p148 = scmp.eq.s32.totalorder %s18, 0
    %p149 = por %p147, %p148
    %p150 = scmp.ne.s32.totalorder %s136, %s137
    %p151 = scmp.eq.s32.totalorder %s19, 1
    %p152 = por %p150, %p151
    %p154 = scmp.ne.s32.totalorder %s137, %s153
    %p155 = scmp.eq.s32.totalorder %s19, 0
    %p156 = por %p154, %p155
    %s157 = ssub.s32 %s13, %s20
    %p158 = scmp.eq.s32.totalorder %s157, 0
    %s160 = sadd.s32 %s159, 1
    %s161 = scalar_select %p158, %s159, %s160
    %p164 = pneg %p158
    %p165 = scmp.eq.s32.totalorder %s13, 1
    %p166 = por %p164, %p165
    %p167 = scmp.ne.s32.totalorder %s159, %s162
    %p168 = scmp.eq.s32.totalorder %s13, 0
    %p169 = por %p167, %p168
    %p170 = scmp.ne.s32.totalorder %s159, %s162
    %p171 = scmp.eq.s32.totalorder %s18, 1
    %p172 = por %p170, %p171
    %p173 = scmp.ne.s32.totalorder %s162, %s163
    %p174 = scmp.eq.s32.totalorder %s18, 0
    %p175 = por %p173, %p174
    %p176 = scmp.ne.s32.totalorder %s162, %s163
    %p177 = scmp.eq.s32.totalorder %s19, 1
    %p178 = por %p176, %p177
    %p180 = scmp.ne.s32.totalorder %s163, %s179
    %p181 = scmp.eq.s32.totalorder %s19, 0
    %p182 = por %p180, %p181
    %p183 = scmp.le.s32.totalorder 1, %s13
    %p184 = scmp.lt.s32.totalorder %s13, 3
    %p185 = pnand %p183, %p184
    %p186 = pneg %p185
    // Predicated region
    $region9: #{hardgam_forward.4} parent=5 // pred_check
      _
    $region10: #{hardgam_forward.4} parent=5 // pred_check_branch
      %188 = sbr.rel (%p185) target = $region12
    $region11: #{hardgam_forward.4} parent=5 // pred_region
      %s189 = ssub.s32 %s13, 1
      // Predicated region
      $region13: #{hardgam_forward.4} parent=11 // pred_check
        %p190 = pneg %p60
      $region14: #{hardgam_forward.4} parent=11 // pred_check_branch
        %192 = sbr.rel (%p190) target = $region16
      $region15: #{hardgam_forward.4} parent=11 // pred_region
        _
      $region16: #{hardgam_forward.4} parent=11 // pred_fallthru
        _
      // Predicated region
      $region17: #{hardgam_forward.4} parent=11 // pred_check
        %p193 = pneg %p81
      $region18: #{hardgam_forward.4} parent=11 // pred_check_branch
        %195 = sbr.rel (%p193) target = $region20
      $region19: #{hardgam_forward.4} parent=11 // pred_region
        _
      $region20: #{hardgam_forward.4} parent=11 // pred_fallthru
        _
      // Predicated region
      $region21: #{hardgam_forward.4} parent=11 // pred_check
        %p196 = pneg %p102
      $region22: #{hardgam_forward.4} parent=11 // pred_check_branch
        %198 = sbr.rel (%p196) target = $region24
      $region23: #{hardgam_forward.4} parent=11 // pred_region
        _
      $region24: #{hardgam_forward.4} parent=11 // pred_fallthru
        _
      // Predicated region
      $region25: #{hardgam_forward.4} parent=11 // pred_check
        %p199 = pneg %p123
      $region26: #{hardgam_forward.4} parent=11 // pred_check_branch
        %201 = sbr.rel (%p199) target = $region28
      $region27: #{hardgam_forward.4} parent=11 // pred_region
        _
      $region28: #{hardgam_forward.4} parent=11 // pred_fallthru
        _
    $region12: #{hardgam_forward.4} parent=5 // pred_fallthru
      _
    %p202 = scmp.lt.s32.totalorder %s13, 2
    // Predicated region
    $region29: #{hardgam_forward.4} parent=5 // pred_check
      %p203 = pneg %p202
    $region30: #{hardgam_forward.4} parent=5 // pred_check_branch
      %205 = sbr.rel (%p203) target = $region32
    $region31: #{hardgam_forward.4} parent=5 // pred_region
      // Predicated region
      $region33: #{hardgam_forward.4} parent=31 // pred_check
        %p206 = pneg %p33
      $region34: #{hardgam_forward.4} parent=31 // pred_check_branch
        %208 = sbr.rel (%p206) target = $region36
      $region35: #{hardgam_forward.4} parent=31 // pred_region
        %s209 = smul.u32 16, %s13
        %p210 = scmp.lt.s32.totalorder %s209, 31
        %s211 = scalar_select %p210, %s209, 31
        %s212 = smul.addr %s211, 8
        %s213 = scalar_lea.vmem %s0, %s212
        %s214 = smul.u32 16, %s13
      $region36: #{hardgam_forward.4} parent=31 // pred_fallthru
        _
    $region32: #{hardgam_forward.4} parent=5 // pred_fallthru
      _
    %p215 = scmp.le.s32.totalorder 1, %s13
    %p216 = scmp.lt.s32.totalorder %s13, 3
    %p217 = pnand %p215, %p216
    %p218 = pneg %p217
    // Predicated region
    $region37: #{hardgam_forward.4} parent=5 // pred_check
      _
    $region38: #{hardgam_forward.4} parent=5 // pred_check_branch
      %220 = sbr.rel (%p217) target = $region40
    $region39: #{hardgam_forward.4} parent=5 // pred_region
      %s221 = ssub.s32 %s13, 1
      %s222 = smul.u32 16, %s18
      %p223 = scmp.lt.s32.totalorder %s222, 31
      %s224 = scalar_select %p223, %s222, 31
      %s225 = smul.addr %s224, 8
      %s226 = scalar_lea.vmem %s0, %s225
      %p227 = pneg %p39
      %p228 = pneg %p36
      %p229 = pneg %p60
      %p230 = pneg %p57
      %p231 = pneg %p81
      %p232 = pneg %p78
      %p233 = pneg %p102
      %p234 = pneg %p99
      %p235 = pneg %p123
      %p236 = pneg %p120
      %p237 = pneg %p149
      %p238 = pneg %p146
      %s239 = smul.u32 16, %s18
      %p240 = scmp.lt.s32.totalorder %s239, 31
      %s241 = scalar_select %p240, %s239, 31
      %s242 = smul.addr %s241, 4
      %s243 = scalar_lea.vmem %s5, %s242
      %p244 = pneg %p175
      %p245 = pneg %p172
      %s246 = smul.u32 16, %s18
      %p247 = scmp.lt.s32.totalorder %s246, 31
      %s248 = scalar_select %p247, %s246, 31
      %s249 = smul.addr %s248, 8
      %s250 = scalar_lea.vmem %s6, %s249
      %s251 = smul.u32 16, %s18
      %p252 = scmp.lt.s32.totalorder %s251, 31
      %s253 = scalar_select %p252, %s251, 31
      %s254 = smul.addr %s253, 8
      %s255 = scalar_lea.vmem %s0, %s254
      %s256 = smul.u32 16, %s18
      %s257 = smul.u32 16, %s18
      %p258 = scmp.lt.s32.totalorder %s257, 31
      %s259 = scalar_select %p258, %s257, 31
      %s260 = smul.addr %s259, 4
      %s261 = scalar_lea.vmem %s5, %s260
      %s262 = smul.u32 16, %s18
      %s263 = smul.u32 16, %s18
      %p264 = scmp.lt.s32.totalorder %s263, 31
      %s265 = scalar_select %p264, %s263, 31
      %s266 = smul.addr %s265, 8
      %s267 = scalar_lea.vmem %s6, %s266
      %s268 = smul.u32 16, %s18
      %v269 = vld [vmem:[%s255] sm:$0xff]
      %v270 = vld [vmem:[%s255 + $0x8] sm:$0xff]
      %v271 = vld [vmem:[%s255 + $0x10] sm:$0xff]
      %v272 = vld [vmem:[%s255 + $0x18] sm:$0xff]
      %v273 = vld [vmem:[%s255 + $0x20] sm:$0xff]
      %v274 = vld [vmem:[%s255 + $0x28] sm:$0xff]
      %v275 = vld [vmem:[%s255 + $0x30] sm:$0xff]
      %v276 = vld [vmem:[%s255 + $0x38] sm:$0xff]
      %v277 = vld [vmem:[%s255 + $0x40] sm:$0xff]
      %v278 = vld [vmem:[%s255 + $0x48] sm:$0xff]
      %v279 = vld [vmem:[%s255 + $0x50] sm:$0xff]
      %v280 = vld [vmem:[%s255 + $0x58] sm:$0xff]
      %v281 = vld [vmem:[%s255 + $0x60] sm:$0xff]
      %v282 = vld [vmem:[%s255 + $0x68] sm:$0xff]
      %v283 = vld [vmem:[%s255 + $0x70] sm:$0xff]
      %v284 = vld [vmem:[%s255 + $0x78] sm:$0xff]
      %v285 = vld [vmem:[%s1] sm:$0x1]
      %v286 = vmul.f32 %v285, %v285
      %vm287 = vcmask 1040384
      %v288 = vsel %vm287, %v286, 0.0
      %289 = vadd.xlane.f32.xlu0 %v288
      %v290 = vpop.xlane.xlu0 %289
      %v291 = vrot.slane %v290, 4
      %v292 = vadd.f32 %v290, %v291
      %v293 = vrot.slane %v292, 2
      %v294 = vadd.f32 %v292, %v293
      %v295 = vrot.slane %v294, 1
      %v296 = vadd.f32 %v294, %v295
      %s297 = vtos %v296
      %v298 = vstv %s297
      %v299 = vrsqrt.pop %v298
      %v300 = vmul.f32 %v299, %v298
      %v301 = vmul.f32 %v300, %v299
      %v302 = vmul.f32 0.5, %v301
      %v303 = vsub.f32 1.5, %v302
      %v304 = vmul.f32 %v299, %v303
      %vm305 = vweird.f32 %v298
      %vm306 = vweird.f32 %v299
      %vm307 = vmor %vm305, %vm306
      %v308 = vsel %vm307, %v299, %v304
      %s309 = vtos %v308
      %v311 = vperm.slane %v285, 0
      %v313 = vmul.f32 %v269, %v311
      %v314 = vmul.f32 %v270, %v311
      %v315 = vmul.f32 %v271, %v311
      %v316 = vmul.f32 %v272, %v311
      %v317 = vmul.f32 %v273, %v311
      %v318 = vmul.f32 %v274, %v311
      %v319 = vmul.f32 %v275, %v311
      %v320 = vmul.f32 %v276, %v311
      %v321 = vmul.f32 %v277, %v311
      %v322 = vmul.f32 %v278, %v311
      %v323 = vmul.f32 %v279, %v311
      %v324 = vmul.f32 %v280, %v311
      %v325 = vmul.f32 %v281, %v311
      %v326 = vmul.f32 %v282, %v311
      %v327 = vmul.f32 %v283, %v311
      %v328 = vmul.f32 %v284, %v311
      %329 = vadd.xlane.f32.xlu0 %v313
      %v330 = vpop.xlane.xlu0 %329
      %331 = vadd.xlane.f32.xlu0 %v314
      %v332 = vpop.xlane.xlu0 %331
      %333 = vadd.xlane.f32.xlu0 %v315
      %v334 = vpop.xlane.xlu0 %333
      %335 = vadd.xlane.f32.xlu0 %v316
      %v336 = vpop.xlane.xlu0 %335
      %337 = vadd.xlane.f32.xlu0 %v317
      %v338 = vpop.xlane.xlu0 %337
      %339 = vadd.xlane.f32.xlu0 %v318
      %v340 = vpop.xlane.xlu0 %339
      %341 = vadd.xlane.f32.xlu0 %v319
      %v342 = vpop.xlane.xlu0 %341
      %343 = vadd.xlane.f32.xlu0 %v320
      %v344 = vpop.xlane.xlu0 %343
      %345 = vadd.xlane.f32.xlu0 %v321
      %v346 = vpop.xlane.xlu0 %345
      %347 = vadd.xlane.f32.xlu0 %v322
      %v348 = vpop.xlane.xlu0 %347
      %349 = vadd.xlane.f32.xlu0 %v323
      %v350 = vpop.xlane.xlu0 %349
      %351 = vadd.xlane.f32.xlu0 %v324
      %v352 = vpop.xlane.xlu0 %351
      %353 = vadd.xlane.f32.xlu0 %v325
      %v354 = vpop.xlane.xlu0 %353
      %355 = vadd.xlane.f32.xlu0 %v326
      %v356 = vpop.xlane.xlu0 %355
      %357 = vadd.xlane.f32.xlu0 %v327
      %v358 = vpop.xlane.xlu0 %357
      %359 = vadd.xlane.f32.xlu0 %v328
      %v360 = vpop.xlane.xlu0 %359
      %v361 = vand.u32 2147483647, %v330
      %v362 = vand.u32 2147483647, %v332
      %v363 = vand.u32 2147483647, %v334
      %v364 = vand.u32 2147483647, %v336
      %v365 = vand.u32 2147483647, %v338
      %v366 = vand.u32 2147483647, %v340
      %v367 = vand.u32 2147483647, %v342
      %v368 = vand.u32 2147483647, %v344
      %v369 = vand.u32 2147483647, %v346
      %v370 = vand.u32 2147483647, %v348
      %v371 = vand.u32 2147483647, %v350
      %v372 = vand.u32 2147483647, %v352
      %v373 = vand.u32 2147483647, %v354
      %v374 = vand.u32 2147483647, %v356
      %v375 = vand.u32 2147483647, %v358
      %v376 = vand.u32 2147483647, %v360
      %v377 = vstv %s309
      %v378 = vmul.f32 %v361, %v377
      %v379 = vmul.f32 %v362, %v377
      %v380 = vmul.f32 %v363, %v377
      %v381 = vmul.f32 %v364, %v377
      %v382 = vmul.f32 %v365, %v377
      %v383 = vmul.f32 %v366, %v377
      %v384 = vmul.f32 %v367, %v377
      %v385 = vmul.f32 %v368, %v377
      %v386 = vmul.f32 %v369, %v377
      %v387 = vmul.f32 %v370, %v377
      %v388 = vmul.f32 %v371, %v377
      %v389 = vmul.f32 %v372, %v377
      %v390 = vmul.f32 %v373, %v377
      %v391 = vmul.f32 %v374, %v377
      %v392 = vmul.f32 %v375, %v377
      %v393 = vmul.f32 %v376, %v377
      %v394 = vxor.u32 %v378, 2147483648
      %v395 = vxor.u32 %v379, 2147483648
      %v396 = vxor.u32 %v380, 2147483648
      %v397 = vxor.u32 %v381, 2147483648
      %v398 = vxor.u32 %v382, 2147483648
      %v399 = vxor.u32 %v383, 2147483648
      %v400 = vxor.u32 %v384, 2147483648
      %v401 = vxor.u32 %v385, 2147483648
      %v402 = vxor.u32 %v386, 2147483648
      %v403 = vxor.u32 %v387, 2147483648
      %v404 = vxor.u32 %v388, 2147483648
      %v405 = vxor.u32 %v389, 2147483648
      %v406 = vxor.u32 %v390, 2147483648
      %v407 = vxor.u32 %v391, 2147483648
      %v408 = vxor.u32 %v392, 2147483648
      %v409 = vxor.u32 %v393, 2147483648
      %v410 = vmul.f32 %v394, 1.442695
      %v411 = vpow.pop %v410
      %v412 = vmul.f32 %v395, 1.442695
      %v413 = vpow.pop %v412
      %v414 = vmul.f32 %v396, 1.442695
      %v415 = vpow.pop %v414
      %v416 = vmul.f32 %v397, 1.442695
      %v417 = vpow.pop %v416
      %v418 = vmul.f32 %v398, 1.442695
      %v419 = vpow.pop %v418
      %v420 = vmul.f32 %v399, 1.442695
      %v421 = vpow.pop %v420
      %v422 = vmul.f32 %v400, 1.442695
      %v423 = vpow.pop %v422
      %v424 = vmul.f32 %v401, 1.442695
      %v425 = vpow.pop %v424
      %v426 = vmul.f32 %v402, 1.442695
      %v427 = vpow.pop %v426
      %v428 = vmul.f32 %v403, 1.442695
      %v429 = vpow.pop %v428
      %v430 = vmul.f32 %v404, 1.442695
      %v431 = vpow.pop %v430
      %v432 = vmul.f32 %v405, 1.442695
      %v433 = vpow.pop %v432
      %v434 = vmul.f32 %v406, 1.442695
      %v435 = vpow.pop %v434
      %v436 = vmul.f32 %v407, 1.442695
      %v437 = vpow.pop %v436
      %v438 = vmul.f32 %v408, 1.442695
      %v439 = vpow.pop %v438
      %v440 = vmul.f32 %v409, 1.442695
      %v441 = vpow.pop %v440
      %v442 = vadd.f32 %v411, 1.0
      %v443 = vadd.f32 %v413, 1.0
      %v444 = vadd.f32 %v415, 1.0
      %v445 = vadd.f32 %v417, 1.0
      %v446 = vadd.f32 %v419, 1.0
      %v447 = vadd.f32 %v421, 1.0
      %v448 = vadd.f32 %v423, 1.0
      %v449 = vadd.f32 %v425, 1.0
      %v450 = vadd.f32 %v427, 1.0
      %v451 = vadd.f32 %v429, 1.0
      %v452 = vadd.f32 %v431, 1.0
      %v453 = vadd.f32 %v433, 1.0
      %v454 = vadd.f32 %v435, 1.0
      %v455 = vadd.f32 %v437, 1.0
      %v456 = vadd.f32 %v439, 1.0
      %v457 = vadd.f32 %v441, 1.0
      %v458 = vrcp.pop %v442
      %v459 = vmul.f32 %v442, %v458
      %v460 = vsub.f32 1.0, %v459
      %v461 = vmul.f32 %v458, %v460
      %v462 = vadd.f32 %v458, %v461
      %vm463 = vweird.f32 %v442
      %vm464 = vweird.f32 %v458
      %vm465 = vmor %vm463, %vm464
      %v466 = vsel %vm465, %v458, %v462
      %v467 = vand.u32 2147483647, %v442
      %vm468 = vcmp.eq.f32.partialorder %v467, 8.507059e+37
      %v469 = vand.u32 %v442, 2147483648
      %v470 = vor.u32 1.1754944e-38, %v469
      %v471 = vsel %vm468, %v470, %v466
      %v472 = vmul.f32 1.0, %v471
      %v473 = vrcp.pop %v443
      %v474 = vmul.f32 %v443, %v473
      %v475 = vsub.f32 1.0, %v474
      %v476 = vmul.f32 %v473, %v475
      %v477 = vadd.f32 %v473, %v476
      %vm478 = vweird.f32 %v443
      %vm479 = vweird.f32 %v473
      %vm480 = vmor %vm478, %vm479
      %v481 = vsel %vm480, %v473, %v477
      %v482 = vand.u32 2147483647, %v443
      %vm483 = vcmp.eq.f32.partialorder %v482, 8.507059e+37
      %v484 = vand.u32 %v443, 2147483648
      %v485 = vor.u32 1.1754944e-38, %v484
      %v486 = vsel %vm483, %v485, %v481
      %v487 = vmul.f32 1.0, %v486
      %v488 = vrcp.pop %v444
      %v489 = vmul.f32 %v444, %v488
      %v490 = vsub.f32 1.0, %v489
      %v491 = vmul.f32 %v488, %v490
      %v492 = vadd.f32 %v488, %v491
      %vm493 = vweird.f32 %v444
      %vm494 = vweird.f32 %v488
      %vm495 = vmor %vm493, %vm494
      %v496 = vsel %vm495, %v488, %v492
      %v497 = vand.u32 2147483647, %v444
      %vm498 = vcmp.eq.f32.partialorder %v497, 8.507059e+37
      %v499 = vand.u32 %v444, 2147483648
      %v500 = vor.u32 1.1754944e-38, %v499
      %v501 = vsel %vm498, %v500, %v496
      %v502 = vmul.f32 1.0, %v501
      %v503 = vrcp.pop %v445
      %v504 = vmul.f32 %v445, %v503
      %v505 = vsub.f32 1.0, %v504
      %v506 = vmul.f32 %v503, %v505
      %v507 = vadd.f32 %v503, %v506
      %vm508 = vweird.f32 %v445
      %vm509 = vweird.f32 %v503
      %vm510 = vmor %vm508, %vm509
      %v511 = vsel %vm510, %v503, %v507
      %v512 = vand.u32 2147483647, %v445
      %vm513 = vcmp.eq.f32.partialorder %v512, 8.507059e+37
      %v514 = vand.u32 %v445, 2147483648
      %v515 = vor.u32 1.1754944e-38, %v514
      %v516 = vsel %vm513, %v515, %v511
      %v517 = vmul.f32 1.0, %v516
      %v518 = vrcp.pop %v446
      %v519 = vmul.f32 %v446, %v518
      %v520 = vsub.f32 1.0, %v519
      %v521 = vmul.f32 %v518, %v520
      %v522 = vadd.f32 %v518, %v521
      %vm523 = vweird.f32 %v446
      %vm524 = vweird.f32 %v518
      %vm525 = vmor %vm523, %vm524
      %v526 = vsel %vm525, %v518, %v522
      %v527 = vand.u32 2147483647, %v446
      %vm528 = vcmp.eq.f32.partialorder %v527, 8.507059e+37
      %v529 = vand.u32 %v446, 2147483648
      %v530 = vor.u32 1.1754944e-38, %v529
      %v531 = vsel %vm528, %v530, %v526
      %v532 = vmul.f32 1.0, %v531
      %v533 = vrcp.pop %v447
      %v534 = vmul.f32 %v447, %v533
      %v535 = vsub.f32 1.0, %v534
      %v536 = vmul.f32 %v533, %v535
      %v537 = vadd.f32 %v533, %v536
      %vm538 = vweird.f32 %v447
      %vm539 = vweird.f32 %v533
      %vm540 = vmor %vm538, %vm539
      %v541 = vsel %vm540, %v533, %v537
      %v542 = vand.u32 2147483647, %v447
      %vm543 = vcmp.eq.f32.partialorder %v542, 8.507059e+37
      %v544 = vand.u32 %v447, 2147483648
      %v545 = vor.u32 1.1754944e-38, %v544
      %v546 = vsel %vm543, %v545, %v541
      %v547 = vmul.f32 1.0, %v546
      %v548 = vrcp.pop %v448
      %v549 = vmul.f32 %v448, %v548
      %v550 = vsub.f32 1.0, %v549
      %v551 = vmul.f32 %v548, %v550
      %v552 = vadd.f32 %v548, %v551
      %vm553 = vweird.f32 %v448
      %vm554 = vweird.f32 %v548
      %vm555 = vmor %vm553, %vm554
      %v556 = vsel %vm555, %v548, %v552
      %v557 = vand.u32 2147483647, %v448
      %vm558 = vcmp.eq.f32.partialorder %v557, 8.507059e+37
      %v559 = vand.u32 %v448, 2147483648
      %v560 = vor.u32 1.1754944e-38, %v559
      %v561 = vsel %vm558, %v560, %v556
      %v562 = vmul.f32 1.0, %v561
      %v563 = vrcp.pop %v449
      %v564 = vmul.f32 %v449, %v563
      %v565 = vsub.f32 1.0, %v564
      %v566 = vmul.f32 %v563, %v565
      %v567 = vadd.f32 %v563, %v566
      %vm568 = vweird.f32 %v449
      %vm569 = vweird.f32 %v563
      %vm570 = vmor %vm568, %vm569
      %v571 = vsel %vm570, %v563, %v567
      %v572 = vand.u32 2147483647, %v449
      %vm573 = vcmp.eq.f32.partialorder %v572, 8.507059e+37
      %v574 = vand.u32 %v449, 2147483648
      %v575 = vor.u32 1.1754944e-38, %v574
      %v576 = vsel %vm573, %v575, %v571
      %v577 = vmul.f32 1.0, %v576
      %v578 = vrcp.pop %v450
      %v579 = vmul.f32 %v450, %v578
      %v580 = vsub.f32 1.0, %v579
      %v581 = vmul.f32 %v578, %v580
      %v582 = vadd.f32 %v578, %v581
      %vm583 = vweird.f32 %v450
      %vm584 = vweird.f32 %v578
      %vm585 = vmor %vm583, %vm584
      %v586 = vsel %vm585, %v578, %v582
      %v587 = vand.u32 2147483647, %v450
      %vm588 = vcmp.eq.f32.partialorder %v587, 8.507059e+37
      %v589 = vand.u32 %v450, 2147483648
      %v590 = vor.u32 1.1754944e-38, %v589
      %v591 = vsel %vm588, %v590, %v586
      %v592 = vmul.f32 1.0, %v591
      %v593 = vrcp.pop %v451
      %v594 = vmul.f32 %v451, %v593
      %v595 = vsub.f32 1.0, %v594
      %v596 = vmul.f32 %v593, %v595
      %v597 = vadd.f32 %v593, %v596
      %vm598 = vweird.f32 %v451
      %vm599 = vweird.f32 %v593
      %vm600 = vmor %vm598, %vm599
      %v601 = vsel %vm600, %v593, %v597
      %v602 = vand.u32 2147483647, %v451
      %vm603 = vcmp.eq.f32.partialorder %v602, 8.507059e+37
      %v604 = vand.u32 %v451, 2147483648
      %v605 = vor.u32 1.1754944e-38, %v604
      %v606 = vsel %vm603, %v605, %v601
      %v607 = vmul.f32 1.0, %v606
      %v608 = vrcp.pop %v452
      %v609 = vmul.f32 %v452, %v608
      %v610 = vsub.f32 1.0, %v609
      %v611 = vmul.f32 %v608, %v610
      %v612 = vadd.f32 %v608, %v611
      %vm613 = vweird.f32 %v452
      %vm614 = vweird.f32 %v608
      %vm615 = vmor %vm613, %vm614
      %v616 = vsel %vm615, %v608, %v612
      %v617 = vand.u32 2147483647, %v452
      %vm618 = vcmp.eq.f32.partialorder %v617, 8.507059e+37
      %v619 = vand.u32 %v452, 2147483648
      %v620 = vor.u32 1.1754944e-38, %v619
      %v621 = vsel %vm618, %v620, %v616
      %v622 = vmul.f32 1.0, %v621
      %v623 = vrcp.pop %v453
      %v624 = vmul.f32 %v453, %v623
      %v625 = vsub.f32 1.0, %v624
      %v626 = vmul.f32 %v623, %v625
      %v627 = vadd.f32 %v623, %v626
      %vm628 = vweird.f32 %v453
      %vm629 = vweird.f32 %v623
      %vm630 = vmor %vm628, %vm629
      %v631 = vsel %vm630, %v623, %v627
      %v632 = vand.u32 2147483647, %v453
      %vm633 = vcmp.eq.f32.partialorder %v632, 8.507059e+37
      %v634 = vand.u32 %v453, 2147483648
      %v635 = vor.u32 1.1754944e-38, %v634
      %v636 = vsel %vm633, %v635, %v631
      %v637 = vmul.f32 1.0, %v636
      %v638 = vrcp.pop %v454
      %v639 = vmul.f32 %v454, %v638
      %v640 = vsub.f32 1.0, %v639
      %v641 = vmul.f32 %v638, %v640
      %v642 = vadd.f32 %v638, %v641
      %vm643 = vweird.f32 %v454
      %vm644 = vweird.f32 %v638
      %vm645 = vmor %vm643, %vm644
      %v646 = vsel %vm645, %v638, %v642
      %v647 = vand.u32 2147483647, %v454
      %vm648 = vcmp.eq.f32.partialorder %v647, 8.507059e+37
      %v649 = vand.u32 %v454, 2147483648
      %v650 = vor.u32 1.1754944e-38, %v649
      %v651 = vsel %vm648, %v650, %v646
      %v652 = vmul.f32 1.0, %v651
      %v653 = vrcp.pop %v455
      %v654 = vmul.f32 %v455, %v653
      %v655 = vsub.f32 1.0, %v654
      %v656 = vmul.f32 %v653, %v655
      %v657 = vadd.f32 %v653, %v656
      %vm658 = vweird.f32 %v455
      %vm659 = vweird.f32 %v653
      %vm660 = vmor %vm658, %vm659
      %v661 = vsel %vm660, %v653, %v657
      %v662 = vand.u32 2147483647, %v455
      %vm663 = vcmp.eq.f32.partialorder %v662, 8.507059e+37
      %v664 = vand.u32 %v455, 2147483648
      %v665 = vor.u32 1.1754944e-38, %v664
      %v666 = vsel %vm663, %v665, %v661
      %v667 = vmul.f32 1.0, %v666
      %v668 = vrcp.pop %v456
      %v669 = vmul.f32 %v456, %v668
      %v670 = vsub.f32 1.0, %v669
      %v671 = vmul.f32 %v668, %v670
      %v672 = vadd.f32 %v668, %v671
      %vm673 = vweird.f32 %v456
      %vm674 = vweird.f32 %v668
      %vm675 = vmor %vm673, %vm674
      %v676 = vsel %vm675, %v668, %v672
      %v677 = vand.u32 2147483647, %v456
      %vm678 = vcmp.eq.f32.partialorder %v677, 8.507059e+37
      %v679 = vand.u32 %v456, 2147483648
      %v680 = vor.u32 1.1754944e-38, %v679
      %v681 = vsel %vm678, %v680, %v676
      %v682 = vmul.f32 1.0, %v681
      %v683 = vrcp.pop %v457
      %v684 = vmul.f32 %v457, %v683
      %v685 = vsub.f32 1.0, %v684
      %v686 = vmul.f32 %v683, %v685
      %v687 = vadd.f32 %v683, %v686
      %vm688 = vweird.f32 %v457
      %vm689 = vweird.f32 %v683
      %vm690 = vmor %vm688, %vm689
      %v691 = vsel %vm690, %v683, %v687
      %v692 = vand.u32 2147483647, %v457
      %vm693 = vcmp.eq.f32.partialorder %v692, 8.507059e+37
      %v694 = vand.u32 %v457, 2147483648
      %v695 = vor.u32 1.1754944e-38, %v694
      %v696 = vsel %vm693, %v695, %v691
      %v697 = vmul.f32 1.0, %v696
      %v698 = vmul.f32 %v269, %v472
      %v699 = vmul.f32 %v270, %v487
      %v700 = vmul.f32 %v271, %v502
      %v701 = vmul.f32 %v272, %v517
      %v702 = vmul.f32 %v273, %v532
      %v703 = vmul.f32 %v274, %v547
      %v704 = vmul.f32 %v275, %v562
      %v705 = vmul.f32 %v276, %v577
      %v706 = vmul.f32 %v277, %v592
      %v707 = vmul.f32 %v278, %v607
      %v708 = vmul.f32 %v279, %v622
      %v709 = vmul.f32 %v280, %v637
      %v710 = vmul.f32 %v281, %v652
      %v711 = vmul.f32 %v282, %v667
      %v712 = vmul.f32 %v283, %v682
      %v713 = vmul.f32 %v284, %v697
      %v714 = vld [vmem:[%s2] sm:$0xff]
      %v715 = vld [vmem:[%s2 + $0x8] sm:$0xff]
      %v716 = vld [vmem:[%s2 + $0x10] sm:$0xff]
      %v717 = vld [vmem:[%s2 + $0x18] sm:$0xff]
      %v718 = vld [vmem:[%s2 + $0x20] sm:$0xff]
      %v719 = vld [vmem:[%s2 + $0x28] sm:$0xff]
      %v720 = vld [vmem:[%s2 + $0x30] sm:$0xff]
      %v721 = vld [vmem:[%s2 + $0x38] sm:$0xff]
      %v722 = vld [vmem:[%s2 + $0x40] sm:$0xff]
      %v723 = vld [vmem:[%s2 + $0x48] sm:$0xff]
      %v724 = vld [vmem:[%s2 + $0x50] sm:$0xff]
      %v725 = vld [vmem:[%s2 + $0x58] sm:$0xff]
      %v726 = vld [vmem:[%s2 + $0x60] sm:$0xff]
      %v727 = vld [vmem:[%s2 + $0x68] sm:$0xff]
      %v728 = vld [vmem:[%s2 + $0x70] sm:$0xff]
      %v729 = vld [vmem:[%s2 + $0x78] sm:$0xff]
      %730 = vmatpush.msra.mxu0 %v729
      %731 = vmatpush.msra.mxu0 %v728
      %732 = vmatpush.msra.mxu0 %v727
      %733 = vmatpush.msra.mxu0 %v726
      %734 = vmatpush.msra.mxu0 %v725
      %735 = vmatpush.msra.mxu0 %v724
      %736 = vmatpush.msra.mxu0 %v723
      %737 = vmatpush.msra.mxu0 %v722
      %738 = vmatpush.msra.mxu0 %v721
      %739 = vmatpush.msra.mxu0 %v720
      %740 = vmatpush.msra.mxu0 %v719
      %741 = vmatpush.msra.mxu0 %v718
      %742 = vmatpush.msra.mxu0 %v717
      %743 = vmatpush.msra.mxu0 %v716
      %744 = vmatpush.msra.mxu0 %v715
      %745 = vmatpush.msra.mxu0 %v714
      %746 = vmatmul.f32.gmra.mxu0 %v698
      %v747 = vpop.f32.mrf.mxu0
      %v748 = vadd.f32 0.0, %v747
      %749 = vmatmul.f32.gmra.mxu0 %v699
      %v750 = vpop.f32.mrf.mxu0
      %v751 = vadd.f32 0.0, %v750
      %752 = vmatmul.f32.gmra.mxu0 %v700
      %v753 = vpop.f32.mrf.mxu0
      %v754 = vadd.f32 0.0, %v753
      %755 = vmatmul.f32.gmra.mxu0 %v701
      %v756 = vpop.f32.mrf.mxu0
      %v757 = vadd.f32 0.0, %v756
      %758 = vmatmul.f32.gmra.mxu0 %v702
      %v759 = vpop.f32.mrf.mxu0
      %v760 = vadd.f32 0.0, %v759
      %761 = vmatmul.f32.gmra.mxu0 %v703
      %v762 = vpop.f32.mrf.mxu0
      %v763 = vadd.f32 0.0, %v762
      %764 = vmatmul.f32.gmra.mxu0 %v704
      %v765 = vpop.f32.mrf.mxu0
      %v766 = vadd.f32 0.0, %v765
      %767 = vmatmul.f32.gmra.mxu0 %v705
      %v768 = vpop.f32.mrf.mxu0
      %v769 = vadd.f32 0.0, %v768
      %770 = vmatmul.f32.gmra.mxu0 %v706
      %v771 = vpop.f32.mrf.mxu0
      %v772 = vadd.f32 0.0, %v771
      %773 = vmatmul.f32.gmra.mxu0 %v707
      %v774 = vpop.f32.mrf.mxu0
      %v775 = vadd.f32 0.0, %v774
      %776 = vmatmul.f32.gmra.mxu0 %v708
      %v777 = vpop.f32.mrf.mxu0
      %v778 = vadd.f32 0.0, %v777
      %779 = vmatmul.f32.gmra.mxu0 %v709
      %v780 = vpop.f32.mrf.mxu0
      %v781 = vadd.f32 0.0, %v780
      %782 = vmatmul.f32.gmra.mxu0 %v710
      %v783 = vpop.f32.mrf.mxu0
      %v784 = vadd.f32 0.0, %v783
      %785 = vmatmul.f32.gmra.mxu0 %v711
      %v786 = vpop.f32.mrf.mxu0
      %v787 = vadd.f32 0.0, %v786
      %788 = vmatmul.f32.gmra.mxu0 %v712
      %v789 = vpop.f32.mrf.mxu0
      %v790 = vadd.f32 0.0, %v789
      %791 = vmatmul.f32.gmra.mxu0 %v713
      %v792 = vpop.f32.mrf.mxu0
      %v793 = vadd.f32 0.0, %v792
      %794 = vdwg.mxu0
      %v795 = vld [vmem:[%s3] sm:$0x1]
      %v797 = vperm.slane %v795, 0
      %v799 = vmul.f32 %v748, %v797
      %v800 = vmul.f32 %v751, %v797
      %v801 = vmul.f32 %v754, %v797
      %v802 = vmul.f32 %v757, %v797
      %v803 = vmul.f32 %v760, %v797
      %v804 = vmul.f32 %v763, %v797
      %v805 = vmul.f32 %v766, %v797
      %v806 = vmul.f32 %v769, %v797
      %v807 = vmul.f32 %v772, %v797
      %v808 = vmul.f32 %v775, %v797
      %v809 = vmul.f32 %v778, %v797
      %v810 = vmul.f32 %v781, %v797
      %v811 = vmul.f32 %v784, %v797
      %v812 = vmul.f32 %v787, %v797
      %v813 = vmul.f32 %v790, %v797
      %v814 = vmul.f32 %v793, %v797
      %815 = vadd.xlane.f32.xlu0 %v799
      %v816 = vpop.xlane.xlu0 %815
      %817 = vadd.xlane.f32.xlu0 %v800
      %v818 = vpop.xlane.xlu0 %817
      %819 = vadd.xlane.f32.xlu0 %v801
      %v820 = vpop.xlane.xlu0 %819
      %821 = vadd.xlane.f32.xlu0 %v802
      %v822 = vpop.xlane.xlu0 %821
      %823 = vadd.xlane.f32.xlu0 %v803
      %v824 = vpop.xlane.xlu0 %823
      %825 = vadd.xlane.f32.xlu0 %v804
      %v826 = vpop.xlane.xlu0 %825
      %827 = vadd.xlane.f32.xlu0 %v805
      %v828 = vpop.xlane.xlu0 %827
      %829 = vadd.xlane.f32.xlu0 %v806
      %v830 = vpop.xlane.xlu0 %829
      %831 = vadd.xlane.f32.xlu0 %v807
      %v832 = vpop.xlane.xlu0 %831
      %833 = vadd.xlane.f32.xlu0 %v808
      %v834 = vpop.xlane.xlu0 %833
      %835 = vadd.xlane.f32.xlu0 %v809
      %v836 = vpop.xlane.xlu0 %835
      %837 = vadd.xlane.f32.xlu0 %v810
      %v838 = vpop.xlane.xlu0 %837
      %839 = vadd.xlane.f32.xlu0 %v811
      %v840 = vpop.xlane.xlu0 %839
      %841 = vadd.xlane.f32.xlu0 %v812
      %v842 = vpop.xlane.xlu0 %841
      %843 = vadd.xlane.f32.xlu0 %v813
      %v844 = vpop.xlane.xlu0 %843
      %845 = vadd.xlane.f32.xlu0 %v814
      %v846 = vpop.xlane.xlu0 %845
      %v847 = vld [vmem:[%s4] sm:$0x1]
      %v849 = vperm.slane %v847, 0
      %v851 = vmul.f32 %v748, %v849
      %v852 = vmul.f32 %v751, %v849
      %v853 = vmul.f32 %v754, %v849
      %v854 = vmul.f32 %v757, %v849
      %v855 = vmul.f32 %v760, %v849
      %v856 = vmul.f32 %v763, %v849
      %v857 = vmul.f32 %v766, %v849
      %v858 = vmul.f32 %v769, %v849
      %v859 = vmul.f32 %v772, %v849
      %v860 = vmul.f32 %v775, %v849
      %v861 = vmul.f32 %v778, %v849
      %v862 = vmul.f32 %v781, %v849
      %v863 = vmul.f32 %v784, %v849
      %v864 = vmul.f32 %v787, %v849
      %v865 = vmul.f32 %v790, %v849
      %v866 = vmul.f32 %v793, %v849
      %867 = vadd.xlane.f32.xlu0 %v851
      %v868 = vpop.xlane.xlu0 %867
      %869 = vadd.xlane.f32.xlu0 %v852
      %v870 = vpop.xlane.xlu0 %869
      %871 = vadd.xlane.f32.xlu0 %v853
      %v872 = vpop.xlane.xlu0 %871
      %873 = vadd.xlane.f32.xlu0 %v854
      %v874 = vpop.xlane.xlu0 %873
      %875 = vadd.xlane.f32.xlu0 %v855
      %v876 = vpop.xlane.xlu0 %875
      %877 = vadd.xlane.f32.xlu0 %v856
      %v878 = vpop.xlane.xlu0 %877
      %879 = vadd.xlane.f32.xlu0 %v857
      %v880 = vpop.xlane.xlu0 %879
      %881 = vadd.xlane.f32.xlu0 %v858
      %v882 = vpop.xlane.xlu0 %881
      %883 = vadd.xlane.f32.xlu0 %v859
      %v884 = vpop.xlane.xlu0 %883
      %885 = vadd.xlane.f32.xlu0 %v860
      %v886 = vpop.xlane.xlu0 %885
      %887 = vadd.xlane.f32.xlu0 %v861
      %v888 = vpop.xlane.xlu0 %887
      %889 = vadd.xlane.f32.xlu0 %v862
      %v890 = vpop.xlane.xlu0 %889
      %891 = vadd.xlane.f32.xlu0 %v863
      %v892 = vpop.xlane.xlu0 %891
      %893 = vadd.xlane.f32.xlu0 %v864
      %v894 = vpop.xlane.xlu0 %893
      %895 = vadd.xlane.f32.xlu0 %v865
      %v896 = vpop.xlane.xlu0 %895
      %897 = vadd.xlane.f32.xlu0 %v866
      %v898 = vpop.xlane.xlu0 %897
      %v899 = vpack.c.bf16 %v748, %v748
      %v900 = vpack.c.bf16 %v751, %v751
      %v901 = vpack.c.bf16 %v754, %v754
      %v902 = vpack.c.bf16 %v757, %v757
      %v903 = vpack.c.bf16 %v760, %v760
      %v904 = vpack.c.bf16 %v763, %v763
      %v905 = vpack.c.bf16 %v766, %v766
      %v906 = vpack.c.bf16 %v769, %v769
      %v907 = vpack.c.bf16 %v772, %v772
      %v908 = vpack.c.bf16 %v775, %v775
      %v909 = vpack.c.bf16 %v778, %v778
      %v910 = vpack.c.bf16 %v781, %v781
      %v911 = vpack.c.bf16 %v784, %v784
      %v912 = vpack.c.bf16 %v787, %v787
      %v913 = vpack.c.bf16 %v790, %v790
      %v914 = vpack.c.bf16 %v793, %v793
      %915 = vst [vmem:[%s261] sm:$0xf] %v899
      %916 = vst [vmem:[%s261 + $0x4] sm:$0xf] %v900
      %917 = vst [vmem:[%s261 + $0x8] sm:$0xf] %v901
      %918 = vst [vmem:[%s261 + $0xc] sm:$0xf] %v902
      %919 = vst [vmem:[%s261 + $0x10] sm:$0xf] %v903
      %920 = vst [vmem:[%s261 + $0x14] sm:$0xf] %v904
      %921 = vst [vmem:[%s261 + $0x18] sm:$0xf] %v905
      %922 = vst [vmem:[%s261 + $0x1c] sm:$0xf] %v906
      %923 = vst [vmem:[%s261 + $0x20] sm:$0xf] %v907
      %924 = vst [vmem:[%s261 + $0x24] sm:$0xf] %v908
      %925 = vst [vmem:[%s261 + $0x28] sm:$0xf] %v909
      %926 = vst [vmem:[%s261 + $0x2c] sm:$0xf] %v910
      %927 = vst [vmem:[%s261 + $0x30] sm:$0xf] %v911
      %928 = vst [vmem:[%s261 + $0x34] sm:$0xf] %v912
      %929 = vst [vmem:[%s261 + $0x38] sm:$0xf] %v913
      %930 = vst [vmem:[%s261 + $0x3c] sm:$0xf] %v914
      %v931 = vlaneseq
      %v932 = vand.u32 %v931, 127
      %vm933 = vcmp.eq.s32.totalorder %v932, 0
      %vm934 = vcmp.eq.s32.totalorder %v932, 1
      %vm935 = vcmp.eq.s32.totalorder %v932, 2
      %v936 = vsel %vm935, %v868, 0.0
      %v937 = vsel %vm935, %v870, 0.0
      %v938 = vsel %vm935, %v872, 0.0
      %v939 = vsel %vm935, %v874, 0.0
      %v940 = vsel %vm935, %v876, 0.0
      %v941 = vsel %vm935, %v878, 0.0
      %v942 = vsel %vm935, %v880, 0.0
      %v943 = vsel %vm935, %v882, 0.0
      %v944 = vsel %vm935, %v884, 0.0
      %v945 = vsel %vm935, %v886, 0.0
      %v946 = vsel %vm935, %v888, 0.0
      %v947 = vsel %vm935, %v890, 0.0
      %v948 = vsel %vm935, %v892, 0.0
      %v949 = vsel %vm935, %v894, 0.0
      %v950 = vsel %vm935, %v896, 0.0
      %v951 = vsel %vm935, %v898, 0.0
      %v952 = vsel %vm934, %v816, %v936
      %v953 = vsel %vm934, %v818, %v937
      %v954 = vsel %vm934, %v820, %v938
      %v955 = vsel %vm934, %v822, %v939
      %v956 = vsel %vm934, %v824, %v940
      %v957 = vsel %vm934, %v826, %v941
      %v958 = vsel %vm934, %v828, %v942
      %v959 = vsel %vm934, %v830, %v943
      %v960 = vsel %vm934, %v832, %v944
      %v961 = vsel %vm934, %v834, %v945
      %v962 = vsel %vm934, %v836, %v946
      %v963 = vsel %vm934, %v838, %v947
      %v964 = vsel %vm934, %v840, %v948
      %v965 = vsel %vm934, %v842, %v949
      %v966 = vsel %vm934, %v844, %v950
      %v967 = vsel %vm934, %v846, %v951
      %v968 = vsel %vm933, %v378, %v952
      %v969 = vsel %vm933, %v379, %v953
      %v970 = vsel %vm933, %v380, %v954
      %v971 = vsel %vm933, %v381, %v955
      %v972 = vsel %vm933, %v382, %v956
      %v973 = vsel %vm933, %v383, %v957
      %v974 = vsel %vm933, %v384, %v958
      %v975 = vsel %vm933, %v385, %v959
      %v976 = vsel %vm933, %v386, %v960
      %v977 = vsel %vm933, %v387, %v961
      %v978 = vsel %vm933, %v388, %v962
      %v979 = vsel %vm933, %v389, %v963
      %v980 = vsel %vm933, %v390, %v964
      %v981 = vsel %vm933, %v391, %v965
      %v982 = vsel %vm933, %v392, %v966
      %v983 = vsel %vm933, %v393, %v967
      %984 = vst [vmem:[%s267] sm:$0xff] %v968
      %985 = vst [vmem:[%s267 + $0x8] sm:$0xff] %v969
      %986 = vst [vmem:[%s267 + $0x10] sm:$0xff] %v970
      %987 = vst [vmem:[%s267 + $0x18] sm:$0xff] %v971
      %988 = vst [vmem:[%s267 + $0x20] sm:$0xff] %v972
      %989 = vst [vmem:[%s267 + $0x28] sm:$0xff] %v973
      %990 = vst [vmem:[%s267 + $0x30] sm:$0xff] %v974
      %991 = vst [vmem:[%s267 + $0x38] sm:$0xff] %v975
      %992 = vst [vmem:[%s267 + $0x40] sm:$0xff] %v976
      %993 = vst [vmem:[%s267 + $0x48] sm:$0xff] %v977
      %994 = vst [vmem:[%s267 + $0x50] sm:$0xff] %v978
      %995 = vst [vmem:[%s267 + $0x58] sm:$0xff] %v979
      %996 = vst [vmem:[%s267 + $0x60] sm:$0xff] %v980
      %997 = vst [vmem:[%s267 + $0x68] sm:$0xff] %v981
      %998 = vst [vmem:[%s267 + $0x70] sm:$0xff] %v982
      %999 = vst [vmem:[%s267 + $0x78] sm:$0xff] %v983
      %s1000 = smul.u32 16, %s18
      %p1001 = scmp.lt.s32.totalorder %s1000, 31
      %s1002 = scalar_select %p1001, %s1000, 31
      %s1003 = smul.addr %s1002, 4
      %s1004 = scalar_lea.vmem %s5, %s1003
      %s1005 = smul.u32 16, %s18
      %p1006 = scmp.lt.s32.totalorder %s1005, 31
      %s1007 = scalar_select %p1006, %s1005, 31
      %s1008 = smul.addr %s1007, 8
      %s1009 = scalar_lea.vmem %s6, %s1008
      // Predicated region
      $region41: #{hardgam_forward.4} parent=39 // pred_check
        %p1010 = pneg %p146
      $region42: #{hardgam_forward.4} parent=39 // pred_check_branch
        %1012 = sbr.rel (%p1010) target = $region44
      $region43: #{hardgam_forward.4} parent=39 // pred_region
        %s1013 = smul.u32 16, %s18
      $region44: #{hardgam_forward.4} parent=39 // pred_fallthru
        _
      // Predicated region
      $region45: #{hardgam_forward.4} parent=39 // pred_check
        %p1014 = pneg %p172
      $region46: #{hardgam_forward.4} parent=39 // pred_check_branch
        %1016 = sbr.rel (%p1014) target = $region48
      $region47: #{hardgam_forward.4} parent=39 // pred_region
        %s1017 = smul.u32 16, %s18
      $region48: #{hardgam_forward.4} parent=39 // pred_fallthru
        _
    $region40: #{hardgam_forward.4} parent=5 // pred_fallthru
      _
    %p1018 = scmp.le.s32.totalorder 2, %s13
    // Predicated region
    $region49: #{hardgam_forward.4} parent=5 // pred_check
      %p1019 = pneg %p1018
    $region50: #{hardgam_forward.4} parent=5 // pred_check_branch
      %1021 = sbr.rel (%p1019) target = $region52
    $region51: #{hardgam_forward.4} parent=5 // pred_region
      %s1022 = ssub.s32 %s13, 2
      // Predicated region
      $region53: #{hardgam_forward.4} parent=51 // pred_check
        %p1023 = pneg %p152
      $region54: #{hardgam_forward.4} parent=51 // pred_check_branch
        %1025 = sbr.rel (%p1023) target = $region56
      $region55: #{hardgam_forward.4} parent=51 // pred_region
        %s1026 = smul.u32 16, %s19
        %p1027 = scmp.lt.s32.totalorder %s1026, 31
        %s1028 = scalar_select %p1027, %s1026, 31
        %s1029 = smul.addr %s1028, 4
        %s1030 = scalar_lea.vmem %s5, %s1029
      $region56: #{hardgam_forward.4} parent=51 // pred_fallthru
        _
      // Predicated region
      $region57: #{hardgam_forward.4} parent=51 // pred_check
        %p1031 = pneg %p178
      $region58: #{hardgam_forward.4} parent=51 // pred_check_branch
        %1033 = sbr.rel (%p1031) target = $region60
      $region59: #{hardgam_forward.4} parent=51 // pred_region
        %s1034 = smul.u32 16, %s19
        %p1035 = scmp.lt.s32.totalorder %s1034, 31
        %s1036 = scalar_select %p1035, %s1034, 31
        %s1037 = smul.addr %s1036, 8
        %s1038 = scalar_lea.vmem %s6, %s1037
      $region60: #{hardgam_forward.4} parent=51 // pred_fallthru
        _
    $region52: #{hardgam_forward.4} parent=5 // pred_fallthru
      _
  $region6: #{hardgam_forward.4} parent=0 // loop_footer
    %s17 = sadd.s32 1, %s13
  $region7: #{hardgam_forward.4} parent=0 // loop_footer_branch
    %12 = sbr.rel target = $region3
  $region8: #{hardgam_forward.4} parent=0 // loop_exit
    _

// kernel: hardgam_forward.7
$region0: #{hardgam_forward.7}
  #allocation0 [shape = 'u32[]', space=smem, size = 0x4, offset = 0x4, fixed_abs, tag = 'smem constant byte address 0x4 - core index']
  #allocation1 [shape = 'u32[72,128]{1,0:T(1,128)}', space=vmem, size = 0x9000, scoped, tag = 'internal scratch']
  %s0 = inlined_call_operand.vmem [shape: s8[256,256], index: 0, kind: input, shape index: {}]
  %s1 = inlined_call_operand.vmem [shape: bf16[256,128], index: 1, kind: input, shape index: {}]
  %s2 = inlined_call_operand.vmem [shape: f32[256,128], index: 2, kind: input, shape index: {}]
  %s3 = inlined_call_operand.vmem [shape: f32[128,128], index: 3, kind: input, shape index: {}]
  %s4 = inlined_call_operand.vmem [shape: f32[1,128], index: 4, kind: input, shape index: {}]
  %s5 = inlined_call_operand.vmem [shape: f32[256,128], index: 5, kind: output, shape index: {}]
  %s6 = sld [smem:[#allocation0]]
  $region53: #{hardgam_forward.7} parent=0
    _
  %s8 = ssub.s32 1, %s6
  %s9 = scalar_select 0, %s8, %s6
  loop: start=0, step=1, limit=4
  $region2: #{hardgam_forward.7} parent=0 // loop_pre_header
    _
  $region3: #{hardgam_forward.7} parent=0 // loop_header
    %s11 = sphi 0, %s15
    %p12 = scmp.ge.s32.totalorder %s11, 4
    %s21 = sphi 0, %s23
    %s24 = sphi 0, %s21
    %s25 = sphi 0, %s24
    %s41 = sphi 0, %s25
    %s45 = sphi 0, %s45
    %s47 = sphi 0, %s45
    %s48 = sphi 0, %s47
    %s62 = sphi 0, %s48
    %s68 = sphi 0, %s70
    %s71 = sphi 0, %s68
    %s72 = sphi 0, %s71
    %s88 = sphi 0, %s72
    %s92 = sphi 0, %s92
    %s94 = sphi 0, %s92
    %s95 = sphi 0, %s94
    %s109 = sphi 0, %s95
    %s113 = sphi 0, %s113
    %s115 = sphi 0, %s113
    %s116 = sphi 0, %s115
    %s130 = sphi 0, %s116
    %s136 = sphi 0, %s138
    %s139 = sphi 0, %s136
    %s140 = sphi 0, %s139
    %s156 = sphi 0, %s140
  $region4: #{hardgam_forward.7} parent=0 // loop_header_branch
    %14 = sbr.rel (%p12) target = $region8
  $region5: #{hardgam_forward.7} parent=0 // loop_body
    %s16 = ssub.s32 %s11, 1
    %s17 = ssub.s32 %s11, 2
    %s18 = sadd.s32 %s11, 1
    %s19 = ssub.s32 %s11, %s18
    %p20 = scmp.eq.s32.totalorder %s19, 0
    %s22 = sadd.s32 %s21, 1
    %s23 = scalar_select %p20, %s21, %s22
    %p26 = pneg %p20
    %p27 = scmp.eq.s32.totalorder %s11, 1
    %p28 = por %p26, %p27
    %p29 = scmp.ne.s32.totalorder %s21, %s24
    %p30 = scmp.eq.s32.totalorder %s11, 0
    %p31 = por %p29, %p30
    %p32 = scmp.ne.s32.totalorder %s21, %s24
    %p33 = scmp.eq.s32.totalorder %s16, 1
    %p34 = por %p32, %p33
    %p35 = scmp.ne.s32.totalorder %s24, %s25
    %p36 = scmp.eq.s32.totalorder %s16, 0
    %p37 = por %p35, %p36
    %p38 = scmp.ne.s32.totalorder %s24, %s25
    %p39 = scmp.eq.s32.totalorder %s17, 1
    %p40 = por %p38, %p39
    %p42 = scmp.ne.s32.totalorder %s25, %s41
    %p43 = scmp.eq.s32.totalorder %s17, 0
    %p44 = por %p42, %p43
    %s46 = sadd.s32 %s45, 1
    %p49 = scmp.eq.s32.totalorder %s11, 1
    %p50 = scmp.ne.s32.totalorder %s45, %s47
    %p51 = scmp.eq.s32.totalorder %s11, 0
    %p52 = por %p50, %p51
    %p53 = scmp.ne.s32.totalorder %s45, %s47
    %p54 = scmp.eq.s32.totalorder %s16, 1
    %p55 = por %p53, %p54
    %p56 = scmp.ne.s32.totalorder %s47, %s48
    %p57 = scmp.eq.s32.totalorder %s16, 0
    %p58 = por %p56, %p57
    %p59 = scmp.ne.s32.totalorder %s47, %s48
    %p60 = scmp.eq.s32.totalorder %s17, 1
    %p61 = por %p59, %p60
    %p63 = scmp.ne.s32.totalorder %s48, %s62
    %p64 = scmp.eq.s32.totalorder %s17, 0
    %p65 = por %p63, %p64
    %s66 = ssub.s32 %s11, %s18
    %p67 = scmp.eq.s32.totalorder %s66, 0
    %s69 = sadd.s32 %s68, 1
    %s70 = scalar_select %p67, %s68, %s69
    %p73 = pneg %p67
    %p74 = scmp.eq.s32.totalorder %s11, 1
    %p75 = por %p73, %p74
    %p76 = scmp.ne.s32.totalorder %s68, %s71
    %p77 = scmp.eq.s32.totalorder %s11, 0
    %p78 = por %p76, %p77
    %p79 = scmp.ne.s32.totalorder %s68, %s71
    %p80 = scmp.eq.s32.totalorder %s16, 1
    %p81 = por %p79, %p80
    %p82 = scmp.ne.s32.totalorder %s71, %s72
    %p83 = scmp.eq.s32.totalorder %s16, 0
    %p84 = por %p82, %p83
    %p85 = scmp.ne.s32.totalorder %s71, %s72
    %p86 = scmp.eq.s32.totalorder %s17, 1
    %p87 = por %p85, %p86
    %p89 = scmp.ne.s32.totalorder %s72, %s88
    %p90 = scmp.eq.s32.totalorder %s17, 0
    %p91 = por %p89, %p90
    %s93 = sadd.s32 %s92, 1
    %p96 = scmp.eq.s32.totalorder %s11, 1
    %p97 = scmp.ne.s32.totalorder %s92, %s94
    %p98 = scmp.eq.s32.totalorder %s11, 0
    %p99 = por %p97, %p98
    %p100 = scmp.ne.s32.totalorder %s92, %s94
    %p101 = scmp.eq.s32.totalorder %s16, 1
    %p102 = por %p100, %p101
    %p103 = scmp.ne.s32.totalorder %s94, %s95
    %p104 = scmp.eq.s32.totalorder %s16, 0
    %p105 = por %p103, %p104
    %p106 = scmp.ne.s32.totalorder %s94, %s95
    %p107 = scmp.eq.s32.totalorder %s17, 1
    %p108 = por %p106, %p107
    %p110 = scmp.ne.s32.totalorder %s95, %s109
    %p111 = scmp.eq.s32.totalorder %s17, 0
    %p112 = por %p110, %p111
    %s114 = sadd.s32 %s113, 1
    %p117 = scmp.eq.s32.totalorder %s11, 1
    %p118 = scmp.ne.s32.totalorder %s113, %s115
    %p119 = scmp.eq.s32.totalorder %s11, 0
    %p120 = por %p118, %p119
    %p121 = scmp.ne.s32.totalorder %s113, %s115
    %p122 = scmp.eq.s32.totalorder %s16, 1
    %p123 = por %p121, %p122
    %p124 = scmp.ne.s32.totalorder %s115, %s116
    %p125 = scmp.eq.s32.totalorder %s16, 0
    %p126 = por %p124, %p125
    %p127 = scmp.ne.s32.totalorder %s115, %s116
    %p128 = scmp.eq.s32.totalorder %s17, 1
    %p129 = por %p127, %p128
    %p131 = scmp.ne.s32.totalorder %s116, %s130
    %p132 = scmp.eq.s32.totalorder %s17, 0
    %p133 = por %p131, %p132
    %s134 = ssub.s32 %s11, %s18
    %p135 = scmp.eq.s32.totalorder %s134, 0
    %s137 = sadd.s32 %s136, 1
    %s138 = scalar_select %p135, %s136, %s137
    %p141 = pneg %p135
    %p142 = scmp.eq.s32.totalorder %s11, 1
    %p143 = por %p141, %p142
    %p144 = scmp.ne.s32.totalorder %s136, %s139
    %p145 = scmp.eq.s32.totalorder %s11, 0
    %p146 = por %p144, %p145
    %p147 = scmp.ne.s32.totalorder %s136, %s139
    %p148 = scmp.eq.s32.totalorder %s16, 1
    %p149 = por %p147, %p148
    %p150 = scmp.ne.s32.totalorder %s139, %s140
    %p151 = scmp.eq.s32.totalorder %s16, 0
    %p152 = por %p150, %p151
    %p153 = scmp.ne.s32.totalorder %s139, %s140
    %p154 = scmp.eq.s32.totalorder %s17, 1
    %p155 = por %p153, %p154
    %p157 = scmp.ne.s32.totalorder %s140, %s156
    %p158 = scmp.eq.s32.totalorder %s17, 0
    %p159 = por %p157, %p158
    %p160 = scmp.le.s32.totalorder 1, %s11
    %p161 = scmp.lt.s32.totalorder %s11, 3
    %p162 = pnand %p160, %p161
    %p163 = pneg %p162
    // Predicated region
    $region9: #{hardgam_forward.7} parent=5 // pred_check
      _
    $region10: #{hardgam_forward.7} parent=5 // pred_check_branch
      %165 = sbr.rel (%p162) target = $region12
    $region11: #{hardgam_forward.7} parent=5 // pred_region
      %s166 = ssub.s32 %s11, 1
      // Predicated region
      $region13: #{hardgam_forward.7} parent=11 // pred_check
        %p167 = pneg %p58
      $region14: #{hardgam_forward.7} parent=11 // pred_check_branch
        %169 = sbr.rel (%p167) target = $region16
      $region15: #{hardgam_forward.7} parent=11 // pred_region
        _
      $region16: #{hardgam_forward.7} parent=11 // pred_fallthru
        _
      // Predicated region
      $region17: #{hardgam_forward.7} parent=11 // pred_check
        %p170 = pneg %p105
      $region18: #{hardgam_forward.7} parent=11 // pred_check_branch
        %172 = sbr.rel (%p170) target = $region20
      $region19: #{hardgam_forward.7} parent=11 // pred_region
        _
      $region20: #{hardgam_forward.7} parent=11 // pred_fallthru
        _
      // Predicated region
      $region21: #{hardgam_forward.7} parent=11 // pred_check
        %p173 = pneg %p126
      $region22: #{hardgam_forward.7} parent=11 // pred_check_branch
        %175 = sbr.rel (%p173) target = $region24
      $region23: #{hardgam_forward.7} parent=11 // pred_region
        _
      $region24: #{hardgam_forward.7} parent=11 // pred_fallthru
        _
    $region12: #{hardgam_forward.7} parent=5 // pred_fallthru
      _
    %p176 = scmp.lt.s32.totalorder %s11, 2
    // Predicated region
    $region25: #{hardgam_forward.7} parent=5 // pred_check
      %p177 = pneg %p176
    $region26: #{hardgam_forward.7} parent=5 // pred_check_branch
      %179 = sbr.rel (%p177) target = $region28
    $region27: #{hardgam_forward.7} parent=5 // pred_region
      // Predicated region
      $region29: #{hardgam_forward.7} parent=27 // pred_check
        %p180 = pneg %p31
      $region30: #{hardgam_forward.7} parent=27 // pred_check_branch
        %182 = sbr.rel (%p180) target = $region32
      $region31: #{hardgam_forward.7} parent=27 // pred_region
        %s183 = smul.u32 4, %s11
        %p184 = scmp.lt.s32.totalorder %s183, 7
        %s185 = scalar_select %p184, %s183, 7
        %s186 = smul.addr %s185, 2
        %s187 = smul.addr %s186, 8
        %s188 = scalar_lea.vmem %s0, %s187
        %s189 = smul.u32 4, %s11
      $region32: #{hardgam_forward.7} parent=27 // pred_fallthru
        _
      // Predicated region
      $region33: #{hardgam_forward.7} parent=27 // pred_check
        %p190 = pneg %p78
      $region34: #{hardgam_forward.7} parent=27 // pred_check_branch
        %192 = sbr.rel (%p190) target = $region36
      $region35: #{hardgam_forward.7} parent=27 // pred_region
        %s193 = smul.u32 16, %s11
        %p194 = scmp.lt.s32.totalorder %s193, 31
        %s195 = scalar_select %p194, %s193, 31
        %s196 = smul.addr %s195, 8
        %s197 = scalar_lea.vmem %s2, %s196
        %s198 = smul.u32 16, %s11
      $region36: #{hardgam_forward.7} parent=27 // pred_fallthru
        _
    $region28: #{hardgam_forward.7} parent=5 // pred_fallthru
      _
    %p199 = scmp.le.s32.totalorder 1, %s11
    %p200 = scmp.lt.s32.totalorder %s11, 3
    %p201 = pnand %p199, %p200
    %p202 = pneg %p201
    // Predicated region
    $region37: #{hardgam_forward.7} parent=5 // pred_check
      _
    $region38: #{hardgam_forward.7} parent=5 // pred_check_branch
      %204 = sbr.rel (%p201) target = $region40
    $region39: #{hardgam_forward.7} parent=5 // pred_region
      %s205 = ssub.s32 %s11, 1
      %s206 = smul.u32 4, %s16
      %p207 = scmp.lt.s32.totalorder %s206, 7
      %s208 = scalar_select %p207, %s206, 7
      %s209 = smul.addr %s208, 2
      %s210 = smul.addr %s209, 8
      %s211 = scalar_lea.vmem %s0, %s210
      %p212 = pneg %p37
      %p213 = pneg %p34
      %p214 = pneg %p58
      %p215 = pneg %p55
      %s216 = smul.u32 16, %s16
      %p217 = scmp.lt.s32.totalorder %s216, 31
      %s218 = scalar_select %p217, %s216, 31
      %s219 = smul.addr %s218, 8
      %s220 = scalar_lea.vmem %s2, %s219
      %p221 = pneg %p84
      %p222 = pneg %p81
      %p223 = pneg %p105
      %p224 = pneg %p102
      %p225 = pneg %p126
      %p226 = pneg %p123
      %p227 = pneg %p152
      %p228 = pneg %p149
      %s229 = smul.u32 16, %s16
      %p230 = scmp.lt.s32.totalorder %s229, 31
      %s231 = scalar_select %p230, %s229, 31
      %s232 = smul.addr %s231, 8
      %s233 = scalar_lea.vmem %s5, %s232
      %s234 = smul.u32 4, %s16
      %p235 = scmp.lt.s32.totalorder %s234, 7
      %s236 = scalar_select %p235, %s234, 7
      %s237 = smul.addr %s236, 2
      %s238 = smul.addr %s237, 8
      %s239 = scalar_lea.vmem %s0, %s238
      %s240 = smul.u32 4, %s16
      %s241 = smul.u32 16, %s16
      %p242 = scmp.lt.s32.totalorder %s241, 31
      %s243 = scalar_select %p242, %s241, 31
      %s244 = smul.addr %s243, 8
      %s245 = scalar_lea.vmem %s2, %s244
      %s246 = smul.u32 16, %s16
      %s247 = smul.u32 16, %s16
      %p248 = scmp.lt.s32.totalorder %s247, 31
      %s249 = scalar_select %p248, %s247, 31
      %s250 = smul.addr %s249, 8
      %s251 = scalar_lea.vmem %s5, %s250
      %s252 = smul.u32 16, %s16
      %v253 = vld [vmem:[%s239] sm:$0xff]
      %v254 = vld [vmem:[%s239 + $0x8] sm:$0xff]
      %v255 = vld [vmem:[%s239 + $0x10] sm:$0xff]
      %v256 = vld [vmem:[%s239 + $0x18] sm:$0xff]
      %v257 = vld [vmem:[%s239 + $0x20] sm:$0xff]
      %v258 = vld [vmem:[%s239 + $0x28] sm:$0xff]
      %v259 = vld [vmem:[%s239 + $0x30] sm:$0xff]
      %v260 = vld [vmem:[%s239 + $0x38] sm:$0xff]
      %v261 = vunpack.c.0.s8 %v253
      %v262 = vunpack.c.0.s8 %v254
      %v263 = vunpack.c.1.s8 %v253
      %v264 = vunpack.c.1.s8 %v254
      %v265 = vunpack.c.2.s8 %v253
      %v266 = vunpack.c.2.s8 %v254
      %v267 = vunpack.c.3.s8 %v253
      %v268 = vunpack.c.3.s8 %v254
      %v269 = vunpack.c.0.s8 %v255
      %v270 = vunpack.c.0.s8 %v256
      %v271 = vunpack.c.1.s8 %v255
      %v272 = vunpack.c.1.s8 %v256
      %v273 = vunpack.c.2.s8 %v255
      %v274 = vunpack.c.2.s8 %v256
      %v275 = vunpack.c.3.s8 %v255
      %v276 = vunpack.c.3.s8 %v256
      %v277 = vunpack.c.0.s8 %v257
      %v278 = vunpack.c.0.s8 %v258
      %v279 = vunpack.c.1.s8 %v257
      %v280 = vunpack.c.1.s8 %v258
      %v281 = vunpack.c.2.s8 %v257
      %v282 = vunpack.c.2.s8 %v258
      %v283 = vunpack.c.3.s8 %v257
      %v284 = vunpack.c.3.s8 %v258
      %v285 = vunpack.c.0.s8 %v259
      %v286 = vunpack.c.0.s8 %v260
      %v287 = vunpack.c.1.s8 %v259
      %v288 = vunpack.c.1.s8 %v260
      %v289 = vunpack.c.2.s8 %v259
      %v290 = vunpack.c.2.s8 %v260
      %v291 = vunpack.c.3.s8 %v259
      %v292 = vunpack.c.3.s8 %v260
      %v293 = vcvt.s32.f32 %v261
      %v294 = vcvt.s32.f32 %v262
      %v295 = vcvt.s32.f32 %v263
      %v296 = vcvt.s32.f32 %v264
      %v297 = vcvt.s32.f32 %v265
      %v298 = vcvt.s32.f32 %v266
      %v299 = vcvt.s32.f32 %v267
      %v300 = vcvt.s32.f32 %v268
      %v301 = vcvt.s32.f32 %v269
      %v302 = vcvt.s32.f32 %v270
      %v303 = vcvt.s32.f32 %v271
      %v304 = vcvt.s32.f32 %v272
      %v305 = vcvt.s32.f32 %v273
      %v306 = vcvt.s32.f32 %v274
      %v307 = vcvt.s32.f32 %v275
      %v308 = vcvt.s32.f32 %v276
      %v309 = vcvt.s32.f32 %v277
      %v310 = vcvt.s32.f32 %v278
      %v311 = vcvt.s32.f32 %v279
      %v312 = vcvt.s32.f32 %v280
      %v313 = vcvt.s32.f32 %v281
      %v314 = vcvt.s32.f32 %v282
      %v315 = vcvt.s32.f32 %v283
      %v316 = vcvt.s32.f32 %v284
      %v317 = vcvt.s32.f32 %v285
      %v318 = vcvt.s32.f32 %v286
      %v319 = vcvt.s32.f32 %v287
      %v320 = vcvt.s32.f32 %v288
      %v321 = vcvt.s32.f32 %v289
      %v322 = vcvt.s32.f32 %v290
      %v323 = vcvt.s32.f32 %v291
      %v324 = vcvt.s32.f32 %v292
      %v325 = vadd.f32 %v293, %v294
      %326 = vadd.xlane.f32.xlu0 %v325
      %v327 = vpop.xlane.xlu0 %326
      %v328 = vadd.f32 %v295, %v296
      %329 = vadd.xlane.f32.xlu0 %v328
      %v330 = vpop.xlane.xlu0 %329
      %v331 = vadd.f32 %v297, %v298
      %332 = vadd.xlane.f32.xlu0 %v331
      %v333 = vpop.xlane.xlu0 %332
      %v334 = vadd.f32 %v299, %v300
      %335 = vadd.xlane.f32.xlu0 %v334
      %v336 = vpop.xlane.xlu0 %335
      %v337 = vadd.f32 %v301, %v302
      %338 = vadd.xlane.f32.xlu0 %v337
      %v339 = vpop.xlane.xlu0 %338
      %v340 = vadd.f32 %v303, %v304
      %341 = vadd.xlane.f32.xlu0 %v340
      %v342 = vpop.xlane.xlu0 %341
      %v343 = vadd.f32 %v305, %v306
      %344 = vadd.xlane.f32.xlu0 %v343
      %v345 = vpop.xlane.xlu0 %344
      %v346 = vadd.f32 %v307, %v308
      %347 = vadd.xlane.f32.xlu0 %v346
      %v348 = vpop.xlane.xlu0 %347
      %v349 = vadd.f32 %v309, %v310
      %350 = vadd.xlane.f32.xlu0 %v349
      %v351 = vpop.xlane.xlu0 %350
      %v352 = vadd.f32 %v311, %v312
      %353 = vadd.xlane.f32.xlu0 %v352
      %v354 = vpop.xlane.xlu0 %353
      %v355 = vadd.f32 %v313, %v314
      %356 = vadd.xlane.f32.xlu0 %v355
      %v357 = vpop.xlane.xlu0 %356
      %v358 = vadd.f32 %v315, %v316
      %359 = vadd.xlane.f32.xlu0 %v358
      %v360 = vpop.xlane.xlu0 %359
      %v361 = vadd.f32 %v317, %v318
      %362 = vadd.xlane.f32.xlu0 %v361
      %v363 = vpop.xlane.xlu0 %362
      %v364 = vadd.f32 %v319, %v320
      %365 = vadd.xlane.f32.xlu0 %v364
      %v366 = vpop.xlane.xlu0 %365
      %v367 = vadd.f32 %v321, %v322
      %368 = vadd.xlane.f32.xlu0 %v367
      %v369 = vpop.xlane.xlu0 %368
      %v370 = vadd.f32 %v323, %v324
      %371 = vadd.xlane.f32.xlu0 %v370
      %v372 = vpop.xlane.xlu0 %371
      %v373 = vmax.f32 %v327, 1.0
      %v374 = vmax.f32 %v330, 1.0
      %v375 = vmax.f32 %v333, 1.0
      %v376 = vmax.f32 %v336, 1.0
      %v377 = vmax.f32 %v339, 1.0
      %v378 = vmax.f32 %v342, 1.0
      %v379 = vmax.f32 %v345, 1.0
      %v380 = vmax.f32 %v348, 1.0
      %v381 = vmax.f32 %v351, 1.0
      %v382 = vmax.f32 %v354, 1.0
      %v383 = vmax.f32 %v357, 1.0
      %v384 = vmax.f32 %v360, 1.0
      %v385 = vmax.f32 %v363, 1.0
      %v386 = vmax.f32 %v366, 1.0
      %v387 = vmax.f32 %v369, 1.0
      %v388 = vmax.f32 %v372, 1.0
      %v389 = vrsqrt.pop %v373
      %v390 = vmul.f32 %v389, %v373
      %v391 = vmul.f32 %v390, %v389
      %v392 = vmul.f32 0.5, %v391
      %v393 = vsub.f32 1.5, %v392
      %v394 = vmul.f32 %v389, %v393
      %vm395 = vweird.f32 %v373
      %vm396 = vweird.f32 %v389
      %vm397 = vmor %vm395, %vm396
      %v398 = vsel %vm397, %v389, %v394
      %v399 = vrsqrt.pop %v374
      %v400 = vmul.f32 %v399, %v374
      %v401 = vmul.f32 %v400, %v399
      %v402 = vmul.f32 0.5, %v401
      %v403 = vsub.f32 1.5, %v402
      %v404 = vmul.f32 %v399, %v403
      %vm405 = vweird.f32 %v374
      %vm406 = vweird.f32 %v399
      %vm407 = vmor %vm405, %vm406
      %v408 = vsel %vm407, %v399, %v404
      %v409 = vrsqrt.pop %v375
      %v410 = vmul.f32 %v409, %v375
      %v411 = vmul.f32 %v410, %v409
      %v412 = vmul.f32 0.5, %v411
      %v413 = vsub.f32 1.5, %v412
      %v414 = vmul.f32 %v409, %v413
      %vm415 = vweird.f32 %v375
      %vm416 = vweird.f32 %v409
      %vm417 = vmor %vm415, %vm416
      %v418 = vsel %vm417, %v409, %v414
      %v419 = vrsqrt.pop %v376
      %v420 = vmul.f32 %v419, %v376
      %v421 = vmul.f32 %v420, %v419
      %v422 = vmul.f32 0.5, %v421
      %v423 = vsub.f32 1.5, %v422
      %v424 = vmul.f32 %v419, %v423
      %vm425 = vweird.f32 %v376
      %vm426 = vweird.f32 %v419
      %vm427 = vmor %vm425, %vm426
      %v428 = vsel %vm427, %v419, %v424
      %v429 = vrsqrt.pop %v377
      %v430 = vmul.f32 %v429, %v377
      %v431 = vmul.f32 %v430, %v429
      %v432 = vmul.f32 0.5, %v431
      %v433 = vsub.f32 1.5, %v432
      %v434 = vmul.f32 %v429, %v433
      %vm435 = vweird.f32 %v377
      %vm436 = vweird.f32 %v429
      %vm437 = vmor %vm435, %vm436
      %v438 = vsel %vm437, %v429, %v434
      %v439 = vrsqrt.pop %v378
      %v440 = vmul.f32 %v439, %v378
      %v441 = vmul.f32 %v440, %v439
      %v442 = vmul.f32 0.5, %v441
      %v443 = vsub.f32 1.5, %v442
      %v444 = vmul.f32 %v439, %v443
      %vm445 = vweird.f32 %v378
      %vm446 = vweird.f32 %v439
      %vm447 = vmor %vm445, %vm446
      %v448 = vsel %vm447, %v439, %v444
      %v449 = vrsqrt.pop %v379
      %v450 = vmul.f32 %v449, %v379
      %v451 = vmul.f32 %v450, %v449
      %v452 = vmul.f32 0.5, %v451
      %v453 = vsub.f32 1.5, %v452
      %v454 = vmul.f32 %v449, %v453
      %vm455 = vweird.f32 %v379
      %vm456 = vweird.f32 %v449
      %vm457 = vmor %vm455, %vm456
      %v458 = vsel %vm457, %v449, %v454
      %v459 = vrsqrt.pop %v380
      %v460 = vmul.f32 %v459, %v380
      %v461 = vmul.f32 %v460, %v459
      %v462 = vmul.f32 0.5, %v461
      %v463 = vsub.f32 1.5, %v462
      %v464 = vmul.f32 %v459, %v463
      %vm465 = vweird.f32 %v380
      %vm466 = vweird.f32 %v459
      %vm467 = vmor %vm465, %vm466
      %v468 = vsel %vm467, %v459, %v464
      %v469 = vrsqrt.pop %v381
      %v470 = vmul.f32 %v469, %v381
      %v471 = vmul.f32 %v470, %v469
      %v472 = vmul.f32 0.5, %v471
      %v473 = vsub.f32 1.5, %v472
      %v474 = vmul.f32 %v469, %v473
      %vm475 = vweird.f32 %v381
      %vm476 = vweird.f32 %v469
      %vm477 = vmor %vm475, %vm476
      %v478 = vsel %vm477, %v469, %v474
      %v479 = vrsqrt.pop %v382
      %v480 = vmul.f32 %v479, %v382
      %v481 = vmul.f32 %v480, %v479
      %v482 = vmul.f32 0.5, %v481
      %v483 = vsub.f32 1.5, %v482
      %v484 = vmul.f32 %v479, %v483
      %vm485 = vweird.f32 %v382
      %vm486 = vweird.f32 %v479
      %vm487 = vmor %vm485, %vm486
      %v488 = vsel %vm487, %v479, %v484
      %v489 = vrsqrt.pop %v383
      %v490 = vmul.f32 %v489, %v383
      %v491 = vmul.f32 %v490, %v489
      %v492 = vmul.f32 0.5, %v491
      %v493 = vsub.f32 1.5, %v492
      %v494 = vmul.f32 %v489, %v493
      %vm495 = vweird.f32 %v383
      %vm496 = vweird.f32 %v489
      %vm497 = vmor %vm495, %vm496
      %v498 = vsel %vm497, %v489, %v494
      %v499 = vrsqrt.pop %v384
      %v500 = vmul.f32 %v499, %v384
      %v501 = vmul.f32 %v500, %v499
      %v502 = vmul.f32 0.5, %v501
      %v503 = vsub.f32 1.5, %v502
      %v504 = vmul.f32 %v499, %v503
      %vm505 = vweird.f32 %v384
      %vm506 = vweird.f32 %v499
      %vm507 = vmor %vm505, %vm506
      %v508 = vsel %vm507, %v499, %v504
      %v509 = vrsqrt.pop %v385
      %v510 = vmul.f32 %v509, %v385
      %v511 = vmul.f32 %v510, %v509
      %v512 = vmul.f32 0.5, %v511
      %v513 = vsub.f32 1.5, %v512
      %v514 = vmul.f32 %v509, %v513
      %vm515 = vweird.f32 %v385
      %vm516 = vweird.f32 %v509
      %vm517 = vmor %vm515, %vm516
      %v518 = vsel %vm517, %v509, %v514
      %v519 = vrsqrt.pop %v386
      %v520 = vmul.f32 %v519, %v386
      %v521 = vmul.f32 %v520, %v519
      %v522 = vmul.f32 0.5, %v521
      %v523 = vsub.f32 1.5, %v522
      %v524 = vmul.f32 %v519, %v523
      %vm525 = vweird.f32 %v386
      %vm526 = vweird.f32 %v519
      %vm527 = vmor %vm525, %vm526
      %v528 = vsel %vm527, %v519, %v524
      %v529 = vrsqrt.pop %v387
      %v530 = vmul.f32 %v529, %v387
      %v531 = vmul.f32 %v530, %v529
      %v532 = vmul.f32 0.5, %v531
      %v533 = vsub.f32 1.5, %v532
      %v534 = vmul.f32 %v529, %v533
      %vm535 = vweird.f32 %v387
      %vm536 = vweird.f32 %v529
      %vm537 = vmor %vm535, %vm536
      %v538 = vsel %vm537, %v529, %v534
      %v539 = vrsqrt.pop %v388
      %v540 = vmul.f32 %v539, %v388
      %v541 = vmul.f32 %v540, %v539
      %v542 = vmul.f32 0.5, %v541
      %v543 = vsub.f32 1.5, %v542
      %v544 = vmul.f32 %v539, %v543
      %vm545 = vweird.f32 %v388
      %vm546 = vweird.f32 %v539
      %vm547 = vmor %vm545, %vm546
      %v548 = vsel %vm547, %v539, %v544
      %v549 = vpack.c.bf16 %v295, %v293
      %v550 = vpack.c.bf16 %v296, %v294
      %v551 = vpack.c.bf16 %v299, %v297
      %v552 = vpack.c.bf16 %v300, %v298
      %v553 = vpack.c.bf16 %v303, %v301
      %v554 = vpack.c.bf16 %v304, %v302
      %v555 = vpack.c.bf16 %v307, %v305
      %v556 = vpack.c.bf16 %v308, %v306
      %v557 = vpack.c.bf16 %v311, %v309
      %v558 = vpack.c.bf16 %v312, %v310
      %v559 = vpack.c.bf16 %v315, %v313
      %v560 = vpack.c.bf16 %v316, %v314
      %v561 = vpack.c.bf16 %v319, %v317
      %v562 = vpack.c.bf16 %v320, %v318
      %v563 = vpack.c.bf16 %v323, %v321
      %v564 = vpack.c.bf16 %v324, %v322
      %v565 = vld [vmem:[%s1] sm:$0xf]
      %v566 = vld [vmem:[%s1 + $0x4] sm:$0xf]
      %v567 = vld [vmem:[%s1 + $0x8] sm:$0xf]
      %v568 = vld [vmem:[%s1 + $0xc] sm:$0xf]
      %v569 = vld [vmem:[%s1 + $0x10] sm:$0xf]
      %v570 = vld [vmem:[%s1 + $0x14] sm:$0xf]
      %v571 = vld [vmem:[%s1 + $0x18] sm:$0xf]
      %v572 = vld [vmem:[%s1 + $0x1c] sm:$0xf]
      %v573 = vld [vmem:[%s1 + $0x20] sm:$0xf]
      %v574 = vld [vmem:[%s1 + $0x24] sm:$0xf]
      %v575 = vld [vmem:[%s1 + $0x28] sm:$0xf]
      %v576 = vld [vmem:[%s1 + $0x2c] sm:$0xf]
      %v577 = vld [vmem:[%s1 + $0x30] sm:$0xf]
      %v578 = vld [vmem:[%s1 + $0x34] sm:$0xf]
      %v579 = vld [vmem:[%s1 + $0x38] sm:$0xf]
      %v580 = vld [vmem:[%s1 + $0x3c] sm:$0xf]
      %v581 = vld [vmem:[%s1 + $0x40] sm:$0xf]
      %v582 = vld [vmem:[%s1 + $0x44] sm:$0xf]
      %v583 = vld [vmem:[%s1 + $0x48] sm:$0xf]
      %v584 = vld [vmem:[%s1 + $0x4c] sm:$0xf]
      %v585 = vld [vmem:[%s1 + $0x50] sm:$0xf]
      %v586 = vld [vmem:[%s1 + $0x54] sm:$0xf]
      %v587 = vld [vmem:[%s1 + $0x58] sm:$0xf]
      %v588 = vld [vmem:[%s1 + $0x5c] sm:$0xf]
      %v589 = vld [vmem:[%s1 + $0x60] sm:$0xf]
      %v590 = vld [vmem:[%s1 + $0x64] sm:$0xf]
      %v591 = vld [vmem:[%s1 + $0x68] sm:$0xf]
      %v592 = vld [vmem:[%s1 + $0x6c] sm:$0xf]
      %v593 = vld [vmem:[%s1 + $0x70] sm:$0xf]
      %v594 = vld [vmem:[%s1 + $0x74] sm:$0xf]
      %v595 = vld [vmem:[%s1 + $0x78] sm:$0xf]
      %v596 = vld [vmem:[%s1 + $0x7c] sm:$0xf]
      %v629 = vunpack.c.l.b16 %v565
      %v630 = vunpack.c.l.b16 %v566
      %v631 = vunpack.c.l.b16 %v567
      %v632 = vunpack.c.l.b16 %v568
      %v633 = vunpack.c.l.b16 %v569
      %v634 = vunpack.c.l.b16 %v570
      %v635 = vunpack.c.l.b16 %v571
      %v636 = vunpack.c.l.b16 %v572
      %v637 = vunpack.c.l.b16 %v573
      %v638 = vunpack.c.l.b16 %v574
      %v639 = vunpack.c.l.b16 %v575
      %v640 = vunpack.c.l.b16 %v576
      %v641 = vunpack.c.l.b16 %v577
      %v642 = vunpack.c.l.b16 %v578
      %v643 = vunpack.c.l.b16 %v579
      %v644 = vunpack.c.l.b16 %v580
      %v645 = vunpack.c.l.b16 %v581
      %v646 = vunpack.c.l.b16 %v582
      %v647 = vunpack.c.l.b16 %v583
      %v648 = vunpack.c.l.b16 %v584
      %v649 = vunpack.c.l.b16 %v585
      %v650 = vunpack.c.l.b16 %v586
      %v651 = vunpack.c.l.b16 %v587
      %v652 = vunpack.c.l.b16 %v588
      %v653 = vunpack.c.l.b16 %v589
      %v654 = vunpack.c.l.b16 %v590
      %v655 = vunpack.c.l.b16 %v591
      %v656 = vunpack.c.l.b16 %v592
      %v657 = vunpack.c.l.b16 %v593
      %v658 = vunpack.c.l.b16 %v594
      %v659 = vunpack.c.l.b16 %v595
      %v660 = vunpack.c.l.b16 %v596
      %v661 = vpack.c.b16 %v630, %v629
      %v662 = vpack.c.b16 %v632, %v631
      %v663 = vpack.c.b16 %v634, %v633
      %v664 = vpack.c.b16 %v636, %v635
      %v665 = vpack.c.b16 %v638, %v637
      %v666 = vpack.c.b16 %v640, %v639
      %v667 = vpack.c.b16 %v642, %v641
      %v668 = vpack.c.b16 %v644, %v643
      %v669 = vpack.c.b16 %v646, %v645
      %v670 = vpack.c.b16 %v648, %v647
      %v671 = vpack.c.b16 %v650, %v649
      %v672 = vpack.c.b16 %v652, %v651
      %v673 = vpack.c.b16 %v654, %v653
      %v674 = vpack.c.b16 %v656, %v655
      %v675 = vpack.c.b16 %v658, %v657
      %v676 = vpack.c.b16 %v660, %v659
      %693 = vmatpush.bf16.msra.mxu0 %v668
      %694 = vmatpush.bf16.msra.mxu0 %v667
      %695 = vmatpush.bf16.msra.mxu0 %v666
      %696 = vmatpush.bf16.msra.mxu0 %v665
      %697 = vmatpush.bf16.msra.mxu0 %v664
      %698 = vmatpush.bf16.msra.mxu0 %v663
      %699 = vmatpush.bf16.msra.mxu0 %v662
      %700 = vmatpush.bf16.msra.mxu0 %v661
      %701 = vmatmul.bf16.gmra.mxu0 %v549
      %v702 = vpop.f32.mrf.mxu0
      %v703 = vadd.f32 0.0, %v702
      %v704 = vpop.f32.mrf.mxu0
      %v705 = vadd.f32 0.0, %v704
      %706 = vmatmul.bf16.gmra.mxu0 %v551
      %v707 = vpop.f32.mrf.mxu0
      %v708 = vadd.f32 0.0, %v707
      %v709 = vpop.f32.mrf.mxu0
      %v710 = vadd.f32 0.0, %v709
      %711 = vmatmul.bf16.gmra.mxu0 %v553
      %v712 = vpop.f32.mrf.mxu0
      %v713 = vadd.f32 0.0, %v712
      %v714 = vpop.f32.mrf.mxu0
      %v715 = vadd.f32 0.0, %v714
      %716 = vmatmul.bf16.gmra.mxu0 %v555
      %v717 = vpop.f32.mrf.mxu0
      %v718 = vadd.f32 0.0, %v717
      %v719 = vpop.f32.mrf.mxu0
      %v720 = vadd.f32 0.0, %v719
      %721 = vmatmul.bf16.gmra.mxu0 %v557
      %v722 = vpop.f32.mrf.mxu0
      %v723 = vadd.f32 0.0, %v722
      %v724 = vpop.f32.mrf.mxu0
      %v725 = vadd.f32 0.0, %v724
      %726 = vmatmul.bf16.gmra.mxu0 %v559
      %v727 = vpop.f32.mrf.mxu0
      %v728 = vadd.f32 0.0, %v727
      %v729 = vpop.f32.mrf.mxu0
      %v730 = vadd.f32 0.0, %v729
      %731 = vmatmul.bf16.gmra.mxu0 %v561
      %v732 = vpop.f32.mrf.mxu0
      %v733 = vadd.f32 0.0, %v732
      %v734 = vpop.f32.mrf.mxu0
      %v735 = vadd.f32 0.0, %v734
      %736 = vmatmul.bf16.gmra.mxu0 %v563
      %v737 = vpop.f32.mrf.mxu0
      %v738 = vadd.f32 0.0, %v737
      %v739 = vpop.f32.mrf.mxu0
      %v740 = vadd.f32 0.0, %v739
      %741 = vdwg.mxu0
      %742 = vmatpush.bf16.msra.mxu0 %v676
      %743 = vmatpush.bf16.msra.mxu0 %v675
      %744 = vmatpush.bf16.msra.mxu0 %v674
      %745 = vmatpush.bf16.msra.mxu0 %v673
      %746 = vmatpush.bf16.msra.mxu0 %v672
      %747 = vmatpush.bf16.msra.mxu0 %v671
      %748 = vmatpush.bf16.msra.mxu0 %v670
      %749 = vmatpush.bf16.msra.mxu0 %v669
      %750 = vmatmul.bf16.gmra.mxu0 %v550
      %v751 = vpop.f32.mrf.mxu0
      %v752 = vadd.f32 %v703, %v751
      %v753 = vpop.f32.mrf.mxu0
      %v754 = vadd.f32 %v705, %v753
      %755 = vmatmul.bf16.gmra.mxu0 %v552
      %v756 = vpop.f32.mrf.mxu0
      %v757 = vadd.f32 %v708, %v756
      %v758 = vpop.f32.mrf.mxu0
      %v759 = vadd.f32 %v710, %v758
      %760 = vmatmul.bf16.gmra.mxu0 %v554
      %v761 = vpop.f32.mrf.mxu0
      %v762 = vadd.f32 %v713, %v761
      %v763 = vpop.f32.mrf.mxu0
      %v764 = vadd.f32 %v715, %v763
      %765 = vmatmul.bf16.gmra.mxu0 %v556
      %v766 = vpop.f32.mrf.mxu0
      %v767 = vadd.f32 %v718, %v766
      %v768 = vpop.f32.mrf.mxu0
      %v769 = vadd.f32 %v720, %v768
      %770 = vmatmul.bf16.gmra.mxu0 %v558
      %v771 = vpop.f32.mrf.mxu0
      %v772 = vadd.f32 %v723, %v771
      %v773 = vpop.f32.mrf.mxu0
      %v774 = vadd.f32 %v725, %v773
      %775 = vmatmul.bf16.gmra.mxu0 %v560
      %v776 = vpop.f32.mrf.mxu0
      %v777 = vadd.f32 %v728, %v776
      %v778 = vpop.f32.mrf.mxu0
      %v779 = vadd.f32 %v730, %v778
      %780 = vmatmul.bf16.gmra.mxu0 %v562
      %v781 = vpop.f32.mrf.mxu0
      %v782 = vadd.f32 %v733, %v781
      %v783 = vpop.f32.mrf.mxu0
      %v784 = vadd.f32 %v735, %v783
      %785 = vmatmul.bf16.gmra.mxu0 %v564
      %v786 = vpop.f32.mrf.mxu0
      %v787 = vadd.f32 %v738, %v786
      %v788 = vpop.f32.mrf.mxu0
      %v789 = vadd.f32 %v740, %v788
      %790 = vdwg.mxu0
      %v791 = vmul.f32 %v752, %v398
      %v792 = vmul.f32 %v754, %v408
      %v793 = vmul.f32 %v757, %v418
      %v794 = vmul.f32 %v759, %v428
      %v795 = vmul.f32 %v762, %v438
      %v796 = vmul.f32 %v764, %v448
      %v797 = vmul.f32 %v767, %v458
      %v798 = vmul.f32 %v769, %v468
      %v799 = vmul.f32 %v772, %v478
      %v800 = vmul.f32 %v774, %v488
      %v801 = vmul.f32 %v777, %v498
      %v802 = vmul.f32 %v779, %v508
      %v803 = vmul.f32 %v782, %v518
      %v804 = vmul.f32 %v784, %v528
      %v805 = vmul.f32 %v787, %v538
      %v806 = vmul.f32 %v789, %v548
      %v807 = vld [vmem:[%s245] sm:$0xff]
      %v808 = vld [vmem:[%s245 + $0x8] sm:$0xff]
      %v809 = vld [vmem:[%s245 + $0x10] sm:$0xff]
      %v810 = vld [vmem:[%s245 + $0x18] sm:$0xff]
      %v811 = vld [vmem:[%s245 + $0x20] sm:$0xff]
      %v812 = vld [vmem:[%s245 + $0x28] sm:$0xff]
      %v813 = vld [vmem:[%s245 + $0x30] sm:$0xff]
      %v814 = vld [vmem:[%s245 + $0x38] sm:$0xff]
      %v815 = vld [vmem:[%s245 + $0x40] sm:$0xff]
      %v816 = vld [vmem:[%s245 + $0x48] sm:$0xff]
      %v817 = vld [vmem:[%s245 + $0x50] sm:$0xff]
      %v818 = vld [vmem:[%s245 + $0x58] sm:$0xff]
      %v819 = vld [vmem:[%s245 + $0x60] sm:$0xff]
      %v820 = vld [vmem:[%s245 + $0x68] sm:$0xff]
      %v821 = vld [vmem:[%s245 + $0x70] sm:$0xff]
      %v822 = vld [vmem:[%s245 + $0x78] sm:$0xff]
      %v823 = vld [vmem:[%s3] sm:$0xff]
      %v824 = vld [vmem:[%s3 + $0x8] sm:$0xff]
      %v825 = vld [vmem:[%s3 + $0x10] sm:$0xff]
      %v826 = vld [vmem:[%s3 + $0x18] sm:$0xff]
      %v827 = vld [vmem:[%s3 + $0x20] sm:$0xff]
      %v828 = vld [vmem:[%s3 + $0x28] sm:$0xff]
      %v829 = vld [vmem:[%s3 + $0x30] sm:$0xff]
      %v830 = vld [vmem:[%s3 + $0x38] sm:$0xff]
      %v831 = vld [vmem:[%s3 + $0x40] sm:$0xff]
      %v832 = vld [vmem:[%s3 + $0x48] sm:$0xff]
      %v833 = vld [vmem:[%s3 + $0x50] sm:$0xff]
      %v834 = vld [vmem:[%s3 + $0x58] sm:$0xff]
      %v835 = vld [vmem:[%s3 + $0x60] sm:$0xff]
      %v836 = vld [vmem:[%s3 + $0x68] sm:$0xff]
      %v837 = vld [vmem:[%s3 + $0x70] sm:$0xff]
      %v838 = vld [vmem:[%s3 + $0x78] sm:$0xff]
      %v839 = vld [vmem:[%s4] sm:$0x1]
      %v841 = vperm.slane %v839, 0
      %843 = vmatpush.msra.mxu0 %v838
      %844 = vmatpush.msra.mxu0 %v837
      %845 = vmatpush.msra.mxu0 %v836
      %846 = vmatpush.msra.mxu0 %v835
      %847 = vmatpush.msra.mxu0 %v834
      %848 = vmatpush.msra.mxu0 %v833
      %849 = vmatpush.msra.mxu0 %v832
      %850 = vmatpush.msra.mxu0 %v831
      %851 = vmatpush.msra.mxu0 %v830
      %852 = vmatpush.msra.mxu0 %v829
      %853 = vmatpush.msra.mxu0 %v828
      %854 = vmatpush.msra.mxu0 %v827
      %855 = vmatpush.msra.mxu0 %v826
      %856 = vmatpush.msra.mxu0 %v825
      %857 = vmatpush.msra.mxu0 %v824
      %858 = vmatpush.msra.mxu0 %v823
      %859 = vmatmul.f32.gmra.mxu0 %v807
      %v860 = vpop.f32.mrf.mxu0
      %v861 = vadd.f32 %v841, %v860
      %862 = vmatmul.f32.gmra.mxu0 %v808
      %v863 = vpop.f32.mrf.mxu0
      %v864 = vadd.f32 %v841, %v863
      %865 = vmatmul.f32.gmra.mxu0 %v809
      %v866 = vpop.f32.mrf.mxu0
      %v867 = vadd.f32 %v841, %v866
      %868 = vmatmul.f32.gmra.mxu0 %v810
      %v869 = vpop.f32.mrf.mxu0
      %v870 = vadd.f32 %v841, %v869
      %871 = vmatmul.f32.gmra.mxu0 %v811
      %v872 = vpop.f32.mrf.mxu0
      %v873 = vadd.f32 %v841, %v872
      %874 = vmatmul.f32.gmra.mxu0 %v812
      %v875 = vpop.f32.mrf.mxu0
      %v876 = vadd.f32 %v841, %v875
      %877 = vmatmul.f32.gmra.mxu0 %v813
      %v878 = vpop.f32.mrf.mxu0
      %v879 = vadd.f32 %v841, %v878
      %880 = vmatmul.f32.gmra.mxu0 %v814
      %v881 = vpop.f32.mrf.mxu0
      %v882 = vadd.f32 %v841, %v881
      %883 = vmatmul.f32.gmra.mxu0 %v815
      %v884 = vpop.f32.mrf.mxu0
      %v885 = vadd.f32 %v841, %v884
      %886 = vmatmul.f32.gmra.mxu0 %v816
      %v887 = vpop.f32.mrf.mxu0
      %v888 = vadd.f32 %v841, %v887
      %889 = vmatmul.f32.gmra.mxu0 %v817
      %v890 = vpop.f32.mrf.mxu0
      %v891 = vadd.f32 %v841, %v890
      %892 = vmatmul.f32.gmra.mxu0 %v818
      %v893 = vpop.f32.mrf.mxu0
      %v894 = vadd.f32 %v841, %v893
      %895 = vmatmul.f32.gmra.mxu0 %v819
      %v896 = vpop.f32.mrf.mxu0
      %v897 = vadd.f32 %v841, %v896
      %898 = vmatmul.f32.gmra.mxu0 %v820
      %v899 = vpop.f32.mrf.mxu0
      %v900 = vadd.f32 %v841, %v899
      %901 = vmatmul.f32.gmra.mxu0 %v821
      %v902 = vpop.f32.mrf.mxu0
      %v903 = vadd.f32 %v841, %v902
      %904 = vmatmul.f32.gmra.mxu0 %v822
      %v905 = vpop.f32.mrf.mxu0
      %v906 = vadd.f32 %v841, %v905
      %907 = vdwg.mxu0
      %v908 = vadd.f32 %v791, %v861
      %v909 = vadd.f32 %v792, %v864
      %v910 = vadd.f32 %v793, %v867
      %v911 = vadd.f32 %v794, %v870
      %v912 = vadd.f32 %v795, %v873
      %v913 = vadd.f32 %v796, %v876
      %v914 = vadd.f32 %v797, %v879
      %v915 = vadd.f32 %v798, %v882
      %v916 = vadd.f32 %v799, %v885
      %v917 = vadd.f32 %v800, %v888
      %v918 = vadd.f32 %v801, %v891
      %v919 = vadd.f32 %v802, %v894
      %v920 = vadd.f32 %v803, %v897
      %v921 = vadd.f32 %v804, %v900
      %v922 = vadd.f32 %v805, %v903
      %v923 = vadd.f32 %v806, %v906
      %924 = vst [vmem:[%s251] sm:$0xff] %v908
      %925 = vst [vmem:[%s251 + $0x8] sm:$0xff] %v909
      %926 = vst [vmem:[%s251 + $0x10] sm:$0xff] %v910
      %927 = vst [vmem:[%s251 + $0x18] sm:$0xff] %v911
      %928 = vst [vmem:[%s251 + $0x20] sm:$0xff] %v912
      %929 = vst [vmem:[%s251 + $0x28] sm:$0xff] %v913
      %930 = vst [vmem:[%s251 + $0x30] sm:$0xff] %v914
      %931 = vst [vmem:[%s251 + $0x38] sm:$0xff] %v915
      %932 = vst [vmem:[%s251 + $0x40] sm:$0xff] %v916
      %933 = vst [vmem:[%s251 + $0x48] sm:$0xff] %v917
      %934 = vst [vmem:[%s251 + $0x50] sm:$0xff] %v918
      %935 = vst [vmem:[%s251 + $0x58] sm:$0xff] %v919
      %936 = vst [vmem:[%s251 + $0x60] sm:$0xff] %v920
      %937 = vst [vmem:[%s251 + $0x68] sm:$0xff] %v921
      %938 = vst [vmem:[%s251 + $0x70] sm:$0xff] %v922
      %939 = vst [vmem:[%s251 + $0x78] sm:$0xff] %v923
      %s940 = smul.u32 16, %s16
      %p941 = scmp.lt.s32.totalorder %s940, 31
      %s942 = scalar_select %p941, %s940, 31
      %s943 = smul.addr %s942, 8
      %s944 = scalar_lea.vmem %s5, %s943
      // Predicated region
      $region41: #{hardgam_forward.7} parent=39 // pred_check
        %p945 = pneg %p149
      $region42: #{hardgam_forward.7} parent=39 // pred_check_branch
        %947 = sbr.rel (%p945) target = $region44
      $region43: #{hardgam_forward.7} parent=39 // pred_region
        %s948 = smul.u32 16, %s16
      $region44: #{hardgam_forward.7} parent=39 // pred_fallthru
        _
    $region40: #{hardgam_forward.7} parent=5 // pred_fallthru
      _
    %p949 = scmp.le.s32.totalorder 2, %s11
    // Predicated region
    $region45: #{hardgam_forward.7} parent=5 // pred_check
      %p950 = pneg %p949
    $region46: #{hardgam_forward.7} parent=5 // pred_check_branch
      %952 = sbr.rel (%p950) target = $region48
    $region47: #{hardgam_forward.7} parent=5 // pred_region
      %s953 = ssub.s32 %s11, 2
      // Predicated region
      $region49: #{hardgam_forward.7} parent=47 // pred_check
        %p954 = pneg %p155
      $region50: #{hardgam_forward.7} parent=47 // pred_check_branch
        %956 = sbr.rel (%p954) target = $region52
      $region51: #{hardgam_forward.7} parent=47 // pred_region
        %s957 = smul.u32 16, %s17
        %p958 = scmp.lt.s32.totalorder %s957, 31
        %s959 = scalar_select %p958, %s957, 31
        %s960 = smul.addr %s959, 8
        %s961 = scalar_lea.vmem %s5, %s960
      $region52: #{hardgam_forward.7} parent=47 // pred_fallthru
        _
    $region48: #{hardgam_forward.7} parent=5 // pred_fallthru
      _
  $region6: #{hardgam_forward.7} parent=0 // loop_footer
    %s15 = sadd.s32 1, %s11
  $region7: #{hardgam_forward.7} parent=0 // loop_footer_branch
    %10 = sbr.rel target = $region3
  $region8: #{hardgam_forward.7} parent=0 // loop_exit
    _

// kernel: hardgam_forward.6
$region0: #{hardgam_forward.6}
  #allocation0 [shape = 'u32[]', space=smem, size = 0x4, offset = 0x4, fixed_abs, tag = 'smem constant byte address 0x4 - core index']
  #allocation1 [shape = 'u32[72,128]{1,0:T(1,128)}', space=vmem, size = 0x9000, scoped, tag = 'internal scratch']
  %s0 = inlined_call_operand.vmem [shape: s8[256,256], index: 0, kind: input, shape index: {}]
  %s1 = inlined_call_operand.vmem [shape: s8[256,256], index: 1, kind: input, shape index: {}]
  %s2 = inlined_call_operand.vmem [shape: bf16[256,128], index: 2, kind: input, shape index: {}]
  %s3 = inlined_call_operand.vmem [shape: f32[1,256], index: 3, kind: input, shape index: {}]
  %s4 = inlined_call_operand.vmem [shape: f32[256,1], index: 4, kind: input, shape index: {}]
  %s5 = inlined_call_operand.vmem [shape: f32[128,128], index: 5, kind: input, shape index: {}]
  %s6 = inlined_call_operand.vmem [shape: f32[256,1], index: 6, kind: input, shape index: {}]
  %s7 = inlined_call_operand.vmem [shape: bf16[256,128], index: 7, kind: output, shape index: {}]
  %s8 = sld [smem:[#allocation0]]
  $region61: #{hardgam_forward.6} parent=0
    _
  %s10 = ssub.s32 1, %s8
  %s11 = scalar_select 0, %s10, %s8
  loop: start=0, step=1, limit=4
  $region2: #{hardgam_forward.6} parent=0 // loop_pre_header
    _
  $region3: #{hardgam_forward.6} parent=0 // loop_header
    %s13 = sphi 0, %s17
    %p14 = scmp.ge.s32.totalorder %s13, 4
    %s23 = sphi 0, %s25
    %s26 = sphi 0, %s23
    %s27 = sphi 0, %s26
    %s43 = sphi 0, %s27
    %s47 = sphi 0, %s47
    %s49 = sphi 0, %s47
    %s50 = sphi 0, %s49
    %s64 = sphi 0, %s50
    %s68 = sphi 0, %s68
    %s70 = sphi 0, %s68
    %s71 = sphi 0, %s70
    %s85 = sphi 0, %s71
    %s89 = sphi 0, %s89
    %s91 = sphi 0, %s89
    %s92 = sphi 0, %s91
    %s106 = sphi 0, %s92
    %s112 = sphi 0, %s114
    %s115 = sphi 0, %s112
    %s116 = sphi 0, %s115
    %s132 = sphi 0, %s116
    %s136 = sphi 0, %s136
    %s138 = sphi 0, %s136
    %s139 = sphi 0, %s138
    %s153 = sphi 0, %s139
    %s159 = sphi 0, %s161
    %s162 = sphi 0, %s159
    %s163 = sphi 0, %s162
    %s179 = sphi 0, %s163
    %s185 = sphi 0, %s187
    %s188 = sphi 0, %s185
    %s189 = sphi 0, %s188
    %s205 = sphi 0, %s189
  $region4: #{hardgam_forward.6} parent=0 // loop_header_branch
    %16 = sbr.rel (%p14) target = $region8
  $region5: #{hardgam_forward.6} parent=0 // loop_body
    %s18 = ssub.s32 %s13, 1
    %s19 = ssub.s32 %s13, 2
    %s20 = sadd.s32 %s13, 1
    %s21 = ssub.s32 %s13, %s20
    %p22 = scmp.eq.s32.totalorder %s21, 0
    %s24 = sadd.s32 %s23, 1
    %s25 = scalar_select %p22, %s23, %s24
    %p28 = pneg %p22
    %p29 = scmp.eq.s32.totalorder %s13, 1
    %p30 = por %p28, %p29
    %p31 = scmp.ne.s32.totalorder %s23, %s26
    %p32 = scmp.eq.s32.totalorder %s13, 0
    %p33 = por %p31, %p32
    %p34 = scmp.ne.s32.totalorder %s23, %s26
    %p35 = scmp.eq.s32.totalorder %s18, 1
    %p36 = por %p34, %p35
    %p37 = scmp.ne.s32.totalorder %s26, %s27
    %p38 = scmp.eq.s32.totalorder %s18, 0
    %p39 = por %p37, %p38
    %p40 = scmp.ne.s32.totalorder %s26, %s27
    %p41 = scmp.eq.s32.totalorder %s19, 1
    %p42 = por %p40, %p41
    %p44 = scmp.ne.s32.totalorder %s27, %s43
    %p45 = scmp.eq.s32.totalorder %s19, 0
    %p46 = por %p44, %p45
    %s48 = sadd.s32 %s47, 1
    %p51 = scmp.eq.s32.totalorder %s13, 1
    %p52 = scmp.ne.s32.totalorder %s47, %s49
    %p53 = scmp.eq.s32.totalorder %s13, 0
    %p54 = por %p52, %p53
    %p55 = scmp.ne.s32.totalorder %s47, %s49
    %p56 = scmp.eq.s32.totalorder %s18, 1
    %p57 = por %p55, %p56
    %p58 = scmp.ne.s32.totalorder %s49, %s50
    %p59 = scmp.eq.s32.totalorder %s18, 0
    %p60 = por %p58, %p59
    %p61 = scmp.ne.s32.totalorder %s49, %s50
    %p62 = scmp.eq.s32.totalorder %s19, 1
    %p63 = por %p61, %p62
    %p65 = scmp.ne.s32.totalorder %s50, %s64
    %p66 = scmp.eq.s32.totalorder %s19, 0
    %p67 = por %p65, %p66
    %s69 = sadd.s32 %s68, 1
    %p72 = scmp.eq.s32.totalorder %s13, 1
    %p73 = scmp.ne.s32.totalorder %s68, %s70
    %p74 = scmp.eq.s32.totalorder %s13, 0
    %p75 = por %p73, %p74
    %p76 = scmp.ne.s32.totalorder %s68, %s70
    %p77 = scmp.eq.s32.totalorder %s18, 1
    %p78 = por %p76, %p77
    %p79 = scmp.ne.s32.totalorder %s70, %s71
    %p80 = scmp.eq.s32.totalorder %s18, 0
    %p81 = por %p79, %p80
    %p82 = scmp.ne.s32.totalorder %s70, %s71
    %p83 = scmp.eq.s32.totalorder %s19, 1
    %p84 = por %p82, %p83
    %p86 = scmp.ne.s32.totalorder %s71, %s85
    %p87 = scmp.eq.s32.totalorder %s19, 0
    %p88 = por %p86, %p87
    %s90 = sadd.s32 %s89, 1
    %p93 = scmp.eq.s32.totalorder %s13, 1
    %p94 = scmp.ne.s32.totalorder %s89, %s91
    %p95 = scmp.eq.s32.totalorder %s13, 0
    %p96 = por %p94, %p95
    %p97 = scmp.ne.s32.totalorder %s89, %s91
    %p98 = scmp.eq.s32.totalorder %s18, 1
    %p99 = por %p97, %p98
    %p100 = scmp.ne.s32.totalorder %s91, %s92
    %p101 = scmp.eq.s32.totalorder %s18, 0
    %p102 = por %p100, %p101
    %p103 = scmp.ne.s32.totalorder %s91, %s92
    %p104 = scmp.eq.s32.totalorder %s19, 1
    %p105 = por %p103, %p104
    %p107 = scmp.ne.s32.totalorder %s92, %s106
    %p108 = scmp.eq.s32.totalorder %s19, 0
    %p109 = por %p107, %p108
    %s110 = ssub.s32 %s13, %s20
    %p111 = scmp.eq.s32.totalorder %s110, 0
    %s113 = sadd.s32 %s112, 1
    %s114 = scalar_select %p111, %s112, %s113
    %p117 = pneg %p111
    %p118 = scmp.eq.s32.totalorder %s13, 1
    %p119 = por %p117, %p118
    %p120 = scmp.ne.s32.totalorder %s112, %s115
    %p121 = scmp.eq.s32.totalorder %s13, 0
    %p122 = por %p120, %p121
    %p123 = scmp.ne.s32.totalorder %s112, %s115
    %p124 = scmp.eq.s32.totalorder %s18, 1
    %p125 = por %p123, %p124
    %p126 = scmp.ne.s32.totalorder %s115, %s116
    %p127 = scmp.eq.s32.totalorder %s18, 0
    %p128 = por %p126, %p127
    %p129 = scmp.ne.s32.totalorder %s115, %s116
    %p130 = scmp.eq.s32.totalorder %s19, 1
    %p131 = por %p129, %p130
    %p133 = scmp.ne.s32.totalorder %s116, %s132
    %p134 = scmp.eq.s32.totalorder %s19, 0
    %p135 = por %p133, %p134
    %s137 = sadd.s32 %s136, 1
    %p140 = scmp.eq.s32.totalorder %s13, 1
    %p141 = scmp.ne.s32.totalorder %s136, %s138
    %p142 = scmp.eq.s32.totalorder %s13, 0
    %p143 = por %p141, %p142
    %p144 = scmp.ne.s32.totalorder %s136, %s138
    %p145 = scmp.eq.s32.totalorder %s18, 1
    %p146 = por %p144, %p145
    %p147 = scmp.ne.s32.totalorder %s138, %s139
    %p148 = scmp.eq.s32.totalorder %s18, 0
    %p149 = por %p147, %p148
    %p150 = scmp.ne.s32.totalorder %s138, %s139
    %p151 = scmp.eq.s32.totalorder %s19, 1
    %p152 = por %p150, %p151
    %p154 = scmp.ne.s32.totalorder %s139, %s153
    %p155 = scmp.eq.s32.totalorder %s19, 0
    %p156 = por %p154, %p155
    %s157 = ssub.s32 %s13, %s20
    %p158 = scmp.eq.s32.totalorder %s157, 0
    %s160 = sadd.s32 %s159, 1
    %s161 = scalar_select %p158, %s159, %s160
    %p164 = pneg %p158
    %p165 = scmp.eq.s32.totalorder %s13, 1
    %p166 = por %p164, %p165
    %p167 = scmp.ne.s32.totalorder %s159, %s162
    %p168 = scmp.eq.s32.totalorder %s13, 0
    %p169 = por %p167, %p168
    %p170 = scmp.ne.s32.totalorder %s159, %s162
    %p171 = scmp.eq.s32.totalorder %s18, 1
    %p172 = por %p170, %p171
    %p173 = scmp.ne.s32.totalorder %s162, %s163
    %p174 = scmp.eq.s32.totalorder %s18, 0
    %p175 = por %p173, %p174
    %p176 = scmp.ne.s32.totalorder %s162, %s163
    %p177 = scmp.eq.s32.totalorder %s19, 1
    %p178 = por %p176, %p177
    %p180 = scmp.ne.s32.totalorder %s163, %s179
    %p181 = scmp.eq.s32.totalorder %s19, 0
    %p182 = por %p180, %p181
    %s183 = ssub.s32 %s13, %s20
    %p184 = scmp.eq.s32.totalorder %s183, 0
    %s186 = sadd.s32 %s185, 1
    %s187 = scalar_select %p184, %s185, %s186
    %p190 = pneg %p184
    %p191 = scmp.eq.s32.totalorder %s13, 1
    %p192 = por %p190, %p191
    %p193 = scmp.ne.s32.totalorder %s185, %s188
    %p194 = scmp.eq.s32.totalorder %s13, 0
    %p195 = por %p193, %p194
    %p196 = scmp.ne.s32.totalorder %s185, %s188
    %p197 = scmp.eq.s32.totalorder %s18, 1
    %p198 = por %p196, %p197
    %p199 = scmp.ne.s32.totalorder %s188, %s189
    %p200 = scmp.eq.s32.totalorder %s18, 0
    %p201 = por %p199, %p200
    %p202 = scmp.ne.s32.totalorder %s188, %s189
    %p203 = scmp.eq.s32.totalorder %s19, 1
    %p204 = por %p202, %p203
    %p206 = scmp.ne.s32.totalorder %s189, %s205
    %p207 = scmp.eq.s32.totalorder %s19, 0
    %p208 = por %p206, %p207
    %p209 = scmp.le.s32.totalorder 1, %s13
    %p210 = scmp.lt.s32.totalorder %s13, 3
    %p211 = pnand %p209, %p210
    %p212 = pneg %p211
    // Predicated region
    $region9: #{hardgam_forward.6} parent=5 // pred_check
      _
    $region10: #{hardgam_forward.6} parent=5 // pred_check_branch
      %214 = sbr.rel (%p211) target = $region12
    $region11: #{hardgam_forward.6} parent=5 // pred_region
      %s215 = ssub.s32 %s13, 1
      // Predicated region
      $region13: #{hardgam_forward.6} parent=11 // pred_check
        %p216 = pneg %p60
      $region14: #{hardgam_forward.6} parent=11 // pred_check_branch
        %218 = sbr.rel (%p216) target = $region16
      $region15: #{hardgam_forward.6} parent=11 // pred_region
        _
      $region16: #{hardgam_forward.6} parent=11 // pred_fallthru
        _
      // Predicated region
      $region17: #{hardgam_forward.6} parent=11 // pred_check
        %p219 = pneg %p81
      $region18: #{hardgam_forward.6} parent=11 // pred_check_branch
        %221 = sbr.rel (%p219) target = $region20
      $region19: #{hardgam_forward.6} parent=11 // pred_region
        _
      $region20: #{hardgam_forward.6} parent=11 // pred_fallthru
        _
      // Predicated region
      $region21: #{hardgam_forward.6} parent=11 // pred_check
        %p222 = pneg %p102
      $region22: #{hardgam_forward.6} parent=11 // pred_check_branch
        %224 = sbr.rel (%p222) target = $region24
      $region23: #{hardgam_forward.6} parent=11 // pred_region
        _
      $region24: #{hardgam_forward.6} parent=11 // pred_fallthru
        _
      // Predicated region
      $region25: #{hardgam_forward.6} parent=11 // pred_check
        %p225 = pneg %p149
      $region26: #{hardgam_forward.6} parent=11 // pred_check_branch
        %227 = sbr.rel (%p225) target = $region28
      $region27: #{hardgam_forward.6} parent=11 // pred_region
        _
      $region28: #{hardgam_forward.6} parent=11 // pred_fallthru
        _
    $region12: #{hardgam_forward.6} parent=5 // pred_fallthru
      _
    %p228 = scmp.lt.s32.totalorder %s13, 2
    // Predicated region
    $region29: #{hardgam_forward.6} parent=5 // pred_check
      %p229 = pneg %p228
    $region30: #{hardgam_forward.6} parent=5 // pred_check_branch
      %231 = sbr.rel (%p229) target = $region32
    $region31: #{hardgam_forward.6} parent=5 // pred_region
      // Predicated region
      $region33: #{hardgam_forward.6} parent=31 // pred_check
        %p232 = pneg %p33
      $region34: #{hardgam_forward.6} parent=31 // pred_check_branch
        %234 = sbr.rel (%p232) target = $region36
      $region35: #{hardgam_forward.6} parent=31 // pred_region
        %s235 = smul.u32 4, %s13
        %p236 = scmp.lt.s32.totalorder %s235, 7
        %s237 = scalar_select %p236, %s235, 7
        %s238 = smul.addr %s237, 2
        %s239 = smul.addr %s238, 8
        %s240 = scalar_lea.vmem %s0, %s239
        %s241 = smul.u32 4, %s13
      $region36: #{hardgam_forward.6} parent=31 // pred_fallthru
        _
      // Predicated region
      $region37: #{hardgam_forward.6} parent=31 // pred_check
        %p242 = pneg %p122
      $region38: #{hardgam_forward.6} parent=31 // pred_check_branch
        %244 = sbr.rel (%p242) target = $region40
      $region39: #{hardgam_forward.6} parent=31 // pred_region
        %s245 = smul.u32 16, %s13
        %p246 = scmp.lt.s32.totalorder %s245, 31
        %s247 = scalar_select %p246, %s245, 31
        %s248 = smul.addr %s247, 8
        %s249 = scalar_lea.vmem %s4, %s248
        %s250 = smul.u32 16, %s13
      $region40: #{hardgam_forward.6} parent=31 // pred_fallthru
        _
      // Predicated region
      $region41: #{hardgam_forward.6} parent=31 // pred_check
        %p251 = pneg %p169
      $region42: #{hardgam_forward.6} parent=31 // pred_check_branch
        %253 = sbr.rel (%p251) target = $region44
      $region43: #{hardgam_forward.6} parent=31 // pred_region
        %s254 = smul.u32 16, %s13
        %p255 = scmp.lt.s32.totalorder %s254, 31
        %s256 = scalar_select %p255, %s254, 31
        %s257 = smul.addr %s256, 8
        %s258 = scalar_lea.vmem %s6, %s257
        %s259 = smul.u32 16, %s13
      $region44: #{hardgam_forward.6} parent=31 // pred_fallthru
        _
    $region32: #{hardgam_forward.6} parent=5 // pred_fallthru
      _
    %p260 = scmp.le.s32.totalorder 1, %s13
    %p261 = scmp.lt.s32.totalorder %s13, 3
    %p262 = pnand %p260, %p261
    %p263 = pneg %p262
    // Predicated region
    $region45: #{hardgam_forward.6} parent=5 // pred_check
      _
    $region46: #{hardgam_forward.6} parent=5 // pred_check_branch
      %265 = sbr.rel (%p262) target = $region48
    $region47: #{hardgam_forward.6} parent=5 // pred_region
      %s266 = ssub.s32 %s13, 1
      %s267 = smul.u32 4, %s18
      %p268 = scmp.lt.s32.totalorder %s267, 7
      %s269 = scalar_select %p268, %s267, 7
      %s270 = smul.addr %s269, 2
      %s271 = smul.addr %s270, 8
      %s272 = scalar_lea.vmem %s0, %s271
      %p273 = pneg %p39
      %p274 = pneg %p36
      %p275 = pneg %p60
      %p276 = pneg %p57
      %p277 = pneg %p81
      %p278 = pneg %p78
      %p279 = pneg %p102
      %p280 = pneg %p99
      %s281 = smul.u32 16, %s18
      %p282 = scmp.lt.s32.totalorder %s281, 31
      %s283 = scalar_select %p282, %s281, 31
      %s284 = smul.addr %s283, 8
      %s285 = scalar_lea.vmem %s4, %s284
      %p286 = pneg %p128
      %p287 = pneg %p125
      %p288 = pneg %p149
      %p289 = pneg %p146
      %s290 = smul.u32 16, %s18
      %p291 = scmp.lt.s32.totalorder %s290, 31
      %s292 = scalar_select %p291, %s290, 31
      %s293 = smul.addr %s292, 8
      %s294 = scalar_lea.vmem %s6, %s293
      %p295 = pneg %p175
      %p296 = pneg %p172
      %p297 = pneg %p201
      %p298 = pneg %p198
      %s299 = smul.u32 16, %s18
      %p300 = scmp.lt.s32.totalorder %s299, 31
      %s301 = scalar_select %p300, %s299, 31
      %s302 = smul.addr %s301, 4
      %s303 = scalar_lea.vmem %s7, %s302
      %s304 = smul.u32 4, %s18
      %p305 = scmp.lt.s32.totalorder %s304, 7
      %s306 = scalar_select %p305, %s304, 7
      %s307 = smul.addr %s306, 2
      %s308 = smul.addr %s307, 8
      %s309 = scalar_lea.vmem %s0, %s308
      %s310 = smul.u32 4, %s18
      %s311 = smul.u32 16, %s18
      %p312 = scmp.lt.s32.totalorder %s311, 31
      %s313 = scalar_select %p312, %s311, 31
      %s314 = smul.addr %s313, 8
      %s315 = scalar_lea.vmem %s4, %s314
      %s316 = smul.u32 16, %s18
      %s317 = smul.u32 16, %s18
      %p318 = scmp.lt.s32.totalorder %s317, 31
      %s319 = scalar_select %p318, %s317, 31
      %s320 = smul.addr %s319, 8
      %s321 = scalar_lea.vmem %s6, %s320
      %s322 = smul.u32 16, %s18
      %s323 = smul.u32 16, %s18
      %p324 = scmp.lt.s32.totalorder %s323, 31
      %s325 = scalar_select %p324, %s323, 31
      %s326 = smul.addr %s325, 4
      %s327 = scalar_lea.vmem %s7, %s326
      %s328 = smul.u32 16, %s18
      %v329 = vld [vmem:[%s309] sm:$0xff]
      %v330 = vld [vmem:[%s309 + $0x8] sm:$0xff]
      %v331 = vld [vmem:[%s309 + $0x10] sm:$0xff]
      %v332 = vld [vmem:[%s309 + $0x18] sm:$0xff]
      %v333 = vld [vmem:[%s309 + $0x20] sm:$0xff]
      %v334 = vld [vmem:[%s309 + $0x28] sm:$0xff]
      %v335 = vld [vmem:[%s309 + $0x30] sm:$0xff]
      %v336 = vld [vmem:[%s309 + $0x38] sm:$0xff]
      %v337 = vunpack.c.0.s8 %v329
      %v338 = vunpack.c.0.s8 %v330
      %v339 = vunpack.c.1.s8 %v329
      %v340 = vunpack.c.1.s8 %v330
      %v341 = vunpack.c.2.s8 %v329
      %v342 = vunpack.c.2.s8 %v330
      %v343 = vunpack.c.3.s8 %v329
      %v344 = vunpack.c.3.s8 %v330
      %v345 = vunpack.c.0.s8 %v331
      %v346 = vunpack.c.0.s8 %v332
      %v347 = vunpack.c.1.s8 %v331
      %v348 = vunpack.c.1.s8 %v332
      %v349 = vunpack.c.2.s8 %v331
      %v350 = vunpack.c.2.s8 %v332
      %v351 = vunpack.c.3.s8 %v331
      %v352 = vunpack.c.3.s8 %v332
      %v353 = vunpack.c.0.s8 %v333
      %v354 = vunpack.c.0.s8 %v334
      %v355 = vunpack.c.1.s8 %v333
      %v356 = vunpack.c.1.s8 %v334
      %v357 = vunpack.c.2.s8 %v333
      %v358 = vunpack.c.2.s8 %v334
      %v359 = vunpack.c.3.s8 %v333
      %v360 = vunpack.c.3.s8 %v334
      %v361 = vunpack.c.0.s8 %v335
      %v362 = vunpack.c.0.s8 %v336
      %v363 = vunpack.c.1.s8 %v335
      %v364 = vunpack.c.1.s8 %v336
      %v365 = vunpack.c.2.s8 %v335
      %v366 = vunpack.c.2.s8 %v336
      %v367 = vunpack.c.3.s8 %v335
      %v368 = vunpack.c.3.s8 %v336
      %v369 = vcvt.s32.f32 %v337
      %v370 = vcvt.s32.f32 %v338
      %v371 = vcvt.s32.f32 %v339
      %v372 = vcvt.s32.f32 %v340
      %v373 = vcvt.s32.f32 %v341
      %v374 = vcvt.s32.f32 %v342
      %v375 = vcvt.s32.f32 %v343
      %v376 = vcvt.s32.f32 %v344
      %v377 = vcvt.s32.f32 %v345
      %v378 = vcvt.s32.f32 %v346
      %v379 = vcvt.s32.f32 %v347
      %v380 = vcvt.s32.f32 %v348
      %v381 = vcvt.s32.f32 %v349
      %v382 = vcvt.s32.f32 %v350
      %v383 = vcvt.s32.f32 %v351
      %v384 = vcvt.s32.f32 %v352
      %v385 = vcvt.s32.f32 %v353
      %v386 = vcvt.s32.f32 %v354
      %v387 = vcvt.s32.f32 %v355
      %v388 = vcvt.s32.f32 %v356
      %v389 = vcvt.s32.f32 %v357
      %v390 = vcvt.s32.f32 %v358
      %v391 = vcvt.s32.f32 %v359
      %v392 = vcvt.s32.f32 %v360
      %v393 = vcvt.s32.f32 %v361
      %v394 = vcvt.s32.f32 %v362
      %v395 = vcvt.s32.f32 %v363
      %v396 = vcvt.s32.f32 %v364
      %v397 = vcvt.s32.f32 %v365
      %v398 = vcvt.s32.f32 %v366
      %v399 = vcvt.s32.f32 %v367
      %v400 = vcvt.s32.f32 %v368
      %v401 = vpack.c.bf16 %v371, %v369
      %v402 = vpack.c.bf16 %v372, %v370
      %v403 = vpack.c.bf16 %v375, %v373
      %v404 = vpack.c.bf16 %v376, %v374
      %v405 = vpack.c.bf16 %v379, %v377
      %v406 = vpack.c.bf16 %v380, %v378
      %v407 = vpack.c.bf16 %v383, %v381
      %v408 = vpack.c.bf16 %v384, %v382
      %v409 = vpack.c.bf16 %v387, %v385
      %v410 = vpack.c.bf16 %v388, %v386
      %v411 = vpack.c.bf16 %v391, %v389
      %v412 = vpack.c.bf16 %v392, %v390
      %v413 = vpack.c.bf16 %v395, %v393
      %v414 = vpack.c.bf16 %v396, %v394
      %v415 = vpack.c.bf16 %v399, %v397
      %v416 = vpack.c.bf16 %v400, %v398
      %v417 = vld [vmem:[%s1] sm:$0xff]
      %v418 = vld [vmem:[%s1 + $0x8] sm:$0xff]
      %v419 = vld [vmem:[%s1 + $0x10] sm:$0xff]
      %v420 = vld [vmem:[%s1 + $0x18] sm:$0xff]
      %v421 = vld [vmem:[%s1 + $0x20] sm:$0xff]
      %v422 = vld [vmem:[%s1 + $0x28] sm:$0xff]
      %v423 = vld [vmem:[%s1 + $0x30] sm:$0xff]
      %v424 = vld [vmem:[%s1 + $0x38] sm:$0xff]
      %v425 = vld [vmem:[%s1 + $0x40] sm:$0xff]
      %v426 = vld [vmem:[%s1 + $0x48] sm:$0xff]
      %v427 = vld [vmem:[%s1 + $0x50] sm:$0xff]
      %v428 = vld [vmem:[%s1 + $0x58] sm:$0xff]
      %v429 = vld [vmem:[%s1 + $0x60] sm:$0xff]
      %v430 = vld [vmem:[%s1 + $0x68] sm:$0xff]
      %v431 = vld [vmem:[%s1 + $0x70] sm:$0xff]
      %v432 = vld [vmem:[%s1 + $0x78] sm:$0xff]
      %v433 = vunpack.c.0.s8 %v417
      %v434 = vunpack.c.0.s8 %v418
      %v435 = vunpack.c.1.s8 %v417
      %v436 = vunpack.c.1.s8 %v418
      %v437 = vunpack.c.2.s8 %v417
      %v438 = vunpack.c.2.s8 %v418
      %v439 = vunpack.c.3.s8 %v417
      %v440 = vunpack.c.3.s8 %v418
      %v441 = vunpack.c.0.s8 %v419
      %v442 = vunpack.c.0.s8 %v420
      %v443 = vunpack.c.1.s8 %v419
      %v444 = vunpack.c.1.s8 %v420
      %v445 = vunpack.c.2.s8 %v419
      %v446 = vunpack.c.2.s8 %v420
      %v447 = vunpack.c.3.s8 %v419
      %v448 = vunpack.c.3.s8 %v420
      %v449 = vunpack.c.0.s8 %v421
      %v450 = vunpack.c.0.s8 %v422
      %v451 = vunpack.c.1.s8 %v421
      %v452 = vunpack.c.1.s8 %v422
      %v453 = vunpack.c.2.s8 %v421
      %v454 = vunpack.c.2.s8 %v422
      %v455 = vunpack.c.3.s8 %v421
      %v456 = vunpack.c.3.s8 %v422
      %v457 = vunpack.c.0.s8 %v423
      %v458 = vunpack.c.0.s8 %v424
      %v459 = vunpack.c.1.s8 %v423
      %v460 = vunpack.c.1.s8 %v424
      %v461 = vunpack.c.2.s8 %v423
      %v462 = vunpack.c.2.s8 %v424
      %v463 = vunpack.c.3.s8 %v423
      %v464 = vunpack.c.3.s8 %v424
      %v465 = vunpack.c.0.s8 %v425
      %v466 = vunpack.c.0.s8 %v426
      %v467 = vunpack.c.1.s8 %v425
      %v468 = vunpack.c.1.s8 %v426
      %v469 = vunpack.c.2.s8 %v425
      %v470 = vunpack.c.2.s8 %v426
      %v471 = vunpack.c.3.s8 %v425
      %v472 = vunpack.c.3.s8 %v426
      %v473 = vunpack.c.0.s8 %v427
      %v474 = vunpack.c.0.s8 %v428
      %v475 = vunpack.c.1.s8 %v427
      %v476 = vunpack.c.1.s8 %v428
      %v477 = vunpack.c.2.s8 %v427
      %v478 = vunpack.c.2.s8 %v428
      %v479 = vunpack.c.3.s8 %v427
      %v480 = vunpack.c.3.s8 %v428
      %v481 = vunpack.c.0.s8 %v429
      %v482 = vunpack.c.0.s8 %v430
      %v483 = vunpack.c.1.s8 %v429
      %v484 = vunpack.c.1.s8 %v430
      %v485 = vunpack.c.2.s8 %v429
      %v486 = vunpack.c.2.s8 %v430
      %v487 = vunpack.c.3.s8 %v429
      %v488 = vunpack.c.3.s8 %v430
      %v489 = vunpack.c.0.s8 %v431
      %v490 = vunpack.c.0.s8 %v432
      %v491 = vunpack.c.1.s8 %v431
      %v492 = vunpack.c.1.s8 %v432
      %v493 = vunpack.c.2.s8 %v431
      %v494 = vunpack.c.2.s8 %v432
      %v495 = vunpack.c.3.s8 %v431
      %v496 = vunpack.c.3.s8 %v432
      %v497 = vcvt.s32.f32 %v433
      %v498 = vcvt.s32.f32 %v434
      %v499 = vcvt.s32.f32 %v435
      %v500 = vcvt.s32.f32 %v436
      %v501 = vcvt.s32.f32 %v437
      %v502 = vcvt.s32.f32 %v438
      %v503 = vcvt.s32.f32 %v439
      %v504 = vcvt.s32.f32 %v440
      %v505 = vcvt.s32.f32 %v441
      %v506 = vcvt.s32.f32 %v442
      %v507 = vcvt.s32.f32 %v443
      %v508 = vcvt.s32.f32 %v444
      %v509 = vcvt.s32.f32 %v445
      %v510 = vcvt.s32.f32 %v446
      %v511 = vcvt.s32.f32 %v447
      %v512 = vcvt.s32.f32 %v448
      %v513 = vcvt.s32.f32 %v449
      %v514 = vcvt.s32.f32 %v450
      %v515 = vcvt.s32.f32 %v451
      %v516 = vcvt.s32.f32 %v452
      %v517 = vcvt.s32.f32 %v453
      %v518 = vcvt.s32.f32 %v454
      %v519 = vcvt.s32.f32 %v455
      %v520 = vcvt.s32.f32 %v456
      %v521 = vcvt.s32.f32 %v457
      %v522 = vcvt.s32.f32 %v458
      %v523 = vcvt.s32.f32 %v459
      %v524 = vcvt.s32.f32 %v460
      %v525 = vcvt.s32.f32 %v461
      %v526 = vcvt.s32.f32 %v462
      %v527 = vcvt.s32.f32 %v463
      %v528 = vcvt.s32.f32 %v464
      %v529 = vcvt.s32.f32 %v465
      %v530 = vcvt.s32.f32 %v466
      %v531 = vcvt.s32.f32 %v467
      %v532 = vcvt.s32.f32 %v468
      %v533 = vcvt.s32.f32 %v469
      %v534 = vcvt.s32.f32 %v470
      %v535 = vcvt.s32.f32 %v471
      %v536 = vcvt.s32.f32 %v472
      %v537 = vcvt.s32.f32 %v473
      %v538 = vcvt.s32.f32 %v474
      %v539 = vcvt.s32.f32 %v475
      %v540 = vcvt.s32.f32 %v476
      %v541 = vcvt.s32.f32 %v477
      %v542 = vcvt.s32.f32 %v478
      %v543 = vcvt.s32.f32 %v479
      %v544 = vcvt.s32.f32 %v480
      %v545 = vcvt.s32.f32 %v481
      %v546 = vcvt.s32.f32 %v482
      %v547 = vcvt.s32.f32 %v483
      %v548 = vcvt.s32.f32 %v484
      %v549 = vcvt.s32.f32 %v485
      %v550 = vcvt.s32.f32 %v486
      %v551 = vcvt.s32.f32 %v487
      %v552 = vcvt.s32.f32 %v488
      %v553 = vcvt.s32.f32 %v489
      %v554 = vcvt.s32.f32 %v490
      %v555 = vcvt.s32.f32 %v491
      %v556 = vcvt.s32.f32 %v492
      %v557 = vcvt.s32.f32 %v493
      %v558 = vcvt.s32.f32 %v494
      %v559 = vcvt.s32.f32 %v495
      %v560 = vcvt.s32.f32 %v496
      %v561 = vpack.c.bf16 %v499, %v497
      %v562 = vpack.c.bf16 %v500, %v498
      %v563 = vpack.c.bf16 %v503, %v501
      %v564 = vpack.c.bf16 %v504, %v502
      %v565 = vpack.c.bf16 %v507, %v505
      %v566 = vpack.c.bf16 %v508, %v506
      %v567 = vpack.c.bf16 %v511, %v509
      %v568 = vpack.c.bf16 %v512, %v510
      %v569 = vpack.c.bf16 %v515, %v513
      %v570 = vpack.c.bf16 %v516, %v514
      %v571 = vpack.c.bf16 %v519, %v517
      %v572 = vpack.c.bf16 %v520, %v518
      %v573 = vpack.c.bf16 %v523, %v521
      %v574 = vpack.c.bf16 %v524, %v522
      %v575 = vpack.c.bf16 %v527, %v525
      %v576 = vpack.c.bf16 %v528, %v526
      %v577 = vpack.c.bf16 %v531, %v529
      %v578 = vpack.c.bf16 %v532, %v530
      %v579 = vpack.c.bf16 %v535, %v533
      %v580 = vpack.c.bf16 %v536, %v534
      %v581 = vpack.c.bf16 %v539, %v537
      %v582 = vpack.c.bf16 %v540, %v538
      %v583 = vpack.c.bf16 %v543, %v541
      %v584 = vpack.c.bf16 %v544, %v542
      %v585 = vpack.c.bf16 %v547, %v545
      %v586 = vpack.c.bf16 %v548, %v546
      %v587 = vpack.c.bf16 %v551, %v549
      %v588 = vpack.c.bf16 %v552, %v550
      %v589 = vpack.c.bf16 %v555, %v553
      %v590 = vpack.c.bf16 %v556, %v554
      %v591 = vpack.c.bf16 %v559, %v557
      %v592 = vpack.c.bf16 %v560, %v558
      %593 = vmatpush.bf16.msra.mxu0 %v575
      %594 = vmatpush.bf16.msra.mxu0 %v573
      %595 = vmatpush.bf16.msra.mxu0 %v571
      %596 = vmatpush.bf16.msra.mxu0 %v569
      %597 = vmatpush.bf16.msra.mxu0 %v567
      %598 = vmatpush.bf16.msra.mxu0 %v565
      %599 = vmatpush.bf16.msra.mxu0 %v563
      %600 = vmatpush.bf16.msra.mxu0 %v561
      %601 = vmatmul.bf16.gmra.mxu0 %v401
      %v602 = vpop.f32.mrf.mxu0
      %v603 = vadd.f32 0.0, %v602
      %v604 = vpop.f32.mrf.mxu0
      %v605 = vadd.f32 0.0, %v604
      %606 = vmatmul.bf16.gmra.mxu0 %v403
      %v607 = vpop.f32.mrf.mxu0
      %v608 = vadd.f32 0.0, %v607
      %v609 = vpop.f32.mrf.mxu0
      %v610 = vadd.f32 0.0, %v609
      %611 = vmatmul.bf16.gmra.mxu0 %v405
      %v612 = vpop.f32.mrf.mxu0
      %v613 = vadd.f32 0.0, %v612
      %v614 = vpop.f32.mrf.mxu0
      %v615 = vadd.f32 0.0, %v614
      %616 = vmatmul.bf16.gmra.mxu0 %v407
      %v617 = vpop.f32.mrf.mxu0
      %v618 = vadd.f32 0.0, %v617
      %v619 = vpop.f32.mrf.mxu0
      %v620 = vadd.f32 0.0, %v619
      %621 = vmatmul.bf16.gmra.mxu0 %v409
      %v622 = vpop.f32.mrf.mxu0
      %v623 = vadd.f32 0.0, %v622
      %v624 = vpop.f32.mrf.mxu0
      %v625 = vadd.f32 0.0, %v624
      %626 = vmatmul.bf16.gmra.mxu0 %v411
      %v627 = vpop.f32.mrf.mxu0
      %v628 = vadd.f32 0.0, %v627
      %v629 = vpop.f32.mrf.mxu0
      %v630 = vadd.f32 0.0, %v629
      %631 = vmatmul.bf16.gmra.mxu0 %v413
      %v632 = vpop.f32.mrf.mxu0
      %v633 = vadd.f32 0.0, %v632
      %v634 = vpop.f32.mrf.mxu0
      %v635 = vadd.f32 0.0, %v634
      %636 = vmatmul.bf16.gmra.mxu0 %v415
      %v637 = vpop.f32.mrf.mxu0
      %v638 = vadd.f32 0.0, %v637
      %v639 = vpop.f32.mrf.mxu0
      %v640 = vadd.f32 0.0, %v639
      %641 = vdwg.mxu0
      %642 = vmatpush.bf16.msra.mxu0 %v591
      %643 = vmatpush.bf16.msra.mxu0 %v589
      %644 = vmatpush.bf16.msra.mxu0 %v587
      %645 = vmatpush.bf16.msra.mxu0 %v585
      %646 = vmatpush.bf16.msra.mxu0 %v583
      %647 = vmatpush.bf16.msra.mxu0 %v581
      %648 = vmatpush.bf16.msra.mxu0 %v579
      %649 = vmatpush.bf16.msra.mxu0 %v577
      %650 = vmatmul.bf16.gmra.mxu0 %v402
      %v651 = vpop.f32.mrf.mxu0
      %v652 = vadd.f32 %v603, %v651
      %v653 = vpop.f32.mrf.mxu0
      %v654 = vadd.f32 %v605, %v653
      %655 = vmatmul.bf16.gmra.mxu0 %v404
      %v656 = vpop.f32.mrf.mxu0
      %v657 = vadd.f32 %v608, %v656
      %v658 = vpop.f32.mrf.mxu0
      %v659 = vadd.f32 %v610, %v658
      %660 = vmatmul.bf16.gmra.mxu0 %v406
      %v661 = vpop.f32.mrf.mxu0
      %v662 = vadd.f32 %v613, %v661
      %v663 = vpop.f32.mrf.mxu0
      %v664 = vadd.f32 %v615, %v663
      %665 = vmatmul.bf16.gmra.mxu0 %v408
      %v666 = vpop.f32.mrf.mxu0
      %v667 = vadd.f32 %v618, %v666
      %v668 = vpop.f32.mrf.mxu0
      %v669 = vadd.f32 %v620, %v668
      %670 = vmatmul.bf16.gmra.mxu0 %v410
      %v671 = vpop.f32.mrf.mxu0
      %v672 = vadd.f32 %v623, %v671
      %v673 = vpop.f32.mrf.mxu0
      %v674 = vadd.f32 %v625, %v673
      %675 = vmatmul.bf16.gmra.mxu0 %v412
      %v676 = vpop.f32.mrf.mxu0
      %v677 = vadd.f32 %v628, %v676
      %v678 = vpop.f32.mrf.mxu0
      %v679 = vadd.f32 %v630, %v678
      %680 = vmatmul.bf16.gmra.mxu0 %v414
      %v681 = vpop.f32.mrf.mxu0
      %v682 = vadd.f32 %v633, %v681
      %v683 = vpop.f32.mrf.mxu0
      %v684 = vadd.f32 %v635, %v683
      %685 = vmatmul.bf16.gmra.mxu0 %v416
      %v686 = vpop.f32.mrf.mxu0
      %v687 = vadd.f32 %v638, %v686
      %v688 = vpop.f32.mrf.mxu0
      %v689 = vadd.f32 %v640, %v688
      %690 = vdwg.mxu0
      %691 = vmatpush.bf16.msra.mxu0 %v576
      %692 = vmatpush.bf16.msra.mxu0 %v574
      %693 = vmatpush.bf16.msra.mxu0 %v572
      %694 = vmatpush.bf16.msra.mxu0 %v570
      %695 = vmatpush.bf16.msra.mxu0 %v568
      %696 = vmatpush.bf16.msra.mxu0 %v566
      %697 = vmatpush.bf16.msra.mxu0 %v564
      %698 = vmatpush.bf16.msra.mxu0 %v562
      %699 = vmatmul.bf16.gmra.mxu0 %v401
      %v700 = vpop.f32.mrf.mxu0
      %v701 = vadd.f32 0.0, %v700
      %v702 = vpop.f32.mrf.mxu0
      %v703 = vadd.f32 0.0, %v702
      %704 = vmatmul.bf16.gmra.mxu0 %v403
      %v705 = vpop.f32.mrf.mxu0
      %v706 = vadd.f32 0.0, %v705
      %v707 = vpop.f32.mrf.mxu0
      %v708 = vadd.f32 0.0, %v707
      %709 = vmatmul.bf16.gmra.mxu0 %v405
      %v710 = vpop.f32.mrf.mxu0
      %v711 = vadd.f32 0.0, %v710
      %v712 = vpop.f32.mrf.mxu0
      %v713 = vadd.f32 0.0, %v712
      %714 = vmatmul.bf16.gmra.mxu0 %v407
      %v715 = vpop.f32.mrf.mxu0
      %v716 = vadd.f32 0.0, %v715
      %v717 = vpop.f32.mrf.mxu0
      %v718 = vadd.f32 0.0, %v717
      %719 = vmatmul.bf16.gmra.mxu0 %v409
      %v720 = vpop.f32.mrf.mxu0
      %v721 = vadd.f32 0.0, %v720
      %v722 = vpop.f32.mrf.mxu0
      %v723 = vadd.f32 0.0, %v722
      %724 = vmatmul.bf16.gmra.mxu0 %v411
      %v725 = vpop.f32.mrf.mxu0
      %v726 = vadd.f32 0.0, %v725
      %v727 = vpop.f32.mrf.mxu0
      %v728 = vadd.f32 0.0, %v727
      %729 = vmatmul.bf16.gmra.mxu0 %v413
      %v730 = vpop.f32.mrf.mxu0
      %v731 = vadd.f32 0.0, %v730
      %v732 = vpop.f32.mrf.mxu0
      %v733 = vadd.f32 0.0, %v732
      %734 = vmatmul.bf16.gmra.mxu0 %v415
      %v735 = vpop.f32.mrf.mxu0
      %v736 = vadd.f32 0.0, %v735
      %v737 = vpop.f32.mrf.mxu0
      %v738 = vadd.f32 0.0, %v737
      %739 = vdwg.mxu0
      %740 = vmatpush.bf16.msra.mxu0 %v592
      %741 = vmatpush.bf16.msra.mxu0 %v590
      %742 = vmatpush.bf16.msra.mxu0 %v588
      %743 = vmatpush.bf16.msra.mxu0 %v586
      %744 = vmatpush.bf16.msra.mxu0 %v584
      %745 = vmatpush.bf16.msra.mxu0 %v582
      %746 = vmatpush.bf16.msra.mxu0 %v580
      %747 = vmatpush.bf16.msra.mxu0 %v578
      %748 = vmatmul.bf16.gmra.mxu0 %v402
      %v749 = vpop.f32.mrf.mxu0
      %v750 = vadd.f32 %v701, %v749
      %v751 = vpop.f32.mrf.mxu0
      %v752 = vadd.f32 %v703, %v751
      %753 = vmatmul.bf16.gmra.mxu0 %v404
      %v754 = vpop.f32.mrf.mxu0
      %v755 = vadd.f32 %v706, %v754
      %v756 = vpop.f32.mrf.mxu0
      %v757 = vadd.f32 %v708, %v756
      %758 = vmatmul.bf16.gmra.mxu0 %v406
      %v759 = vpop.f32.mrf.mxu0
      %v760 = vadd.f32 %v711, %v759
      %v761 = vpop.f32.mrf.mxu0
      %v762 = vadd.f32 %v713, %v761
      %763 = vmatmul.bf16.gmra.mxu0 %v408
      %v764 = vpop.f32.mrf.mxu0
      %v765 = vadd.f32 %v716, %v764
      %v766 = vpop.f32.mrf.mxu0
      %v767 = vadd.f32 %v718, %v766
      %768 = vmatmul.bf16.gmra.mxu0 %v410
      %v769 = vpop.f32.mrf.mxu0
      %v770 = vadd.f32 %v721, %v769
      %v771 = vpop.f32.mrf.mxu0
      %v772 = vadd.f32 %v723, %v771
      %773 = vmatmul.bf16.gmra.mxu0 %v412
      %v774 = vpop.f32.mrf.mxu0
      %v775 = vadd.f32 %v726, %v774
      %v776 = vpop.f32.mrf.mxu0
      %v777 = vadd.f32 %v728, %v776
      %778 = vmatmul.bf16.gmra.mxu0 %v414
      %v779 = vpop.f32.mrf.mxu0
      %v780 = vadd.f32 %v731, %v779
      %v781 = vpop.f32.mrf.mxu0
      %v782 = vadd.f32 %v733, %v781
      %783 = vmatmul.bf16.gmra.mxu0 %v416
      %v784 = vpop.f32.mrf.mxu0
      %v785 = vadd.f32 %v736, %v784
      %v786 = vpop.f32.mrf.mxu0
      %v787 = vadd.f32 %v738, %v786
      %788 = vdwg.mxu0
      %vm789 = vcmp.gt.f32.partialorder %v369, 0.0
      %vm790 = vcmp.gt.f32.partialorder %v370, 0.0
      %vm791 = vcmp.gt.f32.partialorder %v371, 0.0
      %vm792 = vcmp.gt.f32.partialorder %v372, 0.0
      %vm793 = vcmp.gt.f32.partialorder %v373, 0.0
      %vm794 = vcmp.gt.f32.partialorder %v374, 0.0
      %vm795 = vcmp.gt.f32.partialorder %v375, 0.0
      %vm796 = vcmp.gt.f32.partialorder %v376, 0.0
      %vm797 = vcmp.gt.f32.partialorder %v377, 0.0
      %vm798 = vcmp.gt.f32.partialorder %v378, 0.0
      %vm799 = vcmp.gt.f32.partialorder %v379, 0.0
      %vm800 = vcmp.gt.f32.partialorder %v380, 0.0
      %vm801 = vcmp.gt.f32.partialorder %v381, 0.0
      %vm802 = vcmp.gt.f32.partialorder %v382, 0.0
      %vm803 = vcmp.gt.f32.partialorder %v383, 0.0
      %vm804 = vcmp.gt.f32.partialorder %v384, 0.0
      %vm805 = vcmp.gt.f32.partialorder %v385, 0.0
      %vm806 = vcmp.gt.f32.partialorder %v386, 0.0
      %vm807 = vcmp.gt.f32.partialorder %v387, 0.0
      %vm808 = vcmp.gt.f32.partialorder %v388, 0.0
      %vm809 = vcmp.gt.f32.partialorder %v389, 0.0
      %vm810 = vcmp.gt.f32.partialorder %v390, 0.0
      %vm811 = vcmp.gt.f32.partialorder %v391, 0.0
      %vm812 = vcmp.gt.f32.partialorder %v392, 0.0
      %vm813 = vcmp.gt.f32.partialorder %v393, 0.0
      %vm814 = vcmp.gt.f32.partialorder %v394, 0.0
      %vm815 = vcmp.gt.f32.partialorder %v395, 0.0
      %vm816 = vcmp.gt.f32.partialorder %v396, 0.0
      %vm817 = vcmp.gt.f32.partialorder %v397, 0.0
      %vm818 = vcmp.gt.f32.partialorder %v398, 0.0
      %vm819 = vcmp.gt.f32.partialorder %v399, 0.0
      %vm820 = vcmp.gt.f32.partialorder %v400, 0.0
      %vm821 = vcmp.lt.f32.partialorder %v652, 4.0
      %vm822 = vcmp.lt.f32.partialorder %v750, 4.0
      %vm823 = vcmp.lt.f32.partialorder %v654, 4.0
      %vm824 = vcmp.lt.f32.partialorder %v752, 4.0
      %vm825 = vcmp.lt.f32.partialorder %v657, 4.0
      %vm826 = vcmp.lt.f32.partialorder %v755, 4.0
      %vm827 = vcmp.lt.f32.partialorder %v659, 4.0
      %vm828 = vcmp.lt.f32.partialorder %v757, 4.0
      %vm829 = vcmp.lt.f32.partialorder %v662, 4.0
      %vm830 = vcmp.lt.f32.partialorder %v760, 4.0
      %vm831 = vcmp.lt.f32.partialorder %v664, 4.0
      %vm832 = vcmp.lt.f32.partialorder %v762, 4.0
      %vm833 = vcmp.lt.f32.partialorder %v667, 4.0
      %vm834 = vcmp.lt.f32.partialorder %v765, 4.0
      %vm835 = vcmp.lt.f32.partialorder %v669, 4.0
      %vm836 = vcmp.lt.f32.partialorder %v767, 4.0
      %vm837 = vcmp.lt.f32.partialorder %v672, 4.0
      %vm838 = vcmp.lt.f32.partialorder %v770, 4.0
      %vm839 = vcmp.lt.f32.partialorder %v674, 4.0
      %vm840 = vcmp.lt.f32.partialorder %v772, 4.0
      %vm841 = vcmp.lt.f32.partialorder %v677, 4.0
      %vm842 = vcmp.lt.f32.partialorder %v775, 4.0
      %vm843 = vcmp.lt.f32.partialorder %v679, 4.0
      %vm844 = vcmp.lt.f32.partialorder %v777, 4.0
      %vm845 = vcmp.lt.f32.partialorder %v682, 4.0
      %vm846 = vcmp.lt.f32.partialorder %v780, 4.0
      %vm847 = vcmp.lt.f32.partialorder %v684, 4.0
      %vm848 = vcmp.lt.f32.partialorder %v782, 4.0
      %vm849 = vcmp.lt.f32.partialorder %v687, 4.0
      %vm850 = vcmp.lt.f32.partialorder %v785, 4.0
      %vm851 = vcmp.lt.f32.partialorder %v689, 4.0
      %vm852 = vcmp.lt.f32.partialorder %v787, 4.0
      %vm853 = vmand %vm789, %vm821
      %vm854 = vmand %vm790, %vm822
      %vm855 = vmand %vm791, %vm823
      %vm856 = vmand %vm792, %vm824
      %vm857 = vmand %vm793, %vm825
      %vm858 = vmand %vm794, %vm826
      %vm859 = vmand %vm795, %vm827
      %vm860 = vmand %vm796, %vm828
      %vm861 = vmand %vm797, %vm829
      %vm862 = vmand %vm798, %vm830
      %vm863 = vmand %vm799, %vm831
      %vm864 = vmand %vm800, %vm832
      %vm865 = vmand %vm801, %vm833
      %vm866 = vmand %vm802, %vm834
      %vm867 = vmand %vm803, %vm835
      %vm868 = vmand %vm804, %vm836
      %vm869 = vmand %vm805, %vm837
      %vm870 = vmand %vm806, %vm838
      %vm871 = vmand %vm807, %vm839
      %vm872 = vmand %vm808, %vm840
      %vm873 = vmand %vm809, %vm841
      %vm874 = vmand %vm810, %vm842
      %vm875 = vmand %vm811, %vm843
      %vm876 = vmand %vm812, %vm844
      %vm877 = vmand %vm813, %vm845
      %vm878 = vmand %vm814, %vm846
      %vm879 = vmand %vm815, %vm847
      %vm880 = vmand %vm816, %vm848
      %vm881 = vmand %vm817, %vm849
      %vm882 = vmand %vm818, %vm850
      %vm883 = vmand %vm819, %vm851
      %vm884 = vmand %vm820, %vm852
      %v885 = vsel %vm853, 1.0, 0.0
      %v886 = vsel %vm854, 1.0, 0.0
      %v887 = vsel %vm855, 1.0, 0.0
      %v888 = vsel %vm856, 1.0, 0.0
      %v889 = vsel %vm857, 1.0, 0.0
      %v890 = vsel %vm858, 1.0, 0.0
      %v891 = vsel %vm859, 1.0, 0.0
      %v892 = vsel %vm860, 1.0, 0.0
      %v893 = vsel %vm861, 1.0, 0.0
      %v894 = vsel %vm862, 1.0, 0.0
      %v895 = vsel %vm863, 1.0, 0.0
      %v896 = vsel %vm864, 1.0, 0.0
      %v897 = vsel %vm865, 1.0, 0.0
      %v898 = vsel %vm866, 1.0, 0.0
      %v899 = vsel %vm867, 1.0, 0.0
      %v900 = vsel %vm868, 1.0, 0.0
      %v901 = vsel %vm869, 1.0, 0.0
      %v902 = vsel %vm870, 1.0, 0.0
      %v903 = vsel %vm871, 1.0, 0.0
      %v904 = vsel %vm872, 1.0, 0.0
      %v905 = vsel %vm873, 1.0, 0.0
      %v906 = vsel %vm874, 1.0, 0.0
      %v907 = vsel %vm875, 1.0, 0.0
      %v908 = vsel %vm876, 1.0, 0.0
      %v909 = vsel %vm877, 1.0, 0.0
      %v910 = vsel %vm878, 1.0, 0.0
      %v911 = vsel %vm879, 1.0, 0.0
      %v912 = vsel %vm880, 1.0, 0.0
      %v913 = vsel %vm881, 1.0, 0.0
      %v914 = vsel %vm882, 1.0, 0.0
      %v915 = vsel %vm883, 1.0, 0.0
      %v916 = vsel %vm884, 1.0, 0.0
      %v917 = vld [vmem:[%s3] sm:$0x3]
      %v918 = vld [vmem:[%s315] sm:$0xff]
      %v919 = vld [vmem:[%s315 + $0x8] sm:$0xff]
      %v920 = vld [vmem:[%s315 + $0x10] sm:$0xff]
      %v921 = vld [vmem:[%s315 + $0x18] sm:$0xff]
      %v922 = vld [vmem:[%s315 + $0x20] sm:$0xff]
      %v923 = vld [vmem:[%s315 + $0x28] sm:$0xff]
      %v924 = vld [vmem:[%s315 + $0x30] sm:$0xff]
      %v925 = vld [vmem:[%s315 + $0x38] sm:$0xff]
      %v926 = vld [vmem:[%s315 + $0x40] sm:$0xff]
      %v927 = vld [vmem:[%s315 + $0x48] sm:$0xff]
      %v928 = vld [vmem:[%s315 + $0x50] sm:$0xff]
      %v929 = vld [vmem:[%s315 + $0x58] sm:$0xff]
      %v930 = vld [vmem:[%s315 + $0x60] sm:$0xff]
      %v931 = vld [vmem:[%s315 + $0x68] sm:$0xff]
      %v932 = vld [vmem:[%s315 + $0x70] sm:$0xff]
      %v933 = vld [vmem:[%s315 + $0x78] sm:$0xff]
      %v935 = vperm.slane %v917, 0
      %v936 = vperm.slane %v917, 1
      %940 = vset.pattern.permute.xlu0 0
      %941 = vperm.xlu0 %940, %v918
      %v942 = vpop.permute.xlu0 %941
      %945 = vset.pattern.permute.xlu0 0
      %946 = vperm.xlu0 %945, %v919
      %v947 = vpop.permute.xlu0 %946
      %950 = vset.pattern.permute.xlu0 0
      %951 = vperm.xlu0 %950, %v920
      %v952 = vpop.permute.xlu0 %951
      %955 = vset.pattern.permute.xlu0 0
      %956 = vperm.xlu0 %955, %v921
      %v957 = vpop.permute.xlu0 %956
      %960 = vset.pattern.permute.xlu0 0
      %961 = vperm.xlu0 %960, %v922
      %v962 = vpop.permute.xlu0 %961
      %965 = vset.pattern.permute.xlu0 0
      %966 = vperm.xlu0 %965, %v923
      %v967 = vpop.permute.xlu0 %966
      %970 = vset.pattern.permute.xlu0 0
      %971 = vperm.xlu0 %970, %v924
      %v972 = vpop.permute.xlu0 %971
      %975 = vset.pattern.permute.xlu0 0
      %976 = vperm.xlu0 %975, %v925
      %v977 = vpop.permute.xlu0 %976
      %980 = vset.pattern.permute.xlu0 0
      %981 = vperm.xlu0 %980, %v926
      %v982 = vpop.permute.xlu0 %981
      %985 = vset.pattern.permute.xlu0 0
      %986 = vperm.xlu0 %985, %v927
      %v987 = vpop.permute.xlu0 %986
      %990 = vset.pattern.permute.xlu0 0
      %991 = vperm.xlu0 %990, %v928
      %v992 = vpop.permute.xlu0 %991
      %995 = vset.pattern.permute.xlu0 0
      %996 = vperm.xlu0 %995, %v929
      %v997 = vpop.permute.xlu0 %996
      %1000 = vset.pattern.permute.xlu0 0
      %1001 = vperm.xlu0 %1000, %v930
      %v1002 = vpop.permute.xlu0 %1001
      %1005 = vset.pattern.permute.xlu0 0
      %1006 = vperm.xlu0 %1005, %v931
      %v1007 = vpop.permute.xlu0 %1006
      %1010 = vset.pattern.permute.xlu0 0
      %1011 = vperm.xlu0 %1010, %v932
      %v1012 = vpop.permute.xlu0 %1011
      %1015 = vset.pattern.permute.xlu0 0
      %1016 = vperm.xlu0 %1015, %v933
      %v1017 = vpop.permute.xlu0 %1016
      %v1019 = vadd.f32 %v935, %v942
      %v1020 = vadd.f32 %v936, %v942
      %v1021 = vadd.f32 %v935, %v947
      %v1022 = vadd.f32 %v936, %v947
      %v1023 = vadd.f32 %v935, %v952
      %v1024 = vadd.f32 %v936, %v952
      %v1025 = vadd.f32 %v935, %v957
      %v1026 = vadd.f32 %v936, %v957
      %v1027 = vadd.f32 %v935, %v962
      %v1028 = vadd.f32 %v936, %v962
      %v1029 = vadd.f32 %v935, %v967
      %v1030 = vadd.f32 %v936, %v967
      %v1031 = vadd.f32 %v935, %v972
      %v1032 = vadd.f32 %v936, %v972
      %v1033 = vadd.f32 %v935, %v977
      %v1034 = vadd.f32 %v936, %v977
      %v1035 = vadd.f32 %v935, %v982
      %v1036 = vadd.f32 %v936, %v982
      %v1037 = vadd.f32 %v935, %v987
      %v1038 = vadd.f32 %v936, %v987
      %v1039 = vadd.f32 %v935, %v992
      %v1040 = vadd.f32 %v936, %v992
      %v1041 = vadd.f32 %v935, %v997
      %v1042 = vadd.f32 %v936, %v997
      %v1043 = vadd.f32 %v935, %v1002
      %v1044 = vadd.f32 %v936, %v1002
      %v1045 = vadd.f32 %v935, %v1007
      %v1046 = vadd.f32 %v936, %v1007
      %v1047 = vadd.f32 %v935, %v1012
      %v1048 = vadd.f32 %v936, %v1012
      %v1049 = vadd.f32 %v935, %v1017
      %v1050 = vadd.f32 %v936, %v1017
      %vm1051 = vcmp.gt.f32.partialorder %v1019, 0.0
      %vm1052 = vcmp.gt.f32.partialorder %v1020, 0.0
      %vm1053 = vcmp.gt.f32.partialorder %v1021, 0.0
      %vm1054 = vcmp.gt.f32.partialorder %v1022, 0.0
      %vm1055 = vcmp.gt.f32.partialorder %v1023, 0.0
      %vm1056 = vcmp.gt.f32.partialorder %v1024, 0.0
      %vm1057 = vcmp.gt.f32.partialorder %v1025, 0.0
      %vm1058 = vcmp.gt.f32.partialorder %v1026, 0.0
      %vm1059 = vcmp.gt.f32.partialorder %v1027, 0.0
      %vm1060 = vcmp.gt.f32.partialorder %v1028, 0.0
      %vm1061 = vcmp.gt.f32.partialorder %v1029, 0.0
      %vm1062 = vcmp.gt.f32.partialorder %v1030, 0.0
      %vm1063 = vcmp.gt.f32.partialorder %v1031, 0.0
      %vm1064 = vcmp.gt.f32.partialorder %v1032, 0.0
      %vm1065 = vcmp.gt.f32.partialorder %v1033, 0.0
      %vm1066 = vcmp.gt.f32.partialorder %v1034, 0.0
      %vm1067 = vcmp.gt.f32.partialorder %v1035, 0.0
      %vm1068 = vcmp.gt.f32.partialorder %v1036, 0.0
      %vm1069 = vcmp.gt.f32.partialorder %v1037, 0.0
      %vm1070 = vcmp.gt.f32.partialorder %v1038, 0.0
      %vm1071 = vcmp.gt.f32.partialorder %v1039, 0.0
      %vm1072 = vcmp.gt.f32.partialorder %v1040, 0.0
      %vm1073 = vcmp.gt.f32.partialorder %v1041, 0.0
      %vm1074 = vcmp.gt.f32.partialorder %v1042, 0.0
      %vm1075 = vcmp.gt.f32.partialorder %v1043, 0.0
      %vm1076 = vcmp.gt.f32.partialorder %v1044, 0.0
      %vm1077 = vcmp.gt.f32.partialorder %v1045, 0.0
      %vm1078 = vcmp.gt.f32.partialorder %v1046, 0.0
      %vm1079 = vcmp.gt.f32.partialorder %v1047, 0.0
      %vm1080 = vcmp.gt.f32.partialorder %v1048, 0.0
      %vm1081 = vcmp.gt.f32.partialorder %v1049, 0.0
      %vm1082 = vcmp.gt.f32.partialorder %v1050, 0.0
      %v1083 = vmul.f32 %v1019, 0.2
      %v1084 = vmul.f32 %v1020, 0.2
      %v1085 = vmul.f32 %v1021, 0.2
      %v1086 = vmul.f32 %v1022, 0.2
      %v1087 = vmul.f32 %v1023, 0.2
      %v1088 = vmul.f32 %v1024, 0.2
      %v1089 = vmul.f32 %v1025, 0.2
      %v1090 = vmul.f32 %v1026, 0.2
      %v1091 = vmul.f32 %v1027, 0.2
      %v1092 = vmul.f32 %v1028, 0.2
      %v1093 = vmul.f32 %v1029, 0.2
      %v1094 = vmul.f32 %v1030, 0.2
      %v1095 = vmul.f32 %v1031, 0.2
      %v1096 = vmul.f32 %v1032, 0.2
      %v1097 = vmul.f32 %v1033, 0.2
      %v1098 = vmul.f32 %v1034, 0.2
      %v1099 = vmul.f32 %v1035, 0.2
      %v1100 = vmul.f32 %v1036, 0.2
      %v1101 = vmul.f32 %v1037, 0.2
      %v1102 = vmul.f32 %v1038, 0.2
      %v1103 = vmul.f32 %v1039, 0.2
      %v1104 = vmul.f32 %v1040, 0.2
      %v1105 = vmul.f32 %v1041, 0.2
      %v1106 = vmul.f32 %v1042, 0.2
      %v1107 = vmul.f32 %v1043, 0.2
      %v1108 = vmul.f32 %v1044, 0.2
      %v1109 = vmul.f32 %v1045, 0.2
      %v1110 = vmul.f32 %v1046, 0.2
      %v1111 = vmul.f32 %v1047, 0.2
      %v1112 = vmul.f32 %v1048, 0.2
      %v1113 = vmul.f32 %v1049, 0.2
      %v1114 = vmul.f32 %v1050, 0.2
      %v1115 = vsel %vm1051, %v1019, %v1083
      %v1116 = vsel %vm1052, %v1020, %v1084
      %v1117 = vsel %vm1053, %v1021, %v1085
      %v1118 = vsel %vm1054, %v1022, %v1086
      %v1119 = vsel %vm1055, %v1023, %v1087
      %v1120 = vsel %vm1056, %v1024, %v1088
      %v1121 = vsel %vm1057, %v1025, %v1089
      %v1122 = vsel %vm1058, %v1026, %v1090
      %v1123 = vsel %vm1059, %v1027, %v1091
      %v1124 = vsel %vm1060, %v1028, %v1092
      %v1125 = vsel %vm1061, %v1029, %v1093
      %v1126 = vsel %vm1062, %v1030, %v1094
      %v1127 = vsel %vm1063, %v1031, %v1095
      %v1128 = vsel %vm1064, %v1032, %v1096
      %v1129 = vsel %vm1065, %v1033, %v1097
      %v1130 = vsel %vm1066, %v1034, %v1098
      %v1131 = vsel %vm1067, %v1035, %v1099
      %v1132 = vsel %vm1068, %v1036, %v1100
      %v1133 = vsel %vm1069, %v1037, %v1101
      %v1134 = vsel %vm1070, %v1038, %v1102
      %v1135 = vsel %vm1071, %v1039, %v1103
      %v1136 = vsel %vm1072, %v1040, %v1104
      %v1137 = vsel %vm1073, %v1041, %v1105
      %v1138 = vsel %vm1074, %v1042, %v1106
      %v1139 = vsel %vm1075, %v1043, %v1107
      %v1140 = vsel %vm1076, %v1044, %v1108
      %v1141 = vsel %vm1077, %v1045, %v1109
      %v1142 = vsel %vm1078, %v1046, %v1110
      %v1143 = vsel %vm1079, %v1047, %v1111
      %v1144 = vsel %vm1080, %v1048, %v1112
      %v1145 = vsel %vm1081, %v1049, %v1113
      %v1146 = vsel %vm1082, %v1050, %v1114
      %v1147 = vmul.f32 %v1115, %v885
      %v1148 = vmul.f32 %v1116, %v886
      %v1149 = vmul.f32 %v1117, %v887
      %v1150 = vmul.f32 %v1118, %v888
      %v1151 = vmul.f32 %v1119, %v889
      %v1152 = vmul.f32 %v1120, %v890
      %v1153 = vmul.f32 %v1121, %v891
      %v1154 = vmul.f32 %v1122, %v892
      %v1155 = vmul.f32 %v1123, %v893
      %v1156 = vmul.f32 %v1124, %v894
      %v1157 = vmul.f32 %v1125, %v895
      %v1158 = vmul.f32 %v1126, %v896
      %v1159 = vmul.f32 %v1127, %v897
      %v1160 = vmul.f32 %v1128, %v898
      %v1161 = vmul.f32 %v1129, %v899
      %v1162 = vmul.f32 %v1130, %v900
      %v1163 = vmul.f32 %v1131, %v901
      %v1164 = vmul.f32 %v1132, %v902
      %v1165 = vmul.f32 %v1133, %v903
      %v1166 = vmul.f32 %v1134, %v904
      %v1167 = vmul.f32 %v1135, %v905
      %v1168 = vmul.f32 %v1136, %v906
      %v1169 = vmul.f32 %v1137, %v907
      %v1170 = vmul.f32 %v1138, %v908
      %v1171 = vmul.f32 %v1139, %v909
      %v1172 = vmul.f32 %v1140, %v910
      %v1173 = vmul.f32 %v1141, %v911
      %v1174 = vmul.f32 %v1142, %v912
      %v1175 = vmul.f32 %v1143, %v913
      %v1176 = vmul.f32 %v1144, %v914
      %v1177 = vmul.f32 %v1145, %v915
      %v1178 = vmul.f32 %v1146, %v916
      %v1179 = vsub.f32 %v885, 1.0
      %v1180 = vsub.f32 %v886, 1.0
      %v1181 = vsub.f32 %v887, 1.0
      %v1182 = vsub.f32 %v888, 1.0
      %v1183 = vsub.f32 %v889, 1.0
      %v1184 = vsub.f32 %v890, 1.0
      %v1185 = vsub.f32 %v891, 1.0
      %v1186 = vsub.f32 %v892, 1.0
      %v1187 = vsub.f32 %v893, 1.0
      %v1188 = vsub.f32 %v894, 1.0
      %v1189 = vsub.f32 %v895, 1.0
      %v1190 = vsub.f32 %v896, 1.0
      %v1191 = vsub.f32 %v897, 1.0
      %v1192 = vsub.f32 %v898, 1.0
      %v1193 = vsub.f32 %v899, 1.0
      %v1194 = vsub.f32 %v900, 1.0
      %v1195 = vsub.f32 %v901, 1.0
      %v1196 = vsub.f32 %v902, 1.0
      %v1197 = vsub.f32 %v903, 1.0
      %v1198 = vsub.f32 %v904, 1.0
      %v1199 = vsub.f32 %v905, 1.0
      %v1200 = vsub.f32 %v906, 1.0
      %v1201 = vsub.f32 %v907, 1.0
      %v1202 = vsub.f32 %v908, 1.0
      %v1203 = vsub.f32 %v909, 1.0
      %v1204 = vsub.f32 %v910, 1.0
      %v1205 = vsub.f32 %v911, 1.0
      %v1206 = vsub.f32 %v912, 1.0
      %v1207 = vsub.f32 %v913, 1.0
      %v1208 = vsub.f32 %v914, 1.0
      %v1209 = vsub.f32 %v915, 1.0
      %v1210 = vsub.f32 %v916, 1.0
      %v1211 = vmul.f32 %v1179, 1e+30
      %v1212 = vmul.f32 %v1180, 1e+30
      %v1213 = vmul.f32 %v1181, 1e+30
      %v1214 = vmul.f32 %v1182, 1e+30
      %v1215 = vmul.f32 %v1183, 1e+30
      %v1216 = vmul.f32 %v1184, 1e+30
      %v1217 = vmul.f32 %v1185, 1e+30
      %v1218 = vmul.f32 %v1186, 1e+30
      %v1219 = vmul.f32 %v1187, 1e+30
      %v1220 = vmul.f32 %v1188, 1e+30
      %v1221 = vmul.f32 %v1189, 1e+30
      %v1222 = vmul.f32 %v1190, 1e+30
      %v1223 = vmul.f32 %v1191, 1e+30
      %v1224 = vmul.f32 %v1192, 1e+30
      %v1225 = vmul.f32 %v1193, 1e+30
      %v1226 = vmul.f32 %v1194, 1e+30
      %v1227 = vmul.f32 %v1195, 1e+30
      %v1228 = vmul.f32 %v1196, 1e+30
      %v1229 = vmul.f32 %v1197, 1e+30
      %v1230 = vmul.f32 %v1198, 1e+30
      %v1231 = vmul.f32 %v1199, 1e+30
      %v1232 = vmul.f32 %v1200, 1e+30
      %v1233 = vmul.f32 %v1201, 1e+30
      %v1234 = vmul.f32 %v1202, 1e+30
      %v1235 = vmul.f32 %v1203, 1e+30
      %v1236 = vmul.f32 %v1204, 1e+30
      %v1237 = vmul.f32 %v1205, 1e+30
      %v1238 = vmul.f32 %v1206, 1e+30
      %v1239 = vmul.f32 %v1207, 1e+30
      %v1240 = vmul.f32 %v1208, 1e+30
      %v1241 = vmul.f32 %v1209, 1e+30
      %v1242 = vmul.f32 %v1210, 1e+30
      %v1243 = vadd.f32 %v1147, %v1211
      %v1244 = vadd.f32 %v1148, %v1212
      %v1245 = vadd.f32 %v1149, %v1213
      %v1246 = vadd.f32 %v1150, %v1214
      %v1247 = vadd.f32 %v1151, %v1215
      %v1248 = vadd.f32 %v1152, %v1216
      %v1249 = vadd.f32 %v1153, %v1217
      %v1250 = vadd.f32 %v1154, %v1218
      %v1251 = vadd.f32 %v1155, %v1219
      %v1252 = vadd.f32 %v1156, %v1220
      %v1253 = vadd.f32 %v1157, %v1221
      %v1254 = vadd.f32 %v1158, %v1222
      %v1255 = vadd.f32 %v1159, %v1223
      %v1256 = vadd.f32 %v1160, %v1224
      %v1257 = vadd.f32 %v1161, %v1225
      %v1258 = vadd.f32 %v1162, %v1226
      %v1259 = vadd.f32 %v1163, %v1227
      %v1260 = vadd.f32 %v1164, %v1228
      %v1261 = vadd.f32 %v1165, %v1229
      %v1262 = vadd.f32 %v1166, %v1230
      %v1263 = vadd.f32 %v1167, %v1231
      %v1264 = vadd.f32 %v1168, %v1232
      %v1265 = vadd.f32 %v1169, %v1233
      %v1266 = vadd.f32 %v1170, %v1234
      %v1267 = vadd.f32 %v1171, %v1235
      %v1268 = vadd.f32 %v1172, %v1236
      %v1269 = vadd.f32 %v1173, %v1237
      %v1270 = vadd.f32 %v1174, %v1238
      %v1271 = vadd.f32 %v1175, %v1239
      %v1272 = vadd.f32 %v1176, %v1240
      %v1273 = vadd.f32 %v1177, %v1241
      %v1274 = vadd.f32 %v1178, %v1242
      %v1275 = vmax.f32 %v1243, %v1244
      %1276 = vmax.xlane.f32.xlu0 %v1275
      %v1277 = vpop.xlane.xlu0 %1276
      %v1278 = vmax.f32 %v1245, %v1246
      %1279 = vmax.xlane.f32.xlu0 %v1278
      %v1280 = vpop.xlane.xlu0 %1279
      %v1281 = vmax.f32 %v1247, %v1248
      %1282 = vmax.xlane.f32.xlu0 %v1281
      %v1283 = vpop.xlane.xlu0 %1282
      %v1284 = vmax.f32 %v1249, %v1250
      %1285 = vmax.xlane.f32.xlu0 %v1284
      %v1286 = vpop.xlane.xlu0 %1285
      %v1287 = vmax.f32 %v1251, %v1252
      %1288 = vmax.xlane.f32.xlu0 %v1287
      %v1289 = vpop.xlane.xlu0 %1288
      %v1290 = vmax.f32 %v1253, %v1254
      %1291 = vmax.xlane.f32.xlu0 %v1290
      %v1292 = vpop.xlane.xlu0 %1291
      %v1293 = vmax.f32 %v1255, %v1256
      %1294 = vmax.xlane.f32.xlu0 %v1293
      %v1295 = vpop.xlane.xlu0 %1294
      %v1296 = vmax.f32 %v1257, %v1258
      %1297 = vmax.xlane.f32.xlu0 %v1296
      %v1298 = vpop.xlane.xlu0 %1297
      %v1299 = vmax.f32 %v1259, %v1260
      %1300 = vmax.xlane.f32.xlu0 %v1299
      %v1301 = vpop.xlane.xlu0 %1300
      %v1302 = vmax.f32 %v1261, %v1262
      %1303 = vmax.xlane.f32.xlu0 %v1302
      %v1304 = vpop.xlane.xlu0 %1303
      %v1305 = vmax.f32 %v1263, %v1264
      %1306 = vmax.xlane.f32.xlu0 %v1305
      %v1307 = vpop.xlane.xlu0 %1306
      %v1308 = vmax.f32 %v1265, %v1266
      %1309 = vmax.xlane.f32.xlu0 %v1308
      %v1310 = vpop.xlane.xlu0 %1309
      %v1311 = vmax.f32 %v1267, %v1268
      %1312 = vmax.xlane.f32.xlu0 %v1311
      %v1313 = vpop.xlane.xlu0 %1312
      %v1314 = vmax.f32 %v1269, %v1270
      %1315 = vmax.xlane.f32.xlu0 %v1314
      %v1316 = vpop.xlane.xlu0 %1315
      %v1317 = vmax.f32 %v1271, %v1272
      %1318 = vmax.xlane.f32.xlu0 %v1317
      %v1319 = vpop.xlane.xlu0 %1318
      %v1320 = vmax.f32 %v1273, %v1274
      %1321 = vmax.xlane.f32.xlu0 %v1320
      %v1322 = vpop.xlane.xlu0 %1321
      %vm1323 = vcmp.lt.f32.partialorder %v1277, -5e+29
      %vm1324 = vcmp.lt.f32.partialorder %v1280, -5e+29
      %vm1325 = vcmp.lt.f32.partialorder %v1283, -5e+29
      %vm1326 = vcmp.lt.f32.partialorder %v1286, -5e+29
      %vm1327 = vcmp.lt.f32.partialorder %v1289, -5e+29
      %vm1328 = vcmp.lt.f32.partialorder %v1292, -5e+29
      %vm1329 = vcmp.lt.f32.partialorder %v1295, -5e+29
      %vm1330 = vcmp.lt.f32.partialorder %v1298, -5e+29
      %vm1331 = vcmp.lt.f32.partialorder %v1301, -5e+29
      %vm1332 = vcmp.lt.f32.partialorder %v1304, -5e+29
      %vm1333 = vcmp.lt.f32.partialorder %v1307, -5e+29
      %vm1334 = vcmp.lt.f32.partialorder %v1310, -5e+29
      %vm1335 = vcmp.lt.f32.partialorder %v1313, -5e+29
      %vm1336 = vcmp.lt.f32.partialorder %v1316, -5e+29
      %vm1337 = vcmp.lt.f32.partialorder %v1319, -5e+29
      %vm1338 = vcmp.lt.f32.partialorder %v1322, -5e+29
      %v1339 = vsel %vm1323, 0.0, %v1277
      %v1340 = vsel %vm1324, 0.0, %v1280
      %v1341 = vsel %vm1325, 0.0, %v1283
      %v1342 = vsel %vm1326, 0.0, %v1286
      %v1343 = vsel %vm1327, 0.0, %v1289
      %v1344 = vsel %vm1328, 0.0, %v1292
      %v1345 = vsel %vm1329, 0.0, %v1295
      %v1346 = vsel %vm1330, 0.0, %v1298
      %v1347 = vsel %vm1331, 0.0, %v1301
      %v1348 = vsel %vm1332, 0.0, %v1304
      %v1349 = vsel %vm1333, 0.0, %v1307
      %v1350 = vsel %vm1334, 0.0, %v1310
      %v1351 = vsel %vm1335, 0.0, %v1313
      %v1352 = vsel %vm1336, 0.0, %v1316
      %v1353 = vsel %vm1337, 0.0, %v1319
      %v1354 = vsel %vm1338, 0.0, %v1322
      %v1355 = vsub.f32 %v1115, %v1339
      %v1356 = vsub.f32 %v1116, %v1339
      %v1357 = vsub.f32 %v1117, %v1340
      %v1358 = vsub.f32 %v1118, %v1340
      %v1359 = vsub.f32 %v1119, %v1341
      %v1360 = vsub.f32 %v1120, %v1341
      %v1361 = vsub.f32 %v1121, %v1342
      %v1362 = vsub.f32 %v1122, %v1342
      %v1363 = vsub.f32 %v1123, %v1343
      %v1364 = vsub.f32 %v1124, %v1343
      %v1365 = vsub.f32 %v1125, %v1344
      %v1366 = vsub.f32 %v1126, %v1344
      %v1367 = vsub.f32 %v1127, %v1345
      %v1368 = vsub.f32 %v1128, %v1345
      %v1369 = vsub.f32 %v1129, %v1346
      %v1370 = vsub.f32 %v1130, %v1346
      %v1371 = vsub.f32 %v1131, %v1347
      %v1372 = vsub.f32 %v1132, %v1347
      %v1373 = vsub.f32 %v1133, %v1348
      %v1374 = vsub.f32 %v1134, %v1348
      %v1375 = vsub.f32 %v1135, %v1349
      %v1376 = vsub.f32 %v1136, %v1349
      %v1377 = vsub.f32 %v1137, %v1350
      %v1378 = vsub.f32 %v1138, %v1350
      %v1379 = vsub.f32 %v1139, %v1351
      %v1380 = vsub.f32 %v1140, %v1351
      %v1381 = vsub.f32 %v1141, %v1352
      %v1382 = vsub.f32 %v1142, %v1352
      %v1383 = vsub.f32 %v1143, %v1353
      %v1384 = vsub.f32 %v1144, %v1353
      %v1385 = vsub.f32 %v1145, %v1354
      %v1386 = vsub.f32 %v1146, %v1354
      %v1387 = vmin.f32 %v1355, 0.0
      %v1388 = vmin.f32 %v1356, 0.0
      %v1389 = vmin.f32 %v1357, 0.0
      %v1390 = vmin.f32 %v1358, 0.0
      %v1391 = vmin.f32 %v1359, 0.0
      %v1392 = vmin.f32 %v1360, 0.0
      %v1393 = vmin.f32 %v1361, 0.0
      %v1394 = vmin.f32 %v1362, 0.0
      %v1395 = vmin.f32 %v1363, 0.0
      %v1396 = vmin.f32 %v1364, 0.0
      %v1397 = vmin.f32 %v1365, 0.0
      %v1398 = vmin.f32 %v1366, 0.0
      %v1399 = vmin.f32 %v1367, 0.0
      %v1400 = vmin.f32 %v1368, 0.0
      %v1401 = vmin.f32 %v1369, 0.0
      %v1402 = vmin.f32 %v1370, 0.0
      %v1403 = vmin.f32 %v1371, 0.0
      %v1404 = vmin.f32 %v1372, 0.0
      %v1405 = vmin.f32 %v1373, 0.0
      %v1406 = vmin.f32 %v1374, 0.0
      %v1407 = vmin.f32 %v1375, 0.0
      %v1408 = vmin.f32 %v1376, 0.0
      %v1409 = vmin.f32 %v1377, 0.0
      %v1410 = vmin.f32 %v1378, 0.0
      %v1411 = vmin.f32 %v1379, 0.0
      %v1412 = vmin.f32 %v1380, 0.0
      %v1413 = vmin.f32 %v1381, 0.0
      %v1414 = vmin.f32 %v1382, 0.0
      %v1415 = vmin.f32 %v1383, 0.0
      %v1416 = vmin.f32 %v1384, 0.0
      %v1417 = vmin.f32 %v1385, 0.0
      %v1418 = vmin.f32 %v1386, 0.0
      %v1419 = vmul.f32 %v1387, 1.442695
      %v1420 = vpow.pop %v1419
      %v1421 = vmul.f32 %v1388, 1.442695
      %v1422 = vpow.pop %v1421
      %v1423 = vmul.f32 %v1389, 1.442695
      %v1424 = vpow.pop %v1423
      %v1425 = vmul.f32 %v1390, 1.442695
      %v1426 = vpow.pop %v1425
      %v1427 = vmul.f32 %v1391, 1.442695
      %v1428 = vpow.pop %v1427
      %v1429 = vmul.f32 %v1392, 1.442695
      %v1430 = vpow.pop %v1429
      %v1431 = vmul.f32 %v1393, 1.442695
      %v1432 = vpow.pop %v1431
      %v1433 = vmul.f32 %v1394, 1.442695
      %v1434 = vpow.pop %v1433
      %v1435 = vmul.f32 %v1395, 1.442695
      %v1436 = vpow.pop %v1435
      %v1437 = vmul.f32 %v1396, 1.442695
      %v1438 = vpow.pop %v1437
      %v1439 = vmul.f32 %v1397, 1.442695
      %v1440 = vpow.pop %v1439
      %v1441 = vmul.f32 %v1398, 1.442695
      %v1442 = vpow.pop %v1441
      %v1443 = vmul.f32 %v1399, 1.442695
      %v1444 = vpow.pop %v1443
      %v1445 = vmul.f32 %v1400, 1.442695
      %v1446 = vpow.pop %v1445
      %v1447 = vmul.f32 %v1401, 1.442695
      %v1448 = vpow.pop %v1447
      %v1449 = vmul.f32 %v1402, 1.442695
      %v1450 = vpow.pop %v1449
      %v1451 = vmul.f32 %v1403, 1.442695
      %v1452 = vpow.pop %v1451
      %v1453 = vmul.f32 %v1404, 1.442695
      %v1454 = vpow.pop %v1453
      %v1455 = vmul.f32 %v1405, 1.442695
      %v1456 = vpow.pop %v1455
      %v1457 = vmul.f32 %v1406, 1.442695
      %v1458 = vpow.pop %v1457
      %v1459 = vmul.f32 %v1407, 1.442695
      %v1460 = vpow.pop %v1459
      %v1461 = vmul.f32 %v1408, 1.442695
      %v1462 = vpow.pop %v1461
      %v1463 = vmul.f32 %v1409, 1.442695
      %v1464 = vpow.pop %v1463
      %v1465 = vmul.f32 %v1410, 1.442695
      %v1466 = vpow.pop %v1465
      %v1467 = vmul.f32 %v1411, 1.442695
      %v1468 = vpow.pop %v1467
      %v1469 = vmul.f32 %v1412, 1.442695
      %v1470 = vpow.pop %v1469
      %v1471 = vmul.f32 %v1413, 1.442695
      %v1472 = vpow.pop %v1471
      %v1473 = vmul.f32 %v1414, 1.442695
      %v1474 = vpow.pop %v1473
      %v1475 = vmul.f32 %v1415, 1.442695
      %v1476 = vpow.pop %v1475
      %v1477 = vmul.f32 %v1416, 1.442695
      %v1478 = vpow.pop %v1477
      %v1479 = vmul.f32 %v1417, 1.442695
      %v1480 = vpow.pop %v1479
      %v1481 = vmul.f32 %v1418, 1.442695
      %v1482 = vpow.pop %v1481
      %v1483 = vmul.f32 %v1420, %v885
      %v1484 = vmul.f32 %v1422, %v886
      %v1485 = vmul.f32 %v1424, %v887
      %v1486 = vmul.f32 %v1426, %v888
      %v1487 = vmul.f32 %v1428, %v889
      %v1488 = vmul.f32 %v1430, %v890
      %v1489 = vmul.f32 %v1432, %v891
      %v1490 = vmul.f32 %v1434, %v892
      %v1491 = vmul.f32 %v1436, %v893
      %v1492 = vmul.f32 %v1438, %v894
      %v1493 = vmul.f32 %v1440, %v895
      %v1494 = vmul.f32 %v1442, %v896
      %v1495 = vmul.f32 %v1444, %v897
      %v1496 = vmul.f32 %v1446, %v898
      %v1497 = vmul.f32 %v1448, %v899
      %v1498 = vmul.f32 %v1450, %v900
      %v1499 = vmul.f32 %v1452, %v901
      %v1500 = vmul.f32 %v1454, %v902
      %v1501 = vmul.f32 %v1456, %v903
      %v1502 = vmul.f32 %v1458, %v904
      %v1503 = vmul.f32 %v1460, %v905
      %v1504 = vmul.f32 %v1462, %v906
      %v1505 = vmul.f32 %v1464, %v907
      %v1506 = vmul.f32 %v1466, %v908
      %v1507 = vmul.f32 %v1468, %v909
      %v1508 = vmul.f32 %v1470, %v910
      %v1509 = vmul.f32 %v1472, %v911
      %v1510 = vmul.f32 %v1474, %v912
      %v1511 = vmul.f32 %v1476, %v913
      %v1512 = vmul.f32 %v1478, %v914
      %v1513 = vmul.f32 %v1480, %v915
      %v1514 = vmul.f32 %v1482, %v916
      %v1515 = vadd.f32 %v1483, %v1484
      %1516 = vadd.xlane.f32.xlu0 %v1515
      %v1517 = vpop.xlane.xlu0 %1516
      %v1518 = vadd.f32 %v1485, %v1486
      %1519 = vadd.xlane.f32.xlu0 %v1518
      %v1520 = vpop.xlane.xlu0 %1519
      %v1521 = vadd.f32 %v1487, %v1488
      %1522 = vadd.xlane.f32.xlu0 %v1521
      %v1523 = vpop.xlane.xlu0 %1522
      %v1524 = vadd.f32 %v1489, %v1490
      %1525 = vadd.xlane.f32.xlu0 %v1524
      %v1526 = vpop.xlane.xlu0 %1525
      %v1527 = vadd.f32 %v1491, %v1492
      %1528 = vadd.xlane.f32.xlu0 %v1527
      %v1529 = vpop.xlane.xlu0 %1528
      %v1530 = vadd.f32 %v1493, %v1494
      %1531 = vadd.xlane.f32.xlu0 %v1530
      %v1532 = vpop.xlane.xlu0 %1531
      %v1533 = vadd.f32 %v1495, %v1496
      %1534 = vadd.xlane.f32.xlu0 %v1533
      %v1535 = vpop.xlane.xlu0 %1534
      %v1536 = vadd.f32 %v1497, %v1498
      %1537 = vadd.xlane.f32.xlu0 %v1536
      %v1538 = vpop.xlane.xlu0 %1537
      %v1539 = vadd.f32 %v1499, %v1500
      %1540 = vadd.xlane.f32.xlu0 %v1539
      %v1541 = vpop.xlane.xlu0 %1540
      %v1542 = vadd.f32 %v1501, %v1502
      %1543 = vadd.xlane.f32.xlu0 %v1542
      %v1544 = vpop.xlane.xlu0 %1543
      %v1545 = vadd.f32 %v1503, %v1504
      %1546 = vadd.xlane.f32.xlu0 %v1545
      %v1547 = vpop.xlane.xlu0 %1546
      %v1548 = vadd.f32 %v1505, %v1506
      %1549 = vadd.xlane.f32.xlu0 %v1548
      %v1550 = vpop.xlane.xlu0 %1549
      %v1551 = vadd.f32 %v1507, %v1508
      %1552 = vadd.xlane.f32.xlu0 %v1551
      %v1553 = vpop.xlane.xlu0 %1552
      %v1554 = vadd.f32 %v1509, %v1510
      %1555 = vadd.xlane.f32.xlu0 %v1554
      %v1556 = vpop.xlane.xlu0 %1555
      %v1557 = vadd.f32 %v1511, %v1512
      %1558 = vadd.xlane.f32.xlu0 %v1557
      %v1559 = vpop.xlane.xlu0 %1558
      %v1560 = vadd.f32 %v1513, %v1514
      %1561 = vadd.xlane.f32.xlu0 %v1560
      %v1562 = vpop.xlane.xlu0 %1561
      %v1563 = vmax.f32 %v1517, 1e-30
      %v1564 = vmax.f32 %v1520, 1e-30
      %v1565 = vmax.f32 %v1523, 1e-30
      %v1566 = vmax.f32 %v1526, 1e-30
      %v1567 = vmax.f32 %v1529, 1e-30
      %v1568 = vmax.f32 %v1532, 1e-30
      %v1569 = vmax.f32 %v1535, 1e-30
      %v1570 = vmax.f32 %v1538, 1e-30
      %v1571 = vmax.f32 %v1541, 1e-30
      %v1572 = vmax.f32 %v1544, 1e-30
      %v1573 = vmax.f32 %v1547, 1e-30
      %v1574 = vmax.f32 %v1550, 1e-30
      %v1575 = vmax.f32 %v1553, 1e-30
      %v1576 = vmax.f32 %v1556, 1e-30
      %v1577 = vmax.f32 %v1559, 1e-30
      %v1578 = vmax.f32 %v1562, 1e-30
      %v1579 = vrcp.pop %v1563
      %v1580 = vrcp.pop %v1564
      %v1581 = vrcp.pop %v1565
      %v1582 = vrcp.pop %v1566
      %v1583 = vrcp.pop %v1567
      %v1584 = vrcp.pop %v1568
      %v1585 = vrcp.pop %v1569
      %v1586 = vrcp.pop %v1570
      %v1587 = vrcp.pop %v1571
      %v1588 = vrcp.pop %v1572
      %v1589 = vrcp.pop %v1573
      %v1590 = vrcp.pop %v1574
      %v1591 = vrcp.pop %v1575
      %v1592 = vrcp.pop %v1576
      %v1593 = vrcp.pop %v1577
      %v1594 = vrcp.pop %v1578
      %v1595 = vmul.f32 %v1483, %v1579
      %v1596 = vmul.f32 %v1484, %v1579
      %v1597 = vmul.f32 %v1485, %v1580
      %v1598 = vmul.f32 %v1486, %v1580
      %v1599 = vmul.f32 %v1487, %v1581
      %v1600 = vmul.f32 %v1488, %v1581
      %v1601 = vmul.f32 %v1489, %v1582
      %v1602 = vmul.f32 %v1490, %v1582
      %v1603 = vmul.f32 %v1491, %v1583
      %v1604 = vmul.f32 %v1492, %v1583
      %v1605 = vmul.f32 %v1493, %v1584
      %v1606 = vmul.f32 %v1494, %v1584
      %v1607 = vmul.f32 %v1495, %v1585
      %v1608 = vmul.f32 %v1496, %v1585
      %v1609 = vmul.f32 %v1497, %v1586
      %v1610 = vmul.f32 %v1498, %v1586
      %v1611 = vmul.f32 %v1499, %v1587
      %v1612 = vmul.f32 %v1500, %v1587
      %v1613 = vmul.f32 %v1501, %v1588
      %v1614 = vmul.f32 %v1502, %v1588
      %v1615 = vmul.f32 %v1503, %v1589
      %v1616 = vmul.f32 %v1504, %v1589
      %v1617 = vmul.f32 %v1505, %v1590
      %v1618 = vmul.f32 %v1506, %v1590
      %v1619 = vmul.f32 %v1507, %v1591
      %v1620 = vmul.f32 %v1508, %v1591
      %v1621 = vmul.f32 %v1509, %v1592
      %v1622 = vmul.f32 %v1510, %v1592
      %v1623 = vmul.f32 %v1511, %v1593
      %v1624 = vmul.f32 %v1512, %v1593
      %v1625 = vmul.f32 %v1513, %v1594
      %v1626 = vmul.f32 %v1514, %v1594
      %v1627 = vpack.c.bf16 %v1597, %v1595
      %v1628 = vpack.c.bf16 %v1598, %v1596
      %v1629 = vpack.c.bf16 %v1601, %v1599
      %v1630 = vpack.c.bf16 %v1602, %v1600
      %v1631 = vpack.c.bf16 %v1605, %v1603
      %v1632 = vpack.c.bf16 %v1606, %v1604
      %v1633 = vpack.c.bf16 %v1609, %v1607
      %v1634 = vpack.c.bf16 %v1610, %v1608
      %v1635 = vpack.c.bf16 %v1613, %v1611
      %v1636 = vpack.c.bf16 %v1614, %v1612
      %v1637 = vpack.c.bf16 %v1617, %v1615
      %v1638 = vpack.c.bf16 %v1618, %v1616
      %v1639 = vpack.c.bf16 %v1621, %v1619
      %v1640 = vpack.c.bf16 %v1622, %v1620
      %v1641 = vpack.c.bf16 %v1625, %v1623
      %v1642 = vpack.c.bf16 %v1626, %v1624
      %v1643 = vld [vmem:[%s2] sm:$0xf]
      %v1644 = vld [vmem:[%s2 + $0x4] sm:$0xf]
      %v1645 = vld [vmem:[%s2 + $0x8] sm:$0xf]
      %v1646 = vld [vmem:[%s2 + $0xc] sm:$0xf]
      %v1647 = vld [vmem:[%s2 + $0x10] sm:$0xf]
      %v1648 = vld [vmem:[%s2 + $0x14] sm:$0xf]
      %v1649 = vld [vmem:[%s2 + $0x18] sm:$0xf]
      %v1650 = vld [vmem:[%s2 + $0x1c] sm:$0xf]
      %v1651 = vld [vmem:[%s2 + $0x20] sm:$0xf]
      %v1652 = vld [vmem:[%s2 + $0x24] sm:$0xf]
      %v1653 = vld [vmem:[%s2 + $0x28] sm:$0xf]
      %v1654 = vld [vmem:[%s2 + $0x2c] sm:$0xf]
      %v1655 = vld [vmem:[%s2 + $0x30] sm:$0xf]
      %v1656 = vld [vmem:[%s2 + $0x34] sm:$0xf]
      %v1657 = vld [vmem:[%s2 + $0x38] sm:$0xf]
      %v1658 = vld [vmem:[%s2 + $0x3c] sm:$0xf]
      %v1659 = vld [vmem:[%s2 + $0x40] sm:$0xf]
      %v1660 = vld [vmem:[%s2 + $0x44] sm:$0xf]
      %v1661 = vld [vmem:[%s2 + $0x48] sm:$0xf]
      %v1662 = vld [vmem:[%s2 + $0x4c] sm:$0xf]
      %v1663 = vld [vmem:[%s2 + $0x50] sm:$0xf]
      %v1664 = vld [vmem:[%s2 + $0x54] sm:$0xf]
      %v1665 = vld [vmem:[%s2 + $0x58] sm:$0xf]
      %v1666 = vld [vmem:[%s2 + $0x5c] sm:$0xf]
      %v1667 = vld [vmem:[%s2 + $0x60] sm:$0xf]
      %v1668 = vld [vmem:[%s2 + $0x64] sm:$0xf]
      %v1669 = vld [vmem:[%s2 + $0x68] sm:$0xf]
      %v1670 = vld [vmem:[%s2 + $0x6c] sm:$0xf]
      %v1671 = vld [vmem:[%s2 + $0x70] sm:$0xf]
      %v1672 = vld [vmem:[%s2 + $0x74] sm:$0xf]
      %v1673 = vld [vmem:[%s2 + $0x78] sm:$0xf]
      %v1674 = vld [vmem:[%s2 + $0x7c] sm:$0xf]
      %v1707 = vunpack.c.l.b16 %v1643
      %v1708 = vunpack.c.l.b16 %v1644
      %v1709 = vunpack.c.l.b16 %v1645
      %v1710 = vunpack.c.l.b16 %v1646
      %v1711 = vunpack.c.l.b16 %v1647
      %v1712 = vunpack.c.l.b16 %v1648
      %v1713 = vunpack.c.l.b16 %v1649
      %v1714 = vunpack.c.l.b16 %v1650
      %v1715 = vunpack.c.l.b16 %v1651
      %v1716 = vunpack.c.l.b16 %v1652
      %v1717 = vunpack.c.l.b16 %v1653
      %v1718 = vunpack.c.l.b16 %v1654
      %v1719 = vunpack.c.l.b16 %v1655
      %v1720 = vunpack.c.l.b16 %v1656
      %v1721 = vunpack.c.l.b16 %v1657
      %v1722 = vunpack.c.l.b16 %v1658
      %v1723 = vunpack.c.l.b16 %v1659
      %v1724 = vunpack.c.l.b16 %v1660
      %v1725 = vunpack.c.l.b16 %v1661
      %v1726 = vunpack.c.l.b16 %v1662
      %v1727 = vunpack.c.l.b16 %v1663
      %v1728 = vunpack.c.l.b16 %v1664
      %v1729 = vunpack.c.l.b16 %v1665
      %v1730 = vunpack.c.l.b16 %v1666
      %v1731 = vunpack.c.l.b16 %v1667
      %v1732 = vunpack.c.l.b16 %v1668
      %v1733 = vunpack.c.l.b16 %v1669
      %v1734 = vunpack.c.l.b16 %v1670
      %v1735 = vunpack.c.l.b16 %v1671
      %v1736 = vunpack.c.l.b16 %v1672
      %v1737 = vunpack.c.l.b16 %v1673
      %v1738 = vunpack.c.l.b16 %v1674
      %v1739 = vpack.c.b16 %v1708, %v1707
      %v1740 = vpack.c.b16 %v1710, %v1709
      %v1741 = vpack.c.b16 %v1712, %v1711
      %v1742 = vpack.c.b16 %v1714, %v1713
      %v1743 = vpack.c.b16 %v1716, %v1715
      %v1744 = vpack.c.b16 %v1718, %v1717
      %v1745 = vpack.c.b16 %v1720, %v1719
      %v1746 = vpack.c.b16 %v1722, %v1721
      %v1747 = vpack.c.b16 %v1724, %v1723
      %v1748 = vpack.c.b16 %v1726, %v1725
      %v1749 = vpack.c.b16 %v1728, %v1727
      %v1750 = vpack.c.b16 %v1730, %v1729
      %v1751 = vpack.c.b16 %v1732, %v1731
      %v1752 = vpack.c.b16 %v1734, %v1733
      %v1753 = vpack.c.b16 %v1736, %v1735
      %v1754 = vpack.c.b16 %v1738, %v1737
      %1771 = vmatpush.bf16.msra.mxu0 %v1746
      %1772 = vmatpush.bf16.msra.mxu0 %v1745
      %1773 = vmatpush.bf16.msra.mxu0 %v1744
      %1774 = vmatpush.bf16.msra.mxu0 %v1743
      %1775 = vmatpush.bf16.msra.mxu0 %v1742
      %1776 = vmatpush.bf16.msra.mxu0 %v1741
      %1777 = vmatpush.bf16.msra.mxu0 %v1740
      %1778 = vmatpush.bf16.msra.mxu0 %v1739
      %1779 = vmatmul.bf16.gmra.mxu0 %v1627
      %v1780 = vpop.f32.mrf.mxu0
      %v1781 = vadd.f32 0.0, %v1780
      %v1782 = vpop.f32.mrf.mxu0
      %v1783 = vadd.f32 0.0, %v1782
      %1784 = vmatmul.bf16.gmra.mxu0 %v1629
      %v1785 = vpop.f32.mrf.mxu0
      %v1786 = vadd.f32 0.0, %v1785
      %v1787 = vpop.f32.mrf.mxu0
      %v1788 = vadd.f32 0.0, %v1787
      %1789 = vmatmul.bf16.gmra.mxu0 %v1631
      %v1790 = vpop.f32.mrf.mxu0
      %v1791 = vadd.f32 0.0, %v1790
      %v1792 = vpop.f32.mrf.mxu0
      %v1793 = vadd.f32 0.0, %v1792
      %1794 = vmatmul.bf16.gmra.mxu0 %v1633
      %v1795 = vpop.f32.mrf.mxu0
      %v1796 = vadd.f32 0.0, %v1795
      %v1797 = vpop.f32.mrf.mxu0
      %v1798 = vadd.f32 0.0, %v1797
      %1799 = vmatmul.bf16.gmra.mxu0 %v1635
      %v1800 = vpop.f32.mrf.mxu0
      %v1801 = vadd.f32 0.0, %v1800
      %v1802 = vpop.f32.mrf.mxu0
      %v1803 = vadd.f32 0.0, %v1802
      %1804 = vmatmul.bf16.gmra.mxu0 %v1637
      %v1805 = vpop.f32.mrf.mxu0
      %v1806 = vadd.f32 0.0, %v1805
      %v1807 = vpop.f32.mrf.mxu0
      %v1808 = vadd.f32 0.0, %v1807
      %1809 = vmatmul.bf16.gmra.mxu0 %v1639
      %v1810 = vpop.f32.mrf.mxu0
      %v1811 = vadd.f32 0.0, %v1810
      %v1812 = vpop.f32.mrf.mxu0
      %v1813 = vadd.f32 0.0, %v1812
      %1814 = vmatmul.bf16.gmra.mxu0 %v1641
      %v1815 = vpop.f32.mrf.mxu0
      %v1816 = vadd.f32 0.0, %v1815
      %v1817 = vpop.f32.mrf.mxu0
      %v1818 = vadd.f32 0.0, %v1817
      %1819 = vdwg.mxu0
      %1820 = vmatpush.bf16.msra.mxu0 %v1754
      %1821 = vmatpush.bf16.msra.mxu0 %v1753
      %1822 = vmatpush.bf16.msra.mxu0 %v1752
      %1823 = vmatpush.bf16.msra.mxu0 %v1751
      %1824 = vmatpush.bf16.msra.mxu0 %v1750
      %1825 = vmatpush.bf16.msra.mxu0 %v1749
      %1826 = vmatpush.bf16.msra.mxu0 %v1748
      %1827 = vmatpush.bf16.msra.mxu0 %v1747
      %1828 = vmatmul.bf16.gmra.mxu0 %v1628
      %v1829 = vpop.f32.mrf.mxu0
      %v1830 = vadd.f32 %v1781, %v1829
      %v1831 = vpop.f32.mrf.mxu0
      %v1832 = vadd.f32 %v1783, %v1831
      %1833 = vmatmul.bf16.gmra.mxu0 %v1630
      %v1834 = vpop.f32.mrf.mxu0
      %v1835 = vadd.f32 %v1786, %v1834
      %v1836 = vpop.f32.mrf.mxu0
      %v1837 = vadd.f32 %v1788, %v1836
      %1838 = vmatmul.bf16.gmra.mxu0 %v1632
      %v1839 = vpop.f32.mrf.mxu0
      %v1840 = vadd.f32 %v1791, %v1839
      %v1841 = vpop.f32.mrf.mxu0
      %v1842 = vadd.f32 %v1793, %v1841
      %1843 = vmatmul.bf16.gmra.mxu0 %v1634
      %v1844 = vpop.f32.mrf.mxu0
      %v1845 = vadd.f32 %v1796, %v1844
      %v1846 = vpop.f32.mrf.mxu0
      %v1847 = vadd.f32 %v1798, %v1846
      %1848 = vmatmul.bf16.gmra.mxu0 %v1636
      %v1849 = vpop.f32.mrf.mxu0
      %v1850 = vadd.f32 %v1801, %v1849
      %v1851 = vpop.f32.mrf.mxu0
      %v1852 = vadd.f32 %v1803, %v1851
      %1853 = vmatmul.bf16.gmra.mxu0 %v1638
      %v1854 = vpop.f32.mrf.mxu0
      %v1855 = vadd.f32 %v1806, %v1854
      %v1856 = vpop.f32.mrf.mxu0
      %v1857 = vadd.f32 %v1808, %v1856
      %1858 = vmatmul.bf16.gmra.mxu0 %v1640
      %v1859 = vpop.f32.mrf.mxu0
      %v1860 = vadd.f32 %v1811, %v1859
      %v1861 = vpop.f32.mrf.mxu0
      %v1862 = vadd.f32 %v1813, %v1861
      %1863 = vmatmul.bf16.gmra.mxu0 %v1642
      %v1864 = vpop.f32.mrf.mxu0
      %v1865 = vadd.f32 %v1816, %v1864
      %v1866 = vpop.f32.mrf.mxu0
      %v1867 = vadd.f32 %v1818, %v1866
      %1868 = vdwg.mxu0
      %v1869 = vld [vmem:[%s5] sm:$0xff]
      %v1870 = vld [vmem:[%s5 + $0x8] sm:$0xff]
      %v1871 = vld [vmem:[%s5 + $0x10] sm:$0xff]
      %v1872 = vld [vmem:[%s5 + $0x18] sm:$0xff]
      %v1873 = vld [vmem:[%s5 + $0x20] sm:$0xff]
      %v1874 = vld [vmem:[%s5 + $0x28] sm:$0xff]
      %v1875 = vld [vmem:[%s5 + $0x30] sm:$0xff]
      %v1876 = vld [vmem:[%s5 + $0x38] sm:$0xff]
      %v1877 = vld [vmem:[%s5 + $0x40] sm:$0xff]
      %v1878 = vld [vmem:[%s5 + $0x48] sm:$0xff]
      %v1879 = vld [vmem:[%s5 + $0x50] sm:$0xff]
      %v1880 = vld [vmem:[%s5 + $0x58] sm:$0xff]
      %v1881 = vld [vmem:[%s5 + $0x60] sm:$0xff]
      %v1882 = vld [vmem:[%s5 + $0x68] sm:$0xff]
      %v1883 = vld [vmem:[%s5 + $0x70] sm:$0xff]
      %v1884 = vld [vmem:[%s5 + $0x78] sm:$0xff]
      %1885 = vmatpush.msra.mxu0 %v1884
      %1886 = vmatpush.msra.mxu0 %v1883
      %1887 = vmatpush.msra.mxu0 %v1882
      %1888 = vmatpush.msra.mxu0 %v1881
      %1889 = vmatpush.msra.mxu0 %v1880
      %1890 = vmatpush.msra.mxu0 %v1879
      %1891 = vmatpush.msra.mxu0 %v1878
      %1892 = vmatpush.msra.mxu0 %v1877
      %1893 = vmatpush.msra.mxu0 %v1876
      %1894 = vmatpush.msra.mxu0 %v1875
      %1895 = vmatpush.msra.mxu0 %v1874
      %1896 = vmatpush.msra.mxu0 %v1873
      %1897 = vmatpush.msra.mxu0 %v1872
      %1898 = vmatpush.msra.mxu0 %v1871
      %1899 = vmatpush.msra.mxu0 %v1870
      %1900 = vmatpush.msra.mxu0 %v1869
      %1901 = vmatmul.f32.gmra.mxu0 %v1830
      %v1902 = vpop.f32.mrf.mxu0
      %v1903 = vadd.f32 0.0, %v1902
      %1904 = vmatmul.f32.gmra.mxu0 %v1832
      %v1905 = vpop.f32.mrf.mxu0
      %v1906 = vadd.f32 0.0, %v1905
      %1907 = vmatmul.f32.gmra.mxu0 %v1835
      %v1908 = vpop.f32.mrf.mxu0
      %v1909 = vadd.f32 0.0, %v1908
      %1910 = vmatmul.f32.gmra.mxu0 %v1837
      %v1911 = vpop.f32.mrf.mxu0
      %v1912 = vadd.f32 0.0, %v1911
      %1913 = vmatmul.f32.gmra.mxu0 %v1840
      %v1914 = vpop.f32.mrf.mxu0
      %v1915 = vadd.f32 0.0, %v1914
      %1916 = vmatmul.f32.gmra.mxu0 %v1842
      %v1917 = vpop.f32.mrf.mxu0
      %v1918 = vadd.f32 0.0, %v1917
      %1919 = vmatmul.f32.gmra.mxu0 %v1845
      %v1920 = vpop.f32.mrf.mxu0
      %v1921 = vadd.f32 0.0, %v1920
      %1922 = vmatmul.f32.gmra.mxu0 %v1847
      %v1923 = vpop.f32.mrf.mxu0
      %v1924 = vadd.f32 0.0, %v1923
      %1925 = vmatmul.f32.gmra.mxu0 %v1850
      %v1926 = vpop.f32.mrf.mxu0
      %v1927 = vadd.f32 0.0, %v1926
      %1928 = vmatmul.f32.gmra.mxu0 %v1852
      %v1929 = vpop.f32.mrf.mxu0
      %v1930 = vadd.f32 0.0, %v1929
      %1931 = vmatmul.f32.gmra.mxu0 %v1855
      %v1932 = vpop.f32.mrf.mxu0
      %v1933 = vadd.f32 0.0, %v1932
      %1934 = vmatmul.f32.gmra.mxu0 %v1857
      %v1935 = vpop.f32.mrf.mxu0
      %v1936 = vadd.f32 0.0, %v1935
      %1937 = vmatmul.f32.gmra.mxu0 %v1860
      %v1938 = vpop.f32.mrf.mxu0
      %v1939 = vadd.f32 0.0, %v1938
      %1940 = vmatmul.f32.gmra.mxu0 %v1862
      %v1941 = vpop.f32.mrf.mxu0
      %v1942 = vadd.f32 0.0, %v1941
      %1943 = vmatmul.f32.gmra.mxu0 %v1865
      %v1944 = vpop.f32.mrf.mxu0
      %v1945 = vadd.f32 0.0, %v1944
      %1946 = vmatmul.f32.gmra.mxu0 %v1867
      %v1947 = vpop.f32.mrf.mxu0
      %v1948 = vadd.f32 0.0, %v1947
      %1949 = vdwg.mxu0
      %v1950 = vld [vmem:[%s321] sm:$0xff]
      %v1951 = vld [vmem:[%s321 + $0x8] sm:$0xff]
      %v1952 = vld [vmem:[%s321 + $0x10] sm:$0xff]
      %v1953 = vld [vmem:[%s321 + $0x18] sm:$0xff]
      %v1954 = vld [vmem:[%s321 + $0x20] sm:$0xff]
      %v1955 = vld [vmem:[%s321 + $0x28] sm:$0xff]
      %v1956 = vld [vmem:[%s321 + $0x30] sm:$0xff]
      %v1957 = vld [vmem:[%s321 + $0x38] sm:$0xff]
      %v1958 = vld [vmem:[%s321 + $0x40] sm:$0xff]
      %v1959 = vld [vmem:[%s321 + $0x48] sm:$0xff]
      %v1960 = vld [vmem:[%s321 + $0x50] sm:$0xff]
      %v1961 = vld [vmem:[%s321 + $0x58] sm:$0xff]
      %v1962 = vld [vmem:[%s321 + $0x60] sm:$0xff]
      %v1963 = vld [vmem:[%s321 + $0x68] sm:$0xff]
      %v1964 = vld [vmem:[%s321 + $0x70] sm:$0xff]
      %v1965 = vld [vmem:[%s321 + $0x78] sm:$0xff]
      %1967 = vset.pattern.permute.xlu0 0
      %1968 = vperm.xlu0 %1967, %v1950
      %v1969 = vpop.permute.xlu0 %1968
      %1972 = vset.pattern.permute.xlu0 0
      %1973 = vperm.xlu0 %1972, %v1951
      %v1974 = vpop.permute.xlu0 %1973
      %1977 = vset.pattern.permute.xlu0 0
      %1978 = vperm.xlu0 %1977, %v1952
      %v1979 = vpop.permute.xlu0 %1978
      %1982 = vset.pattern.permute.xlu0 0
      %1983 = vperm.xlu0 %1982, %v1953
      %v1984 = vpop.permute.xlu0 %1983
      %1987 = vset.pattern.permute.xlu0 0
      %1988 = vperm.xlu0 %1987, %v1954
      %v1989 = vpop.permute.xlu0 %1988
      %1992 = vset.pattern.permute.xlu0 0
      %1993 = vperm.xlu0 %1992, %v1955
      %v1994 = vpop.permute.xlu0 %1993
      %1997 = vset.pattern.permute.xlu0 0
      %1998 = vperm.xlu0 %1997, %v1956
      %v1999 = vpop.permute.xlu0 %1998
      %2002 = vset.pattern.permute.xlu0 0
      %2003 = vperm.xlu0 %2002, %v1957
      %v2004 = vpop.permute.xlu0 %2003
      %2007 = vset.pattern.permute.xlu0 0
      %2008 = vperm.xlu0 %2007, %v1958
      %v2009 = vpop.permute.xlu0 %2008
      %2012 = vset.pattern.permute.xlu0 0
      %2013 = vperm.xlu0 %2012, %v1959
      %v2014 = vpop.permute.xlu0 %2013
      %2017 = vset.pattern.permute.xlu0 0
      %2018 = vperm.xlu0 %2017, %v1960
      %v2019 = vpop.permute.xlu0 %2018
      %2022 = vset.pattern.permute.xlu0 0
      %2023 = vperm.xlu0 %2022, %v1961
      %v2024 = vpop.permute.xlu0 %2023
      %2027 = vset.pattern.permute.xlu0 0
      %2028 = vperm.xlu0 %2027, %v1962
      %v2029 = vpop.permute.xlu0 %2028
      %2032 = vset.pattern.permute.xlu0 0
      %2033 = vperm.xlu0 %2032, %v1963
      %v2034 = vpop.permute.xlu0 %2033
      %2037 = vset.pattern.permute.xlu0 0
      %2038 = vperm.xlu0 %2037, %v1964
      %v2039 = vpop.permute.xlu0 %2038
      %2042 = vset.pattern.permute.xlu0 0
      %2043 = vperm.xlu0 %2042, %v1965
      %v2044 = vpop.permute.xlu0 %2043
      %v2046 = vmul.f32 %v1903, %v1969
      %v2047 = vmul.f32 %v1906, %v1974
      %v2048 = vmul.f32 %v1909, %v1979
      %v2049 = vmul.f32 %v1912, %v1984
      %v2050 = vmul.f32 %v1915, %v1989
      %v2051 = vmul.f32 %v1918, %v1994
      %v2052 = vmul.f32 %v1921, %v1999
      %v2053 = vmul.f32 %v1924, %v2004
      %v2054 = vmul.f32 %v1927, %v2009
      %v2055 = vmul.f32 %v1930, %v2014
      %v2056 = vmul.f32 %v1933, %v2019
      %v2057 = vmul.f32 %v1936, %v2024
      %v2058 = vmul.f32 %v1939, %v2029
      %v2059 = vmul.f32 %v1942, %v2034
      %v2060 = vmul.f32 %v1945, %v2039
      %v2061 = vmul.f32 %v1948, %v2044
      %v2062 = vpack.c.bf16 %v2046, %v2046
      %v2063 = vpack.c.bf16 %v2047, %v2047
      %v2064 = vpack.c.bf16 %v2048, %v2048
      %v2065 = vpack.c.bf16 %v2049, %v2049
      %v2066 = vpack.c.bf16 %v2050, %v2050
      %v2067 = vpack.c.bf16 %v2051, %v2051
      %v2068 = vpack.c.bf16 %v2052, %v2052
      %v2069 = vpack.c.bf16 %v2053, %v2053
      %v2070 = vpack.c.bf16 %v2054, %v2054
      %v2071 = vpack.c.bf16 %v2055, %v2055
      %v2072 = vpack.c.bf16 %v2056, %v2056
      %v2073 = vpack.c.bf16 %v2057, %v2057
      %v2074 = vpack.c.bf16 %v2058, %v2058
      %v2075 = vpack.c.bf16 %v2059, %v2059
      %v2076 = vpack.c.bf16 %v2060, %v2060
      %v2077 = vpack.c.bf16 %v2061, %v2061
      %2078 = vst [vmem:[%s327] sm:$0xf] %v2062
      %2079 = vst [vmem:[%s327 + $0x4] sm:$0xf] %v2063
      %2080 = vst [vmem:[%s327 + $0x8] sm:$0xf] %v2064
      %2081 = vst [vmem:[%s327 + $0xc] sm:$0xf] %v2065
      %2082 = vst [vmem:[%s327 + $0x10] sm:$0xf] %v2066
      %2083 = vst [vmem:[%s327 + $0x14] sm:$0xf] %v2067
      %2084 = vst [vmem:[%s327 + $0x18] sm:$0xf] %v2068
      %2085 = vst [vmem:[%s327 + $0x1c] sm:$0xf] %v2069
      %2086 = vst [vmem:[%s327 + $0x20] sm:$0xf] %v2070
      %2087 = vst [vmem:[%s327 + $0x24] sm:$0xf] %v2071
      %2088 = vst [vmem:[%s327 + $0x28] sm:$0xf] %v2072
      %2089 = vst [vmem:[%s327 + $0x2c] sm:$0xf] %v2073
      %2090 = vst [vmem:[%s327 + $0x30] sm:$0xf] %v2074
      %2091 = vst [vmem:[%s327 + $0x34] sm:$0xf] %v2075
      %2092 = vst [vmem:[%s327 + $0x38] sm:$0xf] %v2076
      %2093 = vst [vmem:[%s327 + $0x3c] sm:$0xf] %v2077
      %s2094 = smul.u32 16, %s18
      %p2095 = scmp.lt.s32.totalorder %s2094, 31
      %s2096 = scalar_select %p2095, %s2094, 31
      %s2097 = smul.addr %s2096, 4
      %s2098 = scalar_lea.vmem %s7, %s2097
      // Predicated region
      $region49: #{hardgam_forward.6} parent=47 // pred_check
        %p2099 = pneg %p198
      $region50: #{hardgam_forward.6} parent=47 // pred_check_branch
        %2101 = sbr.rel (%p2099) target = $region52
      $region51: #{hardgam_forward.6} parent=47 // pred_region
        %s2102 = smul.u32 16, %s18
      $region52: #{hardgam_forward.6} parent=47 // pred_fallthru
        _
    $region48: #{hardgam_forward.6} parent=5 // pred_fallthru
      _
    %p2103 = scmp.le.s32.totalorder 2, %s13
    // Predicated region
    $region53: #{hardgam_forward.6} parent=5 // pred_check
      %p2104 = pneg %p2103
    $region54: #{hardgam_forward.6} parent=5 // pred_check_branch
      %2106 = sbr.rel (%p2104) target = $region56
    $region55: #{hardgam_forward.6} parent=5 // pred_region
      %s2107 = ssub.s32 %s13, 2
      // Predicated region
      $region57: #{hardgam_forward.6} parent=55 // pred_check
        %p2108 = pneg %p204
      $region58: #{hardgam_forward.6} parent=55 // pred_check_branch
        %2110 = sbr.rel (%p2108) target = $region60
      $region59: #{hardgam_forward.6} parent=55 // pred_region
        %s2111 = smul.u32 16, %s19
        %p2112 = scmp.lt.s32.totalorder %s2111, 31
        %s2113 = scalar_select %p2112, %s2111, 31
        %s2114 = smul.addr %s2113, 4
        %s2115 = scalar_lea.vmem %s7, %s2114
      $region60: #{hardgam_forward.6} parent=55 // pred_fallthru
        _
    $region56: #{hardgam_forward.6} parent=5 // pred_fallthru
      _
  $region6: #{hardgam_forward.6} parent=0 // loop_footer
    %s17 = sadd.s32 1, %s13
  $region7: #{hardgam_forward.6} parent=0 // loop_footer_branch
    %12 = sbr.rel target = $region3
  $region8: #{hardgam_forward.6} parent=0 // loop_exit
    _

</llo_original>
